<compile_context>
chip_gen: v5e
topology: v5e:2x2
jax: 0.10.0
libtpu: 0.0.40
codegen_flags: <defaults>
</compile_context>

<pallas_src>
import math
import functools

import jax
import jax.numpy as jnp
from jax.experimental import pallas as pl
from jax.experimental.pallas import tpu as pltpu

# ---------------- model hyper-parameters (defaults of the PyTorch module) ----
DIM_PROJ = 64          # dim_proj
NUM_HEADS = 8
HEAD_DIM = DIM_PROJ // NUM_HEADS
DIM_FF = 64
DIM_OUT = 2
NUM_LAYERS = 2
MAX_TIME = 2
BAND_MEAN = 1440.0
BAND_STD = 600.0

OUT_PAD = 128          # head output padded to a full 128-lane slab (lane-dense store)
ROWS_TARGET = 256      # flattened rows per grid step (~256 for v6e/v7x; 128 on v5e)

# ---------------- small example shapes ---------------------------------------
B, T, S = 2, 2, 8                     # (b, t, s); t == 2 is required by the
                                      # torch `temporal_encode[:, 1:t]` expand
L = 1 + T * S                         # token sequence length (rgr token + t*s)


# ---------------- in-kernel math helpers --------------------------------------
def _layernorm(x, g, b):
    # PyTorch nn.LayerNorm semantics: biased variance, eps=1e-5.
    mu = jnp.mean(x, axis=-1, keepdims=True)
    xc = x - mu
    var = jnp.mean(xc * xc, axis=-1, keepdims=True)
    return xc * jax.lax.rsqrt(var + 1e-5) * g + b


def _gelu_tanh(x):
    # tanh-approximation of GELU (single EUP tanh); |err| vs exact erf-GELU
    # is < ~1e-3, well inside the test tolerance.
    c = 0.7978845608028654  # sqrt(2/pi)
    return 0.5 * x * (1.0 + jnp.tanh(c * (x + 0.044715 * x * x * x)))


# ---------------- the fused Pallas kernel --------------------------------------
def spectf_kernel(x_ref, we0_ref, band_ref, tsp_ref, rgr_ref, mask_ref,
                  lng_ref, lnb_ref, wqkv_ref, bqkv_ref, wo_ref, bo_ref,
                  w1_ref, b1_ref, w2_ref, b2_ref, wh_ref, bh_ref,
                  out_ref, *, bb, seq_len):
    """Fused forward: spectral embed + token build + 2x encoder + head.

    Processes a block of `bb` sequences.  All linear projections run as single
    (bb*seq_len, .) bf16 matmuls (f32 accumulation).  Attention is batched over
    all sequences in the block with a block-diagonal additive mask, per head,
    with the output projection fused into the per-head accumulation.
    """
    D = DIM_PROJ
    bf16 = jnp.bfloat16
    rows_total = bb * seq_len

    # ---- spectral embed on the VPU (no K=2 matmul, no band concat) ----------
    xv = x_ref[...]                                               # (bb, T*S) f32
    # band_ref already holds band_norm * We[band, :] + bias (per token position).
    emb = jnp.tanh(xv[:, :, None] * we0_ref[...] + band_ref[...]) + tsp_ref[...]
    # emb: (bb, T*S, D)

    # ---- build the (bb*L, D) token slab: [rgr + temporal[0], spectral] ------
    rows = []
    for b in range(bb):
        rows.append(rgr_ref[...])                                 # (1, D)
        rows.append(emb[b])                                       # (T*S, D)
    x2d = jnp.concatenate(rows, axis=0)                           # (bb*L, D)

    # ---- transformer encoder layers ------------------------------------------
    for layer in range(NUM_LAYERS):
        # attention block: residual wraps norm1(x) (module semantics).
        h = _layernorm(x2d, lng_ref[layer, 0], lnb_ref[layer, 0])
        qkv = jnp.dot(h.astype(bf16), wqkv_ref[layer],
                      preferred_element_type=jnp.float32) + bqkv_ref[layer]
        q = qkv[:, 0:D].astype(bf16)          # 1/sqrt(head_dim) folded into Wq/bq
        k = qkv[:, D:2 * D].astype(bf16)
        v = qkv[:, 2 * D:3 * D].astype(bf16)
        wo_l = wo_ref[layer]                                      # (D, D) bf16

        acc = jnp.zeros((rows_total, D), jnp.float32)
        for hh in range(NUM_HEADS):
            lo = hh * HEAD_DIM
            s = jax.lax.dot_general(q[:, lo:lo + HEAD_DIM], k[:, lo:lo + HEAD_DIM],
                                    (((1,), (1,)), ((), ())),
                                    preferred_element_type=jnp.float32)  # (bb*L, bb*L)
            if bb > 1:
                # block-diagonal mask keeps sequences independent
                s = s + mask_ref[...]
            s = s - jnp.max(s, axis=-1, keepdims=True)
            e = jnp.exp(s)
            p = e * pl.reciprocal(jnp.sum(e, axis=-1, keepdims=True), approx=True)
            ctx = jnp.dot(p.astype(bf16), v[:, lo:lo + HEAD_DIM],
                          preferred_element_type=jnp.float32)            # (bb*L, hd)
            # fuse the output projection per head: ctx_h @ Wo[lo:lo+hd, :]
            acc = acc + jnp.dot(ctx.astype(bf16), wo_l[lo:lo + HEAD_DIM, :],
                                preferred_element_type=jnp.float32)
        x2d = (acc + bo_ref[layer]) + h                           # use_residual=True

        # feed-forward block: residual wraps norm2(x).
        h2 = _layernorm(x2d, lng_ref[layer, 1], lnb_ref[layer, 1])
        z = jnp.dot(h2.astype(bf16), w1_ref[layer],
                    preferred_element_type=jnp.float32) + b1_ref[layer]
        z = _gelu_tanh(z)
        ff = jnp.dot(z.astype(bf16), w2_ref[layer],
                     preferred_element_type=jnp.float32) + b2_ref[layer]
        x2d = ff + h2

    # ---- classification head on the rgr token of every sequence --------------
    cls = jnp.concatenate([x2d[b * seq_len:b * seq_len + 1, :] for b in range(bb)],
                          axis=0)                                 # (bb, D)
    out_ref[...] = jnp.dot(cls.astype(bf16), wh_ref[...],
                           preferred_element_type=jnp.float32) + bh_ref[...]


# ---------------- wrapper -------------------------------------------------------
@jax.jit
def forward_pallas(x, P):
    b_, t_, s_ = x.shape
    ts = t_ * s_
    seq_len = 1 + ts

    # NB: same (quirky) semantics as torch: temporal_encode[:, 1:t] expanded,
    # which requires t == 2.
    # TODO(synk): generalize the temporal slice if the module is ever used with t != 2.

    scale = 1.0 / math.sqrt(HEAD_DIM)

    # ---- kernel-side derived parameters (tiny; fused by XLA under jit) ------
    we0 = P["We"][0:1, :]                                                   # (1, D)
    band_base = P["band_norm"][:, None] * P["We"][1][None, :] + P["be"]     # (S, D)
    band_tab = jnp.tile(band_base, (t_, 1))                                 # (T*S, D)
    tspec = P["temporal"][0, 1, 0, :].reshape(1, DIM_PROJ)
    rgr_tok = (P["rgr"] + P["temporal"][0, 0, 0, :]).reshape(1, DIM_PROJ)

    qscale = jnp.concatenate([jnp.full((DIM_PROJ,), scale, jnp.float32),
                              jnp.ones((2 * DIM_PROJ,), jnp.float32)])
    wqkv_k = (P["wqkv"] * qscale).astype(jnp.bfloat16)     # softmax scale folded into Q
    bqkv_k = P["bqkv"] * qscale
    wo_k = P["wo"].astype(jnp.bfloat16)
    w1_k = P["w1"].astype(jnp.bfloat16)
    w2_k = P["w2"].astype(jnp.bfloat16)
    wh_pad = jnp.zeros((DIM_PROJ, OUT_PAD), jnp.float32).at[:, :DIM_OUT].set(P["wh"])
    wh_pad = wh_pad.astype(jnp.bfloat16)
    bh_pad = jnp.zeros((1, OUT_PAD), jnp.float32).at[:, :DIM_OUT].set(P["bh"])

    # ---- batch blocking: target ~ROWS_TARGET flattened rows per grid step ----
    bblk = max(1, min(b_, ROWS_TARGET // seq_len))
    if bblk < b_:
        bblk = max(8, (bblk // 8) * 8)   # keep the blocked sublane dim 8-aligned
    nblk = -(-b_ // bblk)
    bpad = nblk * bblk

    x2 = x.reshape(b_, ts)
    if bpad != b_:
        x2 = jnp.concatenate([x2, jnp.zeros((bpad - b_, ts), x2.dtype)], axis=0)

    # block-diagonal additive attention mask (0 within a sequence, -1e30 across)
    seq_ids = jnp.repeat(jnp.arange(bblk), seq_len)
    amask = jnp.where(seq_ids[:, None] == seq_ids[None, :], 0.0, -1e30)
    amask = amask.astype(jnp.float32)                              # (bblk*L, bblk*L)

    zero2 = lambda i: (0, 0)
    zero3 = lambda i: (0, 0, 0)
    zero4 = lambda i: (0, 0, 0, 0)

    out_pad = pl.pallas_call(
        functools.partial(spectf_kernel, bb=bblk, seq_len=seq_len),
        out_shape=jax.ShapeDtypeStruct((bpad, OUT_PAD), jnp.float32),
        grid=(nblk,),
        in_specs=[
            pl.BlockSpec((bblk, ts), lambda i: (i, 0)),                        # spectra (B, T*S)
            pl.BlockSpec((1, DIM_PROJ), zero2),                                # We[spectra row]
            pl.BlockSpec((ts, DIM_PROJ), zero2),                               # band table
            pl.BlockSpec((1, DIM_PROJ), zero2),                                # temporal (spectral tokens)
            pl.BlockSpec((1, DIM_PROJ), zero2),                                # rgr token (+temporal[0])
            pl.BlockSpec((bblk * seq_len, bblk * seq_len), zero2),             # block-diag attn mask
            pl.BlockSpec((NUM_LAYERS, 2, 1, DIM_PROJ), zero4),                 # LN gamma
            pl.BlockSpec((NUM_LAYERS, 2, 1, DIM_PROJ), zero4),                 # LN beta
            pl.BlockSpec((NUM_LAYERS, DIM_PROJ, 3 * DIM_PROJ), zero3),         # Wqkv (bf16, Q scaled)
            pl.BlockSpec((NUM_LAYERS, 1, 3 * DIM_PROJ), zero3),                # bqkv
            pl.BlockSpec((NUM_LAYERS, DIM_PROJ, DIM_PROJ), zero3),             # Wout (bf16)
            pl.BlockSpec((NUM_LAYERS, 1, DIM_PROJ), zero3),                    # bout
            pl.BlockSpec((NUM_LAYERS, DIM_PROJ, DIM_FF), zero3),               # W1 (bf16)
            pl.BlockSpec((NUM_LAYERS, 1, DIM_FF), zero3),                      # b1
            pl.BlockSpec((NUM_LAYERS, DIM_FF, DIM_PROJ), zero3),               # W2 (bf16)
            pl.BlockSpec((NUM_LAYERS, 1, DIM_PROJ), zero3),                    # b2
            pl.BlockSpec((DIM_PROJ, OUT_PAD), zero2),                          # head W (padded, bf16)
            pl.BlockSpec((1, OUT_PAD), zero2),                                 # head b (padded)
        ],
        out_specs=pl.BlockSpec((bblk, OUT_PAD), lambda i: (i, 0)),
        compiler_params=pltpu.CompilerParams(dimension_semantics=("parallel",)),
    )(x2, we0, band_tab, tspec, rgr_tok, amask,
      P["ln_g"], P["ln_b"], wqkv_k, bqkv_k, wo_k, P["bo"],
      w1_k, P["b1"], w2_k, P["b2"], wh_pad, bh_pad)

    return out_pad[:b_, :DIM_OUT]                                 # (b, dim_out)


# ---------------- pure-JAX reference (for a sanity check) ----------------------
def forward_reference(x, P):
    b, t, s = x.shape
    spectra = x[..., None]
    band4 = P["band_norm"].reshape(1, 1, s, 1)
    enc = jnp.concatenate([spectra, jnp.broadcast_to(band4, spectra.shape)], -1)
    emb = jnp.tanh(enc @ P["We"] + P["be"][0])
    emb = emb + jnp.broadcast_to(P["temporal"][:, 1:t, :, :], emb.shape)
    tokens = emb.reshape(b, t * s, DIM_PROJ)
    tokens = jnp.concatenate(
        [jnp.broadcast_to(P["rgr"], (b, 1, DIM_PROJ)), tokens], axis=1)
    tokens = tokens.at[:, 0, :].add(P["temporal"][0, 0, 0, :])

    xx = tokens
    Lr = tokens.shape[1]
    for l in range(NUM_LAYERS):
        h = _layernorm(xx, P["ln_g"][l, 0, 0], P["ln_b"][l, 0, 0])
        qkv = h @ P["wqkv"][l] + P["bqkv"][l]
        q, k, v = jnp.split(qkv, 3, axis=-1)
        q = q.reshape(b, Lr, NUM_HEADS, HEAD_DIM).transpose(0, 2, 1, 3)
        k = k.reshape(b, Lr, NUM_HEADS, HEAD_DIM).transpose(0, 2, 1, 3)
        v = v.reshape(b, Lr, NUM_HEADS, HEAD_DIM).transpose(0, 2, 1, 3)
        scores = jnp.einsum("bhld,bhmd->bhlm", q, k) / math.sqrt(HEAD_DIM)
        attn = jax.nn.softmax(scores, axis=-1)
        ctx = jnp.einsum("bhlm,bhmd->bhld", attn, v)
        ctx = ctx.transpose(0, 2, 1, 3).reshape(b, Lr, DIM_PROJ)
        xx = (ctx @ P["wo"][l] + P["bo"][l]) + h
        h2 = _layernorm(xx, P["ln_g"][l, 1, 0], P["ln_b"][l, 1, 0])
        z = jax.nn.gelu(h2 @ P["w1"][l] + P["b1"][l], approximate=False)
        xx = (z @ P["w2"][l] + P["b2"][l]) + h2
    return xx[:, 0, :] @ P["wh"] + P["bh"][0]


# ---------------- deterministic parameter construction -------------------------
def xavier(key, fan_out, fan_in):
    bound = math.sqrt(6.0 / (fan_in + fan_out))
    return jax.random.uniform(key, (fan_out, fan_in), jnp.float32, -bound, bound)


def make_params(key, banddef):
    keys = jax.random.split(key, 4 + 4 * NUM_LAYERS + 1)
    ki = iter(keys)

    P = {}
    P["band_norm"] = (banddef - BAND_MEAN) / BAND_STD
    # SpectralEmbed linear (xavier weight, zero bias) stored input-major (2, D)
    P["We"] = xavier(next(ki), DIM_PROJ, 2).T
    P["be"] = jnp.zeros((1, DIM_PROJ), jnp.float32)
    # temporal encoding ~ N(0,1), rgr token ~ N(0, 0.02)
    P["temporal"] = jax.random.normal(next(ki), (1, MAX_TIME + 1, 1, DIM_PROJ),
                                      jnp.float32)
    P["rgr"] = 0.02 * jax.random.normal(next(ki), (DIM_PROJ,), jnp.float32)

    wqkv, wo, w1, w2 = [], [], [], []
    for _ in range(NUM_LAYERS):
        wqkv.append(xavier(next(ki), 3 * DIM_PROJ, DIM_PROJ).T)   # (D, 3D)
        wo.append(xavier(next(ki), DIM_PROJ, DIM_PROJ).T)         # (D, D)
        w1.append(xavier(next(ki), DIM_FF, DIM_PROJ).T)           # (D, F)
        w2.append(xavier(next(ki), DIM_PROJ, DIM_FF).T)           # (F, D)
    P["wqkv"] = jnp.stack(wqkv)
    P["wo"] = jnp.stack(wo)
    P["w1"] = jnp.stack(w1)
    P["w2"] = jnp.stack(w2)
    P["bqkv"] = jnp.zeros((NUM_LAYERS, 1, 3 * DIM_PROJ), jnp.float32)
    P["bo"] = jnp.zeros((NUM_LAYERS, 1, DIM_PROJ), jnp.float32)
    P["b1"] = jnp.zeros((NUM_LAYERS, 1, DIM_FF), jnp.float32)
    P["b2"] = jnp.zeros((NUM_LAYERS, 1, DIM_PROJ), jnp.float32)
    P["ln_g"] = jnp.ones((NUM_LAYERS, 2, 1, DIM_PROJ), jnp.float32)
    P["ln_b"] = jnp.zeros((NUM_LAYERS, 2, 1, DIM_PROJ), jnp.float32)
    P["wh"] = xavier(next(ki), DIM_OUT, DIM_PROJ).T               # (D, O)
    P["bh"] = jnp.zeros((1, DIM_OUT), jnp.float32)
    return P


if __name__ == "__main__":
    key = jax.random.PRNGKey(0)
    k_band, k_param, k_x = jax.random.split(key, 3)

    banddef = jnp.linspace(400.0, 2500.0, S).astype(jnp.float32)   # wavelengths (nm)
    params = make_params(k_param, banddef)
    x = jax.random.uniform(k_x, (B, T, S), jnp.float32)            # spectra (b, t, s)

    out = forward_pallas(x, params)
    out = jax.block_until_ready(out)
    assert out.shape == (B, DIM_OUT), out.shape

    ref = jax.block_until_ready(forward_reference(x, params))
    # Loose tolerance: kernel matmuls run in bf16 (f32 accumulation) + tanh-GELU
    # and approximate reciprocal in the softmax.
    assert jnp.allclose(out, ref, atol=5e-2, rtol=5e-2), (out, ref)
    assert bool(jnp.all(jnp.isfinite(out)))

    print("KERNEL_OK")
</pallas_src>

<mosaic_0001>
module attributes {stable_mosaic.version = 11 : i64} {
  func.func @spectf_kernel(%arg0: i32, %arg1: memref<2x16xf32, #tpu.memory_space<vmem>>, %arg2: memref<1x64xf32, #tpu.memory_space<vmem>>, %arg3: memref<16x64xf32, #tpu.memory_space<vmem>>, %arg4: memref<1x64xf32, #tpu.memory_space<vmem>>, %arg5: memref<1x64xf32, #tpu.memory_space<vmem>>, %arg6: memref<34x34xf32, #tpu.memory_space<vmem>>, %arg7: memref<2x2x1x64xf32, #tpu.memory_space<vmem>>, %arg8: memref<2x2x1x64xf32, #tpu.memory_space<vmem>>, %arg9: memref<2x64x192xbf16, #tpu.memory_space<vmem>>, %arg10: memref<2x1x192xf32, #tpu.memory_space<vmem>>, %arg11: memref<2x64x64xbf16, #tpu.memory_space<vmem>>, %arg12: memref<2x1x64xf32, #tpu.memory_space<vmem>>, %arg13: memref<2x64x64xbf16, #tpu.memory_space<vmem>>, %arg14: memref<2x1x64xf32, #tpu.memory_space<vmem>>, %arg15: memref<2x64x64xbf16, #tpu.memory_space<vmem>>, %arg16: memref<2x1x64xf32, #tpu.memory_space<vmem>>, %arg17: memref<64x128xbf16, #tpu.memory_space<vmem>>, %arg18: memref<1x128xf32, #tpu.memory_space<vmem>>, %arg19: memref<2x128xf32, #tpu.memory_space<vmem>>) attributes {dimension_semantics = [#tpu.dimension_semantics<parallel>], iteration_bounds = array<i64: 1>, scalar_prefetch = 0 : i64, scratch_operands = 0 : i64, tpu.core_type = #tpu.core_type<tc>, window_params = [{transform_indices = @transform_0, window_bounds = array<i64: 2, 16>}, {pipeline_mode = #tpu.pipeline_mode<synchronous>, transform_indices = @transform_1, window_bounds = array<i64: 1, 64>}, {pipeline_mode = #tpu.pipeline_mode<synchronous>, transform_indices = @transform_2, window_bounds = array<i64: 16, 64>}, {pipeline_mode = #tpu.pipeline_mode<synchronous>, transform_indices = @transform_3, window_bounds = array<i64: 1, 64>}, {pipeline_mode = #tpu.pipeline_mode<synchronous>, transform_indices = @transform_4, window_bounds = array<i64: 1, 64>}, {pipeline_mode = #tpu.pipeline_mode<synchronous>, transform_indices = @transform_5, window_bounds = array<i64: 34, 34>}, {pipeline_mode = #tpu.pipeline_mode<synchronous>, transform_indices = @transform_6, window_bounds = array<i64: 2, 2, 1, 64>}, {pipeline_mode = #tpu.pipeline_mode<synchronous>, transform_indices = @transform_7, window_bounds = array<i64: 2, 2, 1, 64>}, {pipeline_mode = #tpu.pipeline_mode<synchronous>, transform_indices = @transform_8, window_bounds = array<i64: 2, 64, 192>}, {pipeline_mode = #tpu.pipeline_mode<synchronous>, transform_indices = @transform_9, window_bounds = array<i64: 2, 1, 192>}, {pipeline_mode = #tpu.pipeline_mode<synchronous>, transform_indices = @transform_10, window_bounds = array<i64: 2, 64, 64>}, {pipeline_mode = #tpu.pipeline_mode<synchronous>, transform_indices = @transform_11, window_bounds = array<i64: 2, 1, 64>}, {pipeline_mode = #tpu.pipeline_mode<synchronous>, transform_indices = @transform_12, window_bounds = array<i64: 2, 64, 64>}, {pipeline_mode = #tpu.pipeline_mode<synchronous>, transform_indices = @transform_13, window_bounds = array<i64: 2, 1, 64>}, {pipeline_mode = #tpu.pipeline_mode<synchronous>, transform_indices = @transform_14, window_bounds = array<i64: 2, 64, 64>}, {pipeline_mode = #tpu.pipeline_mode<synchronous>, transform_indices = @transform_15, window_bounds = array<i64: 2, 1, 64>}, {pipeline_mode = #tpu.pipeline_mode<synchronous>, transform_indices = @transform_16, window_bounds = array<i64: 64, 128>}, {pipeline_mode = #tpu.pipeline_mode<synchronous>, transform_indices = @transform_17, window_bounds = array<i64: 1, 128>}, {transform_indices = @transform_18, window_bounds = array<i64: 2, 128>}]} {
    %c0 = arith.constant 0 : index
    %c0_0 = arith.constant 0 : index
    %0 = vector.load %arg1[%c0, %c0_0] : memref<2x16xf32, #tpu.memory_space<vmem>>, vector<2x16xf32>
    %1 = vector.shape_cast %0 : vector<2x16xf32> to vector<2x16x1xf32>
    %c0_1 = arith.constant 0 : index
    %c0_2 = arith.constant 0 : index
    %2 = vector.load %arg2[%c0_1, %c0_2] : memref<1x64xf32, #tpu.memory_space<vmem>>, vector<1x64xf32>
    %3 = vector.shape_cast %2 : vector<1x64xf32> to vector<1x1x64xf32>
    %4 = vector.broadcast %1 : vector<2x16x1xf32> to vector<2x16x64xf32>
    %5 = vector.broadcast %3 : vector<1x1x64xf32> to vector<2x16x64xf32>
    %6 = arith.mulf %4, %5 : vector<2x16x64xf32>
    %c0_3 = arith.constant 0 : index
    %c0_4 = arith.constant 0 : index
    %7 = vector.load %arg3[%c0_3, %c0_4] : memref<16x64xf32, #tpu.memory_space<vmem>>, vector<16x64xf32>
    %8 = vector.shape_cast %7 : vector<16x64xf32> to vector<1x16x64xf32>
    %9 = vector.broadcast %8 : vector<1x16x64xf32> to vector<2x16x64xf32>
    %10 = arith.addf %6, %9 : vector<2x16x64xf32>
    %11 = math.tanh %10 : vector<2x16x64xf32>
    %c0_5 = arith.constant 0 : index
    %c0_6 = arith.constant 0 : index
    %12 = vector.load %arg4[%c0_5, %c0_6] : memref<1x64xf32, #tpu.memory_space<vmem>>, vector<1x64xf32>
    %13 = vector.shape_cast %12 : vector<1x64xf32> to vector<1x1x64xf32>
    %14 = vector.broadcast %13 : vector<1x1x64xf32> to vector<2x16x64xf32>
    %15 = arith.addf %11, %14 : vector<2x16x64xf32>
    %c0_7 = arith.constant 0 : index
    %c0_8 = arith.constant 0 : index
    %16 = vector.load %arg5[%c0_7, %c0_8] : memref<1x64xf32, #tpu.memory_space<vmem>>, vector<1x64xf32>
    %17 = vector.extract_strided_slice %15 {offsets = [0, 0, 0], sizes = [1, 16, 64], strides = [1, 1, 1]} : vector<2x16x64xf32> to vector<1x16x64xf32>
    %18 = vector.shape_cast %17 : vector<1x16x64xf32> to vector<16x64xf32>
    %c0_9 = arith.constant 0 : index
    %c0_10 = arith.constant 0 : index
    %19 = vector.load %arg5[%c0_9, %c0_10] : memref<1x64xf32, #tpu.memory_space<vmem>>, vector<1x64xf32>
    %20 = vector.extract_strided_slice %15 {offsets = [1, 0, 0], sizes = [1, 16, 64], strides = [1, 1, 1]} : vector<2x16x64xf32> to vector<1x16x64xf32>
    %21 = vector.shape_cast %20 : vector<1x16x64xf32> to vector<16x64xf32>
    %22 = tpu.concatenate %16, %18, %19, %21 in 0 : vector<1x64xf32>, vector<16x64xf32>, vector<1x64xf32>, vector<16x64xf32> -> vector<34x64xf32>
    %c0_11 = arith.constant 0 : index
    %c0_12 = arith.constant 0 : index
    %c0_13 = arith.constant 0 : index
    %c0_14 = arith.constant 0 : index
    %23 = vector.load %arg7[%c0_11, %c0_12, %c0_13, %c0_14] : memref<2x2x1x64xf32, #tpu.memory_space<vmem>>, vector<1x1x1x64xf32>
    %24 = vector.shape_cast %23 : vector<1x1x1x64xf32> to vector<1x64xf32>
    %c0_15 = arith.constant 0 : index
    %c0_16 = arith.constant 0 : index
    %c0_17 = arith.constant 0 : index
    %c0_18 = arith.constant 0 : index
    %25 = vector.load %arg8[%c0_15, %c0_16, %c0_17, %c0_18] : memref<2x2x1x64xf32, #tpu.memory_space<vmem>>, vector<1x1x1x64xf32>
    %26 = vector.shape_cast %25 : vector<1x1x1x64xf32> to vector<1x64xf32>
    %cst = arith.constant dense<0.000000e+00> : vector<34xf32>
    %27 = vector.multi_reduction <add>, %22, %cst [1] : vector<34x64xf32> to vector<34xf32>
    %28 = vector.shape_cast %27 : vector<34xf32> to vector<34x1xf32>
    %cst_19 = arith.constant 6.400000e+01 : f32
    %29 = vector.broadcast %cst_19 : f32 to vector<34x1xf32>
    %30 = arith.divf %28, %29 : vector<34x1xf32>
    %31 = vector.broadcast %30 : vector<34x1xf32> to vector<34x64xf32>
    %32 = arith.subf %22, %31 : vector<34x64xf32>
    %33 = arith.mulf %32, %32 : vector<34x64xf32>
    %cst_20 = arith.constant dense<0.000000e+00> : vector<34xf32>
    %34 = vector.multi_reduction <add>, %33, %cst_20 [1] : vector<34x64xf32> to vector<34xf32>
    %35 = vector.shape_cast %34 : vector<34xf32> to vector<34x1xf32>
    %cst_21 = arith.constant 6.400000e+01 : f32
    %36 = vector.broadcast %cst_21 : f32 to vector<34x1xf32>
    %37 = arith.divf %35, %36 : vector<34x1xf32>
    %cst_22 = arith.constant 9.99999974E-6 : f32
    %38 = vector.broadcast %cst_22 : f32 to vector<34x1xf32>
    %39 = arith.addf %37, %38 : vector<34x1xf32>
    %40 = math.rsqrt %39 : vector<34x1xf32>
    %41 = vector.broadcast %40 : vector<34x1xf32> to vector<34x64xf32>
    %42 = arith.mulf %32, %41 : vector<34x64xf32>
    %43 = vector.broadcast %24 : vector<1x64xf32> to vector<34x64xf32>
    %44 = arith.mulf %42, %43 : vector<34x64xf32>
    %45 = vector.broadcast %26 : vector<1x64xf32> to vector<34x64xf32>
    %46 = arith.addf %44, %45 : vector<34x64xf32>
    %47 = arith.truncf %46 : vector<34x64xf32> to vector<34x64xbf16>
    %c0_23 = arith.constant 0 : index
    %c0_24 = arith.constant 0 : index
    %c0_25 = arith.constant 0 : index
    %48 = vector.load %arg9[%c0_23, %c0_24, %c0_25] : memref<2x64x192xbf16, #tpu.memory_space<vmem>>, vector<1x64x192xbf16>
    %49 = vector.shape_cast %48 : vector<1x64x192xbf16> to vector<64x192xbf16>
    %cst_26 = arith.constant dense<0.000000e+00> : vector<34x192xf32>
    %50 = tpu.matmul %47, %49, %cst_26 {dimension_numbers = #tpu.dot_dimension_numbers<[1], [0], [0], [1], [0, 0, 1, 1], [], []>} : vector<34x64xbf16>, vector<64x192xbf16>, vector<34x192xf32> -> vector<34x192xf32>
    %c0_27 = arith.constant 0 : index
    %c0_28 = arith.constant 0 : index
    %c0_29 = arith.constant 0 : index
    %51 = vector.load %arg10[%c0_27, %c0_28, %c0_29] : memref<2x1x192xf32, #tpu.memory_space<vmem>>, vector<1x1x192xf32>
    %52 = vector.shape_cast %51 : vector<1x1x192xf32> to vector<1x192xf32>
    %53 = vector.broadcast %52 : vector<1x192xf32> to vector<34x192xf32>
    %54 = arith.addf %50, %53 : vector<34x192xf32>
    %55 = vector.extract_strided_slice %54 {offsets = [0, 0], sizes = [34, 64], strides = [1, 1]} : vector<34x192xf32> to vector<34x64xf32>
    %56 = arith.truncf %55 : vector<34x64xf32> to vector<34x64xbf16>
    %57 = vector.extract_strided_slice %54 {offsets = [0, 64], sizes = [34, 64], strides = [1, 1]} : vector<34x192xf32> to vector<34x64xf32>
    %58 = arith.truncf %57 : vector<34x64xf32> to vector<34x64xbf16>
    %59 = vector.extract_strided_slice %54 {offsets = [0, 128], sizes = [34, 64], strides = [1, 1]} : vector<34x192xf32> to vector<34x64xf32>
    %60 = arith.truncf %59 : vector<34x64xf32> to vector<34x64xbf16>
    %c0_30 = arith.constant 0 : index
    %c0_31 = arith.constant 0 : index
    %c0_32 = arith.constant 0 : index
    %61 = vector.load %arg11[%c0_30, %c0_31, %c0_32] : memref<2x64x64xbf16, #tpu.memory_space<vmem>>, vector<1x64x64xbf16>
    %62 = vector.shape_cast %61 : vector<1x64x64xbf16> to vector<64x64xbf16>
    %cst_33 = arith.constant 0.000000e+00 : f32
    %63 = vector.broadcast %cst_33 : f32 to vector<34x64xf32>
    %64 = vector.extract_strided_slice %56 {offsets = [0, 0], sizes = [34, 8], strides = [1, 1]} : vector<34x64xbf16> to vector<34x8xbf16>
    %65 = vector.extract_strided_slice %58 {offsets = [0, 0], sizes = [34, 8], strides = [1, 1]} : vector<34x64xbf16> to vector<34x8xbf16>
    %cst_34 = arith.constant dense<0.000000e+00> : vector<34x34xf32>
    %66 = tpu.matmul %64, %65, %cst_34 {dimension_numbers = #tpu.dot_dimension_numbers<[1], [1], [0], [0], [0, 0, 1, 0], [], []>} : vector<34x8xbf16>, vector<34x8xbf16>, vector<34x34xf32> -> vector<34x34xf32>
    %c0_35 = arith.constant 0 : index
    %c0_36 = arith.constant 0 : index
    %67 = vector.load %arg6[%c0_35, %c0_36] : memref<34x34xf32, #tpu.memory_space<vmem>>, vector<34x34xf32>
    %68 = arith.addf %66, %67 : vector<34x34xf32>
    %cst_37 = arith.constant dense<0xFF800000> : vector<34xf32>
    %69 = vector.multi_reduction <maximumf>, %68, %cst_37 [1] : vector<34x34xf32> to vector<34xf32>
    %70 = vector.shape_cast %69 : vector<34xf32> to vector<34x1xf32>
    %71 = vector.broadcast %70 : vector<34x1xf32> to vector<34x34xf32>
    %72 = arith.subf %68, %71 : vector<34x34xf32>
    %73 = math.exp %72 : vector<34x34xf32>
    %cst_38 = arith.constant dense<0.000000e+00> : vector<34xf32>
    %74 = vector.multi_reduction <add>, %73, %cst_38 [1] : vector<34x34xf32> to vector<34xf32>
    %75 = vector.shape_cast %74 : vector<34xf32> to vector<34x1xf32>
    %76 = tpu.reciprocal %75 {approx = true} : vector<34x1xf32> -> vector<34x1xf32>
    %77 = vector.broadcast %76 : vector<34x1xf32> to vector<34x34xf32>
    %78 = arith.mulf %73, %77 : vector<34x34xf32>
    %79 = arith.truncf %78 : vector<34x34xf32> to vector<34x34xbf16>
    %80 = vector.extract_strided_slice %60 {offsets = [0, 0], sizes = [34, 8], strides = [1, 1]} : vector<34x64xbf16> to vector<34x8xbf16>
    %cst_39 = arith.constant dense<0.000000e+00> : vector<34x8xf32>
    %81 = tpu.matmul %79, %80, %cst_39 {dimension_numbers = #tpu.dot_dimension_numbers<[1], [0], [0], [1], [0, 0, 1, 1], [], []>} : vector<34x34xbf16>, vector<34x8xbf16>, vector<34x8xf32> -> vector<34x8xf32>
    %82 = arith.truncf %81 : vector<34x8xf32> to vector<34x8xbf16>
    %83 = vector.extract_strided_slice %62 {offsets = [0, 0], sizes = [8, 64], strides = [1, 1]} : vector<64x64xbf16> to vector<8x64xbf16>
    %cst_40 = arith.constant dense<0.000000e+00> : vector<34x64xf32>
    %84 = tpu.matmul %82, %83, %cst_40 {dimension_numbers = #tpu.dot_dimension_numbers<[1], [0], [0], [1], [0, 0, 1, 1], [], []>} : vector<34x8xbf16>, vector<8x64xbf16>, vector<34x64xf32> -> vector<34x64xf32>
    %85 = arith.addf %63, %84 : vector<34x64xf32>
    %86 = vector.extract_strided_slice %56 {offsets = [0, 8], sizes = [34, 8], strides = [1, 1]} : vector<34x64xbf16> to vector<34x8xbf16>
    %87 = vector.extract_strided_slice %58 {offsets = [0, 8], sizes = [34, 8], strides = [1, 1]} : vector<34x64xbf16> to vector<34x8xbf16>
    %cst_41 = arith.constant dense<0.000000e+00> : vector<34x34xf32>
    %88 = tpu.matmul %86, %87, %cst_41 {dimension_numbers = #tpu.dot_dimension_numbers<[1], [1], [0], [0], [0, 0, 1, 0], [], []>} : vector<34x8xbf16>, vector<34x8xbf16>, vector<34x34xf32> -> vector<34x34xf32>
    %c0_42 = arith.constant 0 : index
    %c0_43 = arith.constant 0 : index
    %89 = vector.load %arg6[%c0_42, %c0_43] : memref<34x34xf32, #tpu.memory_space<vmem>>, vector<34x34xf32>
    %90 = arith.addf %88, %89 : vector<34x34xf32>
    %cst_44 = arith.constant dense<0xFF800000> : vector<34xf32>
    %91 = vector.multi_reduction <maximumf>, %90, %cst_44 [1] : vector<34x34xf32> to vector<34xf32>
    %92 = vector.shape_cast %91 : vector<34xf32> to vector<34x1xf32>
    %93 = vector.broadcast %92 : vector<34x1xf32> to vector<34x34xf32>
    %94 = arith.subf %90, %93 : vector<34x34xf32>
    %95 = math.exp %94 : vector<34x34xf32>
    %cst_45 = arith.constant dense<0.000000e+00> : vector<34xf32>
    %96 = vector.multi_reduction <add>, %95, %cst_45 [1] : vector<34x34xf32> to vector<34xf32>
    %97 = vector.shape_cast %96 : vector<34xf32> to vector<34x1xf32>
    %98 = tpu.reciprocal %97 {approx = true} : vector<34x1xf32> -> vector<34x1xf32>
    %99 = vector.broadcast %98 : vector<34x1xf32> to vector<34x34xf32>
    %100 = arith.mulf %95, %99 : vector<34x34xf32>
    %101 = arith.truncf %100 : vector<34x34xf32> to vector<34x34xbf16>
    %102 = vector.extract_strided_slice %60 {offsets = [0, 8], sizes = [34, 8], strides = [1, 1]} : vector<34x64xbf16> to vector<34x8xbf16>
    %cst_46 = arith.constant dense<0.000000e+00> : vector<34x8xf32>
    %103 = tpu.matmul %101, %102, %cst_46 {dimension_numbers = #tpu.dot_dimension_numbers<[1], [0], [0], [1], [0, 0, 1, 1], [], []>} : vector<34x34xbf16>, vector<34x8xbf16>, vector<34x8xf32> -> vector<34x8xf32>
    %104 = arith.truncf %103 : vector<34x8xf32> to vector<34x8xbf16>
    %105 = vector.extract_strided_slice %62 {offsets = [8, 0], sizes = [8, 64], strides = [1, 1]} : vector<64x64xbf16> to vector<8x64xbf16>
    %cst_47 = arith.constant dense<0.000000e+00> : vector<34x64xf32>
    %106 = tpu.matmul %104, %105, %cst_47 {dimension_numbers = #tpu.dot_dimension_numbers<[1], [0], [0], [1], [0, 0, 1, 1], [], []>} : vector<34x8xbf16>, vector<8x64xbf16>, vector<34x64xf32> -> vector<34x64xf32>
    %107 = arith.addf %85, %106 : vector<34x64xf32>
    %108 = vector.extract_strided_slice %56 {offsets = [0, 16], sizes = [34, 8], strides = [1, 1]} : vector<34x64xbf16> to vector<34x8xbf16>
    %109 = vector.extract_strided_slice %58 {offsets = [0, 16], sizes = [34, 8], strides = [1, 1]} : vector<34x64xbf16> to vector<34x8xbf16>
    %cst_48 = arith.constant dense<0.000000e+00> : vector<34x34xf32>
    %110 = tpu.matmul %108, %109, %cst_48 {dimension_numbers = #tpu.dot_dimension_numbers<[1], [1], [0], [0], [0, 0, 1, 0], [], []>} : vector<34x8xbf16>, vector<34x8xbf16>, vector<34x34xf32> -> vector<34x34xf32>
    %c0_49 = arith.constant 0 : index
    %c0_50 = arith.constant 0 : index
    %111 = vector.load %arg6[%c0_49, %c0_50] : memref<34x34xf32, #tpu.memory_space<vmem>>, vector<34x34xf32>
    %112 = arith.addf %110, %111 : vector<34x34xf32>
    %cst_51 = arith.constant dense<0xFF800000> : vector<34xf32>
    %113 = vector.multi_reduction <maximumf>, %112, %cst_51 [1] : vector<34x34xf32> to vector<34xf32>
    %114 = vector.shape_cast %113 : vector<34xf32> to vector<34x1xf32>
    %115 = vector.broadcast %114 : vector<34x1xf32> to vector<34x34xf32>
    %116 = arith.subf %112, %115 : vector<34x34xf32>
    %117 = math.exp %116 : vector<34x34xf32>
    %cst_52 = arith.constant dense<0.000000e+00> : vector<34xf32>
    %118 = vector.multi_reduction <add>, %117, %cst_52 [1] : vector<34x34xf32> to vector<34xf32>
    %119 = vector.shape_cast %118 : vector<34xf32> to vector<34x1xf32>
    %120 = tpu.reciprocal %119 {approx = true} : vector<34x1xf32> -> vector<34x1xf32>
    %121 = vector.broadcast %120 : vector<34x1xf32> to vector<34x34xf32>
    %122 = arith.mulf %117, %121 : vector<34x34xf32>
    %123 = arith.truncf %122 : vector<34x34xf32> to vector<34x34xbf16>
    %124 = vector.extract_strided_slice %60 {offsets = [0, 16], sizes = [34, 8], strides = [1, 1]} : vector<34x64xbf16> to vector<34x8xbf16>
    %cst_53 = arith.constant dense<0.000000e+00> : vector<34x8xf32>
    %125 = tpu.matmul %123, %124, %cst_53 {dimension_numbers = #tpu.dot_dimension_numbers<[1], [0], [0], [1], [0, 0, 1, 1], [], []>} : vector<34x34xbf16>, vector<34x8xbf16>, vector<34x8xf32> -> vector<34x8xf32>
    %126 = arith.truncf %125 : vector<34x8xf32> to vector<34x8xbf16>
    %127 = vector.extract_strided_slice %62 {offsets = [16, 0], sizes = [8, 64], strides = [1, 1]} : vector<64x64xbf16> to vector<8x64xbf16>
    %cst_54 = arith.constant dense<0.000000e+00> : vector<34x64xf32>
    %128 = tpu.matmul %126, %127, %cst_54 {dimension_numbers = #tpu.dot_dimension_numbers<[1], [0], [0], [1], [0, 0, 1, 1], [], []>} : vector<34x8xbf16>, vector<8x64xbf16>, vector<34x64xf32> -> vector<34x64xf32>
    %129 = arith.addf %107, %128 : vector<34x64xf32>
    %130 = vector.extract_strided_slice %56 {offsets = [0, 24], sizes = [34, 8], strides = [1, 1]} : vector<34x64xbf16> to vector<34x8xbf16>
    %131 = vector.extract_strided_slice %58 {offsets = [0, 24], sizes = [34, 8], strides = [1, 1]} : vector<34x64xbf16> to vector<34x8xbf16>
    %cst_55 = arith.constant dense<0.000000e+00> : vector<34x34xf32>
    %132 = tpu.matmul %130, %131, %cst_55 {dimension_numbers = #tpu.dot_dimension_numbers<[1], [1], [0], [0], [0, 0, 1, 0], [], []>} : vector<34x8xbf16>, vector<34x8xbf16>, vector<34x34xf32> -> vector<34x34xf32>
    %c0_56 = arith.constant 0 : index
    %c0_57 = arith.constant 0 : index
    %133 = vector.load %arg6[%c0_56, %c0_57] : memref<34x34xf32, #tpu.memory_space<vmem>>, vector<34x34xf32>
    %134 = arith.addf %132, %133 : vector<34x34xf32>
    %cst_58 = arith.constant dense<0xFF800000> : vector<34xf32>
    %135 = vector.multi_reduction <maximumf>, %134, %cst_58 [1] : vector<34x34xf32> to vector<34xf32>
    %136 = vector.shape_cast %135 : vector<34xf32> to vector<34x1xf32>
    %137 = vector.broadcast %136 : vector<34x1xf32> to vector<34x34xf32>
    %138 = arith.subf %134, %137 : vector<34x34xf32>
    %139 = math.exp %138 : vector<34x34xf32>
    %cst_59 = arith.constant dense<0.000000e+00> : vector<34xf32>
    %140 = vector.multi_reduction <add>, %139, %cst_59 [1] : vector<34x34xf32> to vector<34xf32>
    %141 = vector.shape_cast %140 : vector<34xf32> to vector<34x1xf32>
    %142 = tpu.reciprocal %141 {approx = true} : vector<34x1xf32> -> vector<34x1xf32>
    %143 = vector.broadcast %142 : vector<34x1xf32> to vector<34x34xf32>
    %144 = arith.mulf %139, %143 : vector<34x34xf32>
    %145 = arith.truncf %144 : vector<34x34xf32> to vector<34x34xbf16>
    %146 = vector.extract_strided_slice %60 {offsets = [0, 24], sizes = [34, 8], strides = [1, 1]} : vector<34x64xbf16> to vector<34x8xbf16>
    %cst_60 = arith.constant dense<0.000000e+00> : vector<34x8xf32>
    %147 = tpu.matmul %145, %146, %cst_60 {dimension_numbers = #tpu.dot_dimension_numbers<[1], [0], [0], [1], [0, 0, 1, 1], [], []>} : vector<34x34xbf16>, vector<34x8xbf16>, vector<34x8xf32> -> vector<34x8xf32>
    %148 = arith.truncf %147 : vector<34x8xf32> to vector<34x8xbf16>
    %149 = vector.extract_strided_slice %62 {offsets = [24, 0], sizes = [8, 64], strides = [1, 1]} : vector<64x64xbf16> to vector<8x64xbf16>
    %cst_61 = arith.constant dense<0.000000e+00> : vector<34x64xf32>
    %150 = tpu.matmul %148, %149, %cst_61 {dimension_numbers = #tpu.dot_dimension_numbers<[1], [0], [0], [1], [0, 0, 1, 1], [], []>} : vector<34x8xbf16>, vector<8x64xbf16>, vector<34x64xf32> -> vector<34x64xf32>
    %151 = arith.addf %129, %150 : vector<34x64xf32>
    %152 = vector.extract_strided_slice %56 {offsets = [0, 32], sizes = [34, 8], strides = [1, 1]} : vector<34x64xbf16> to vector<34x8xbf16>
    %153 = vector.extract_strided_slice %58 {offsets = [0, 32], sizes = [34, 8], strides = [1, 1]} : vector<34x64xbf16> to vector<34x8xbf16>
    %cst_62 = arith.constant dense<0.000000e+00> : vector<34x34xf32>
    %154 = tpu.matmul %152, %153, %cst_62 {dimension_numbers = #tpu.dot_dimension_numbers<[1], [1], [0], [0], [0, 0, 1, 0], [], []>} : vector<34x8xbf16>, vector<34x8xbf16>, vector<34x34xf32> -> vector<34x34xf32>
    %c0_63 = arith.constant 0 : index
    %c0_64 = arith.constant 0 : index
    %155 = vector.load %arg6[%c0_63, %c0_64] : memref<34x34xf32, #tpu.memory_space<vmem>>, vector<34x34xf32>
    %156 = arith.addf %154, %155 : vector<34x34xf32>
    %cst_65 = arith.constant dense<0xFF800000> : vector<34xf32>
    %157 = vector.multi_reduction <maximumf>, %156, %cst_65 [1] : vector<34x34xf32> to vector<34xf32>
    %158 = vector.shape_cast %157 : vector<34xf32> to vector<34x1xf32>
    %159 = vector.broadcast %158 : vector<34x1xf32> to vector<34x34xf32>
    %160 = arith.subf %156, %159 : vector<34x34xf32>
    %161 = math.exp %160 : vector<34x34xf32>
    %cst_66 = arith.constant dense<0.000000e+00> : vector<34xf32>
    %162 = vector.multi_reduction <add>, %161, %cst_66 [1] : vector<34x34xf32> to vector<34xf32>
    %163 = vector.shape_cast %162 : vector<34xf32> to vector<34x1xf32>
    %164 = tpu.reciprocal %163 {approx = true} : vector<34x1xf32> -> vector<34x1xf32>
    %165 = vector.broadcast %164 : vector<34x1xf32> to vector<34x34xf32>
    %166 = arith.mulf %161, %165 : vector<34x34xf32>
    %167 = arith.truncf %166 : vector<34x34xf32> to vector<34x34xbf16>
    %168 = vector.extract_strided_slice %60 {offsets = [0, 32], sizes = [34, 8], strides = [1, 1]} : vector<34x64xbf16> to vector<34x8xbf16>
    %cst_67 = arith.constant dense<0.000000e+00> : vector<34x8xf32>
    %169 = tpu.matmul %167, %168, %cst_67 {dimension_numbers = #tpu.dot_dimension_numbers<[1], [0], [0], [1], [0, 0, 1, 1], [], []>} : vector<34x34xbf16>, vector<34x8xbf16>, vector<34x8xf32> -> vector<34x8xf32>
    %170 = arith.truncf %169 : vector<34x8xf32> to vector<34x8xbf16>
    %171 = vector.extract_strided_slice %62 {offsets = [32, 0], sizes = [8, 64], strides = [1, 1]} : vector<64x64xbf16> to vector<8x64xbf16>
    %cst_68 = arith.constant dense<0.000000e+00> : vector<34x64xf32>
    %172 = tpu.matmul %170, %171, %cst_68 {dimension_numbers = #tpu.dot_dimension_numbers<[1], [0], [0], [1], [0, 0, 1, 1], [], []>} : vector<34x8xbf16>, vector<8x64xbf16>, vector<34x64xf32> -> vector<34x64xf32>
    %173 = arith.addf %151, %172 : vector<34x64xf32>
    %174 = vector.extract_strided_slice %56 {offsets = [0, 40], sizes = [34, 8], strides = [1, 1]} : vector<34x64xbf16> to vector<34x8xbf16>
    %175 = vector.extract_strided_slice %58 {offsets = [0, 40], sizes = [34, 8], strides = [1, 1]} : vector<34x64xbf16> to vector<34x8xbf16>
    %cst_69 = arith.constant dense<0.000000e+00> : vector<34x34xf32>
    %176 = tpu.matmul %174, %175, %cst_69 {dimension_numbers = #tpu.dot_dimension_numbers<[1], [1], [0], [0], [0, 0, 1, 0], [], []>} : vector<34x8xbf16>, vector<34x8xbf16>, vector<34x34xf32> -> vector<34x34xf32>
    %c0_70 = arith.constant 0 : index
    %c0_71 = arith.constant 0 : index
    %177 = vector.load %arg6[%c0_70, %c0_71] : memref<34x34xf32, #tpu.memory_space<vmem>>, vector<34x34xf32>
    %178 = arith.addf %176, %177 : vector<34x34xf32>
    %cst_72 = arith.constant dense<0xFF800000> : vector<34xf32>
    %179 = vector.multi_reduction <maximumf>, %178, %cst_72 [1] : vector<34x34xf32> to vector<34xf32>
    %180 = vector.shape_cast %179 : vector<34xf32> to vector<34x1xf32>
    %181 = vector.broadcast %180 : vector<34x1xf32> to vector<34x34xf32>
    %182 = arith.subf %178, %181 : vector<34x34xf32>
    %183 = math.exp %182 : vector<34x34xf32>
    %cst_73 = arith.constant dense<0.000000e+00> : vector<34xf32>
    %184 = vector.multi_reduction <add>, %183, %cst_73 [1] : vector<34x34xf32> to vector<34xf32>
    %185 = vector.shape_cast %184 : vector<34xf32> to vector<34x1xf32>
    %186 = tpu.reciprocal %185 {approx = true} : vector<34x1xf32> -> vector<34x1xf32>
    %187 = vector.broadcast %186 : vector<34x1xf32> to vector<34x34xf32>
    %188 = arith.mulf %183, %187 : vector<34x34xf32>
    %189 = arith.truncf %188 : vector<34x34xf32> to vector<34x34xbf16>
    %190 = vector.extract_strided_slice %60 {offsets = [0, 40], sizes = [34, 8], strides = [1, 1]} : vector<34x64xbf16> to vector<34x8xbf16>
    %cst_74 = arith.constant dense<0.000000e+00> : vector<34x8xf32>
    %191 = tpu.matmul %189, %190, %cst_74 {dimension_numbers = #tpu.dot_dimension_numbers<[1], [0], [0], [1], [0, 0, 1, 1], [], []>} : vector<34x34xbf16>, vector<34x8xbf16>, vector<34x8xf32> -> vector<34x8xf32>
    %192 = arith.truncf %191 : vector<34x8xf32> to vector<34x8xbf16>
    %193 = vector.extract_strided_slice %62 {offsets = [40, 0], sizes = [8, 64], strides = [1, 1]} : vector<64x64xbf16> to vector<8x64xbf16>
    %cst_75 = arith.constant dense<0.000000e+00> : vector<34x64xf32>
    %194 = tpu.matmul %192, %193, %cst_75 {dimension_numbers = #tpu.dot_dimension_numbers<[1], [0], [0], [1], [0, 0, 1, 1], [], []>} : vector<34x8xbf16>, vector<8x64xbf16>, vector<34x64xf32> -> vector<34x64xf32>
    %195 = arith.addf %173, %194 : vector<34x64xf32>
    %196 = vector.extract_strided_slice %56 {offsets = [0, 48], sizes = [34, 8], strides = [1, 1]} : vector<34x64xbf16> to vector<34x8xbf16>
    %197 = vector.extract_strided_slice %58 {offsets = [0, 48], sizes = [34, 8], strides = [1, 1]} : vector<34x64xbf16> to vector<34x8xbf16>
    %cst_76 = arith.constant dense<0.000000e+00> : vector<34x34xf32>
    %198 = tpu.matmul %196, %197, %cst_76 {dimension_numbers = #tpu.dot_dimension_numbers<[1], [1], [0], [0], [0, 0, 1, 0], [], []>} : vector<34x8xbf16>, vector<34x8xbf16>, vector<34x34xf32> -> vector<34x34xf32>
    %c0_77 = arith.constant 0 : index
    %c0_78 = arith.constant 0 : index
    %199 = vector.load %arg6[%c0_77, %c0_78] : memref<34x34xf32, #tpu.memory_space<vmem>>, vector<34x34xf32>
    %200 = arith.addf %198, %199 : vector<34x34xf32>
    %cst_79 = arith.constant dense<0xFF800000> : vector<34xf32>
    %201 = vector.multi_reduction <maximumf>, %200, %cst_79 [1] : vector<34x34xf32> to vector<34xf32>
    %202 = vector.shape_cast %201 : vector<34xf32> to vector<34x1xf32>
    %203 = vector.broadcast %202 : vector<34x1xf32> to vector<34x34xf32>
    %204 = arith.subf %200, %203 : vector<34x34xf32>
    %205 = math.exp %204 : vector<34x34xf32>
    %cst_80 = arith.constant dense<0.000000e+00> : vector<34xf32>
    %206 = vector.multi_reduction <add>, %205, %cst_80 [1] : vector<34x34xf32> to vector<34xf32>
    %207 = vector.shape_cast %206 : vector<34xf32> to vector<34x1xf32>
    %208 = tpu.reciprocal %207 {approx = true} : vector<34x1xf32> -> vector<34x1xf32>
    %209 = vector.broadcast %208 : vector<34x1xf32> to vector<34x34xf32>
    %210 = arith.mulf %205, %209 : vector<34x34xf32>
    %211 = arith.truncf %210 : vector<34x34xf32> to vector<34x34xbf16>
    %212 = vector.extract_strided_slice %60 {offsets = [0, 48], sizes = [34, 8], strides = [1, 1]} : vector<34x64xbf16> to vector<34x8xbf16>
    %cst_81 = arith.constant dense<0.000000e+00> : vector<34x8xf32>
    %213 = tpu.matmul %211, %212, %cst_81 {dimension_numbers = #tpu.dot_dimension_numbers<[1], [0], [0], [1], [0, 0, 1, 1], [], []>} : vector<34x34xbf16>, vector<34x8xbf16>, vector<34x8xf32> -> vector<34x8xf32>
    %214 = arith.truncf %213 : vector<34x8xf32> to vector<34x8xbf16>
    %215 = vector.extract_strided_slice %62 {offsets = [48, 0], sizes = [8, 64], strides = [1, 1]} : vector<64x64xbf16> to vector<8x64xbf16>
    %cst_82 = arith.constant dense<0.000000e+00> : vector<34x64xf32>
    %216 = tpu.matmul %214, %215, %cst_82 {dimension_numbers = #tpu.dot_dimension_numbers<[1], [0], [0], [1], [0, 0, 1, 1], [], []>} : vector<34x8xbf16>, vector<8x64xbf16>, vector<34x64xf32> -> vector<34x64xf32>
    %217 = arith.addf %195, %216 : vector<34x64xf32>
    %218 = vector.extract_strided_slice %56 {offsets = [0, 56], sizes = [34, 8], strides = [1, 1]} : vector<34x64xbf16> to vector<34x8xbf16>
    %219 = vector.extract_strided_slice %58 {offsets = [0, 56], sizes = [34, 8], strides = [1, 1]} : vector<34x64xbf16> to vector<34x8xbf16>
    %cst_83 = arith.constant dense<0.000000e+00> : vector<34x34xf32>
    %220 = tpu.matmul %218, %219, %cst_83 {dimension_numbers = #tpu.dot_dimension_numbers<[1], [1], [0], [0], [0, 0, 1, 0], [], []>} : vector<34x8xbf16>, vector<34x8xbf16>, vector<34x34xf32> -> vector<34x34xf32>
    %c0_84 = arith.constant 0 : index
    %c0_85 = arith.constant 0 : index
    %221 = vector.load %arg6[%c0_84, %c0_85] : memref<34x34xf32, #tpu.memory_space<vmem>>, vector<34x34xf32>
    %222 = arith.addf %220, %221 : vector<34x34xf32>
    %cst_86 = arith.constant dense<0xFF800000> : vector<34xf32>
    %223 = vector.multi_reduction <maximumf>, %222, %cst_86 [1] : vector<34x34xf32> to vector<34xf32>
    %224 = vector.shape_cast %223 : vector<34xf32> to vector<34x1xf32>
    %225 = vector.broadcast %224 : vector<34x1xf32> to vector<34x34xf32>
    %226 = arith.subf %222, %225 : vector<34x34xf32>
    %227 = math.exp %226 : vector<34x34xf32>
    %cst_87 = arith.constant dense<0.000000e+00> : vector<34xf32>
    %228 = vector.multi_reduction <add>, %227, %cst_87 [1] : vector<34x34xf32> to vector<34xf32>
    %229 = vector.shape_cast %228 : vector<34xf32> to vector<34x1xf32>
    %230 = tpu.reciprocal %229 {approx = true} : vector<34x1xf32> -> vector<34x1xf32>
    %231 = vector.broadcast %230 : vector<34x1xf32> to vector<34x34xf32>
    %232 = arith.mulf %227, %231 : vector<34x34xf32>
    %233 = arith.truncf %232 : vector<34x34xf32> to vector<34x34xbf16>
    %234 = vector.extract_strided_slice %60 {offsets = [0, 56], sizes = [34, 8], strides = [1, 1]} : vector<34x64xbf16> to vector<34x8xbf16>
    %cst_88 = arith.constant dense<0.000000e+00> : vector<34x8xf32>
    %235 = tpu.matmul %233, %234, %cst_88 {dimension_numbers = #tpu.dot_dimension_numbers<[1], [0], [0], [1], [0, 0, 1, 1], [], []>} : vector<34x34xbf16>, vector<34x8xbf16>, vector<34x8xf32> -> vector<34x8xf32>
    %236 = arith.truncf %235 : vector<34x8xf32> to vector<34x8xbf16>
    %237 = vector.extract_strided_slice %62 {offsets = [56, 0], sizes = [8, 64], strides = [1, 1]} : vector<64x64xbf16> to vector<8x64xbf16>
    %cst_89 = arith.constant dense<0.000000e+00> : vector<34x64xf32>
    %238 = tpu.matmul %236, %237, %cst_89 {dimension_numbers = #tpu.dot_dimension_numbers<[1], [0], [0], [1], [0, 0, 1, 1], [], []>} : vector<34x8xbf16>, vector<8x64xbf16>, vector<34x64xf32> -> vector<34x64xf32>
    %239 = arith.addf %217, %238 : vector<34x64xf32>
    %c0_90 = arith.constant 0 : index
    %c0_91 = arith.constant 0 : index
    %c0_92 = arith.constant 0 : index
    %240 = vector.load %arg12[%c0_90, %c0_91, %c0_92] : memref<2x1x64xf32, #tpu.memory_space<vmem>>, vector<1x1x64xf32>
    %241 = vector.shape_cast %240 : vector<1x1x64xf32> to vector<1x64xf32>
    %242 = vector.broadcast %241 : vector<1x64xf32> to vector<34x64xf32>
    %243 = arith.addf %239, %242 : vector<34x64xf32>
    %244 = arith.addf %243, %46 : vector<34x64xf32>
    %c0_93 = arith.constant 0 : index
    %c1 = arith.constant 1 : index
    %c0_94 = arith.constant 0 : index
    %c0_95 = arith.constant 0 : index
    %245 = vector.load %arg7[%c0_93, %c1, %c0_94, %c0_95] : memref<2x2x1x64xf32, #tpu.memory_space<vmem>>, vector<1x1x1x64xf32>
    %246 = vector.shape_cast %245 : vector<1x1x1x64xf32> to vector<1x64xf32>
    %c0_96 = arith.constant 0 : index
    %c1_97 = arith.constant 1 : index
    %c0_98 = arith.constant 0 : index
    %c0_99 = arith.constant 0 : index
    %247 = vector.load %arg8[%c0_96, %c1_97, %c0_98, %c0_99] : memref<2x2x1x64xf32, #tpu.memory_space<vmem>>, vector<1x1x1x64xf32>
    %248 = vector.shape_cast %247 : vector<1x1x1x64xf32> to vector<1x64xf32>
    %cst_100 = arith.constant dense<0.000000e+00> : vector<34xf32>
    %249 = vector.multi_reduction <add>, %244, %cst_100 [1] : vector<34x64xf32> to vector<34xf32>
    %250 = vector.shape_cast %249 : vector<34xf32> to vector<34x1xf32>
    %cst_101 = arith.constant 6.400000e+01 : f32
    %251 = vector.broadcast %cst_101 : f32 to vector<34x1xf32>
    %252 = arith.divf %250, %251 : vector<34x1xf32>
    %253 = vector.broadcast %252 : vector<34x1xf32> to vector<34x64xf32>
    %254 = arith.subf %244, %253 : vector<34x64xf32>
    %255 = arith.mulf %254, %254 : vector<34x64xf32>
    %cst_102 = arith.constant dense<0.000000e+00> : vector<34xf32>
    %256 = vector.multi_reduction <add>, %255, %cst_102 [1] : vector<34x64xf32> to vector<34xf32>
    %257 = vector.shape_cast %256 : vector<34xf32> to vector<34x1xf32>
    %cst_103 = arith.constant 6.400000e+01 : f32
    %258 = vector.broadcast %cst_103 : f32 to vector<34x1xf32>
    %259 = arith.divf %257, %258 : vector<34x1xf32>
    %cst_104 = arith.constant 9.99999974E-6 : f32
    %260 = vector.broadcast %cst_104 : f32 to vector<34x1xf32>
    %261 = arith.addf %259, %260 : vector<34x1xf32>
    %262 = math.rsqrt %261 : vector<34x1xf32>
    %263 = vector.broadcast %262 : vector<34x1xf32> to vector<34x64xf32>
    %264 = arith.mulf %254, %263 : vector<34x64xf32>
    %265 = vector.broadcast %246 : vector<1x64xf32> to vector<34x64xf32>
    %266 = arith.mulf %264, %265 : vector<34x64xf32>
    %267 = vector.broadcast %248 : vector<1x64xf32> to vector<34x64xf32>
    %268 = arith.addf %266, %267 : vector<34x64xf32>
    %269 = arith.truncf %268 : vector<34x64xf32> to vector<34x64xbf16>
    %c0_105 = arith.constant 0 : index
    %c0_106 = arith.constant 0 : index
    %c0_107 = arith.constant 0 : index
    %270 = vector.load %arg13[%c0_105, %c0_106, %c0_107] : memref<2x64x64xbf16, #tpu.memory_space<vmem>>, vector<1x64x64xbf16>
    %271 = vector.shape_cast %270 : vector<1x64x64xbf16> to vector<64x64xbf16>
    %cst_108 = arith.constant dense<0.000000e+00> : vector<34x64xf32>
    %272 = tpu.matmul %269, %271, %cst_108 {dimension_numbers = #tpu.dot_dimension_numbers<[1], [0], [0], [1], [0, 0, 1, 1], [], []>} : vector<34x64xbf16>, vector<64x64xbf16>, vector<34x64xf32> -> vector<34x64xf32>
    %c0_109 = arith.constant 0 : index
    %c0_110 = arith.constant 0 : index
    %c0_111 = arith.constant 0 : index
    %273 = vector.load %arg14[%c0_109, %c0_110, %c0_111] : memref<2x1x64xf32, #tpu.memory_space<vmem>>, vector<1x1x64xf32>
    %274 = vector.shape_cast %273 : vector<1x1x64xf32> to vector<1x64xf32>
    %275 = vector.broadcast %274 : vector<1x64xf32> to vector<34x64xf32>
    %276 = arith.addf %272, %275 : vector<34x64xf32>
    %cst_112 = arith.constant 5.000000e-01 : f32
    %277 = vector.broadcast %cst_112 : f32 to vector<34x64xf32>
    %278 = arith.mulf %277, %276 : vector<34x64xf32>
    %cst_113 = arith.constant 4.471500e-02 : f32
    %279 = vector.broadcast %cst_113 : f32 to vector<34x64xf32>
    %280 = arith.mulf %279, %276 : vector<34x64xf32>
    %281 = arith.mulf %280, %276 : vector<34x64xf32>
    %282 = arith.mulf %281, %276 : vector<34x64xf32>
    %283 = arith.addf %276, %282 : vector<34x64xf32>
    %cst_114 = arith.constant 0.797884583 : f32
    %284 = vector.broadcast %cst_114 : f32 to vector<34x64xf32>
    %285 = arith.mulf %284, %283 : vector<34x64xf32>
    %286 = math.tanh %285 : vector<34x64xf32>
    %cst_115 = arith.constant 1.000000e+00 : f32
    %287 = vector.broadcast %cst_115 : f32 to vector<34x64xf32>
    %288 = arith.addf %287, %286 : vector<34x64xf32>
    %289 = arith.mulf %278, %288 : vector<34x64xf32>
    %290 = arith.truncf %289 : vector<34x64xf32> to vector<34x64xbf16>
    %c0_116 = arith.constant 0 : index
    %c0_117 = arith.constant 0 : index
    %c0_118 = arith.constant 0 : index
    %291 = vector.load %arg15[%c0_116, %c0_117, %c0_118] : memref<2x64x64xbf16, #tpu.memory_space<vmem>>, vector<1x64x64xbf16>
    %292 = vector.shape_cast %291 : vector<1x64x64xbf16> to vector<64x64xbf16>
    %cst_119 = arith.constant dense<0.000000e+00> : vector<34x64xf32>
    %293 = tpu.matmul %290, %292, %cst_119 {dimension_numbers = #tpu.dot_dimension_numbers<[1], [0], [0], [1], [0, 0, 1, 1], [], []>} : vector<34x64xbf16>, vector<64x64xbf16>, vector<34x64xf32> -> vector<34x64xf32>
    %c0_120 = arith.constant 0 : index
    %c0_121 = arith.constant 0 : index
    %c0_122 = arith.constant 0 : index
    %294 = vector.load %arg16[%c0_120, %c0_121, %c0_122] : memref<2x1x64xf32, #tpu.memory_space<vmem>>, vector<1x1x64xf32>
    %295 = vector.shape_cast %294 : vector<1x1x64xf32> to vector<1x64xf32>
    %296 = vector.broadcast %295 : vector<1x64xf32> to vector<34x64xf32>
    %297 = arith.addf %293, %296 : vector<34x64xf32>
    %298 = arith.addf %297, %268 : vector<34x64xf32>
    %c1_123 = arith.constant 1 : index
    %c0_124 = arith.constant 0 : index
    %c0_125 = arith.constant 0 : index
    %c0_126 = arith.constant 0 : index
    %299 = vector.load %arg7[%c1_123, %c0_124, %c0_125, %c0_126] : memref<2x2x1x64xf32, #tpu.memory_space<vmem>>, vector<1x1x1x64xf32>
    %300 = vector.shape_cast %299 : vector<1x1x1x64xf32> to vector<1x64xf32>
    %c1_127 = arith.constant 1 : index
    %c0_128 = arith.constant 0 : index
    %c0_129 = arith.constant 0 : index
    %c0_130 = arith.constant 0 : index
    %301 = vector.load %arg8[%c1_127, %c0_128, %c0_129, %c0_130] : memref<2x2x1x64xf32, #tpu.memory_space<vmem>>, vector<1x1x1x64xf32>
    %302 = vector.shape_cast %301 : vector<1x1x1x64xf32> to vector<1x64xf32>
    %cst_131 = arith.constant dense<0.000000e+00> : vector<34xf32>
    %303 = vector.multi_reduction <add>, %298, %cst_131 [1] : vector<34x64xf32> to vector<34xf32>
    %304 = vector.shape_cast %303 : vector<34xf32> to vector<34x1xf32>
    %cst_132 = arith.constant 6.400000e+01 : f32
    %305 = vector.broadcast %cst_132 : f32 to vector<34x1xf32>
    %306 = arith.divf %304, %305 : vector<34x1xf32>
    %307 = vector.broadcast %306 : vector<34x1xf32> to vector<34x64xf32>
    %308 = arith.subf %298, %307 : vector<34x64xf32>
    %309 = arith.mulf %308, %308 : vector<34x64xf32>
    %cst_133 = arith.constant dense<0.000000e+00> : vector<34xf32>
    %310 = vector.multi_reduction <add>, %309, %cst_133 [1] : vector<34x64xf32> to vector<34xf32>
    %311 = vector.shape_cast %310 : vector<34xf32> to vector<34x1xf32>
    %cst_134 = arith.constant 6.400000e+01 : f32
    %312 = vector.broadcast %cst_134 : f32 to vector<34x1xf32>
    %313 = arith.divf %311, %312 : vector<34x1xf32>
    %cst_135 = arith.constant 9.99999974E-6 : f32
    %314 = vector.broadcast %cst_135 : f32 to vector<34x1xf32>
    %315 = arith.addf %313, %314 : vector<34x1xf32>
    %316 = math.rsqrt %315 : vector<34x1xf32>
    %317 = vector.broadcast %316 : vector<34x1xf32> to vector<34x64xf32>
    %318 = arith.mulf %308, %317 : vector<34x64xf32>
    %319 = vector.broadcast %300 : vector<1x64xf32> to vector<34x64xf32>
    %320 = arith.mulf %318, %319 : vector<34x64xf32>
    %321 = vector.broadcast %302 : vector<1x64xf32> to vector<34x64xf32>
    %322 = arith.addf %320, %321 : vector<34x64xf32>
    %323 = arith.truncf %322 : vector<34x64xf32> to vector<34x64xbf16>
    %c1_136 = arith.constant 1 : index
    %c0_137 = arith.constant 0 : index
    %c0_138 = arith.constant 0 : index
    %324 = vector.load %arg9[%c1_136, %c0_137, %c0_138] : memref<2x64x192xbf16, #tpu.memory_space<vmem>>, vector<1x64x192xbf16>
    %325 = vector.shape_cast %324 : vector<1x64x192xbf16> to vector<64x192xbf16>
    %cst_139 = arith.constant dense<0.000000e+00> : vector<34x192xf32>
    %326 = tpu.matmul %323, %325, %cst_139 {dimension_numbers = #tpu.dot_dimension_numbers<[1], [0], [0], [1], [0, 0, 1, 1], [], []>} : vector<34x64xbf16>, vector<64x192xbf16>, vector<34x192xf32> -> vector<34x192xf32>
    %c1_140 = arith.constant 1 : index
    %c0_141 = arith.constant 0 : index
    %c0_142 = arith.constant 0 : index
    %327 = vector.load %arg10[%c1_140, %c0_141, %c0_142] : memref<2x1x192xf32, #tpu.memory_space<vmem>>, vector<1x1x192xf32>
    %328 = vector.shape_cast %327 : vector<1x1x192xf32> to vector<1x192xf32>
    %329 = vector.broadcast %328 : vector<1x192xf32> to vector<34x192xf32>
    %330 = arith.addf %326, %329 : vector<34x192xf32>
    %331 = vector.extract_strided_slice %330 {offsets = [0, 0], sizes = [34, 64], strides = [1, 1]} : vector<34x192xf32> to vector<34x64xf32>
    %332 = arith.truncf %331 : vector<34x64xf32> to vector<34x64xbf16>
    %333 = vector.extract_strided_slice %330 {offsets = [0, 64], sizes = [34, 64], strides = [1, 1]} : vector<34x192xf32> to vector<34x64xf32>
    %334 = arith.truncf %333 : vector<34x64xf32> to vector<34x64xbf16>
    %335 = vector.extract_strided_slice %330 {offsets = [0, 128], sizes = [34, 64], strides = [1, 1]} : vector<34x192xf32> to vector<34x64xf32>
    %336 = arith.truncf %335 : vector<34x64xf32> to vector<34x64xbf16>
    %c1_143 = arith.constant 1 : index
    %c0_144 = arith.constant 0 : index
    %c0_145 = arith.constant 0 : index
    %337 = vector.load %arg11[%c1_143, %c0_144, %c0_145] : memref<2x64x64xbf16, #tpu.memory_space<vmem>>, vector<1x64x64xbf16>
    %338 = vector.shape_cast %337 : vector<1x64x64xbf16> to vector<64x64xbf16>
    %cst_146 = arith.constant 0.000000e+00 : f32
    %339 = vector.broadcast %cst_146 : f32 to vector<34x64xf32>
    %340 = vector.extract_strided_slice %332 {offsets = [0, 0], sizes = [34, 8], strides = [1, 1]} : vector<34x64xbf16> to vector<34x8xbf16>
    %341 = vector.extract_strided_slice %334 {offsets = [0, 0], sizes = [34, 8], strides = [1, 1]} : vector<34x64xbf16> to vector<34x8xbf16>
    %cst_147 = arith.constant dense<0.000000e+00> : vector<34x34xf32>
    %342 = tpu.matmul %340, %341, %cst_147 {dimension_numbers = #tpu.dot_dimension_numbers<[1], [1], [0], [0], [0, 0, 1, 0], [], []>} : vector<34x8xbf16>, vector<34x8xbf16>, vector<34x34xf32> -> vector<34x34xf32>
    %c0_148 = arith.constant 0 : index
    %c0_149 = arith.constant 0 : index
    %343 = vector.load %arg6[%c0_148, %c0_149] : memref<34x34xf32, #tpu.memory_space<vmem>>, vector<34x34xf32>
    %344 = arith.addf %342, %343 : vector<34x34xf32>
    %cst_150 = arith.constant dense<0xFF800000> : vector<34xf32>
    %345 = vector.multi_reduction <maximumf>, %344, %cst_150 [1] : vector<34x34xf32> to vector<34xf32>
    %346 = vector.shape_cast %345 : vector<34xf32> to vector<34x1xf32>
    %347 = vector.broadcast %346 : vector<34x1xf32> to vector<34x34xf32>
    %348 = arith.subf %344, %347 : vector<34x34xf32>
    %349 = math.exp %348 : vector<34x34xf32>
    %cst_151 = arith.constant dense<0.000000e+00> : vector<34xf32>
    %350 = vector.multi_reduction <add>, %349, %cst_151 [1] : vector<34x34xf32> to vector<34xf32>
    %351 = vector.shape_cast %350 : vector<34xf32> to vector<34x1xf32>
    %352 = tpu.reciprocal %351 {approx = true} : vector<34x1xf32> -> vector<34x1xf32>
    %353 = vector.broadcast %352 : vector<34x1xf32> to vector<34x34xf32>
    %354 = arith.mulf %349, %353 : vector<34x34xf32>
    %355 = arith.truncf %354 : vector<34x34xf32> to vector<34x34xbf16>
    %356 = vector.extract_strided_slice %336 {offsets = [0, 0], sizes = [34, 8], strides = [1, 1]} : vector<34x64xbf16> to vector<34x8xbf16>
    %cst_152 = arith.constant dense<0.000000e+00> : vector<34x8xf32>
    %357 = tpu.matmul %355, %356, %cst_152 {dimension_numbers = #tpu.dot_dimension_numbers<[1], [0], [0], [1], [0, 0, 1, 1], [], []>} : vector<34x34xbf16>, vector<34x8xbf16>, vector<34x8xf32> -> vector<34x8xf32>
    %358 = arith.truncf %357 : vector<34x8xf32> to vector<34x8xbf16>
    %359 = vector.extract_strided_slice %338 {offsets = [0, 0], sizes = [8, 64], strides = [1, 1]} : vector<64x64xbf16> to vector<8x64xbf16>
    %cst_153 = arith.constant dense<0.000000e+00> : vector<34x64xf32>
    %360 = tpu.matmul %358, %359, %cst_153 {dimension_numbers = #tpu.dot_dimension_numbers<[1], [0], [0], [1], [0, 0, 1, 1], [], []>} : vector<34x8xbf16>, vector<8x64xbf16>, vector<34x64xf32> -> vector<34x64xf32>
    %361 = arith.addf %339, %360 : vector<34x64xf32>
    %362 = vector.extract_strided_slice %332 {offsets = [0, 8], sizes = [34, 8], strides = [1, 1]} : vector<34x64xbf16> to vector<34x8xbf16>
    %363 = vector.extract_strided_slice %334 {offsets = [0, 8], sizes = [34, 8], strides = [1, 1]} : vector<34x64xbf16> to vector<34x8xbf16>
    %cst_154 = arith.constant dense<0.000000e+00> : vector<34x34xf32>
    %364 = tpu.matmul %362, %363, %cst_154 {dimension_numbers = #tpu.dot_dimension_numbers<[1], [1], [0], [0], [0, 0, 1, 0], [], []>} : vector<34x8xbf16>, vector<34x8xbf16>, vector<34x34xf32> -> vector<34x34xf32>
    %c0_155 = arith.constant 0 : index
    %c0_156 = arith.constant 0 : index
    %365 = vector.load %arg6[%c0_155, %c0_156] : memref<34x34xf32, #tpu.memory_space<vmem>>, vector<34x34xf32>
    %366 = arith.addf %364, %365 : vector<34x34xf32>
    %cst_157 = arith.constant dense<0xFF800000> : vector<34xf32>
    %367 = vector.multi_reduction <maximumf>, %366, %cst_157 [1] : vector<34x34xf32> to vector<34xf32>
    %368 = vector.shape_cast %367 : vector<34xf32> to vector<34x1xf32>
    %369 = vector.broadcast %368 : vector<34x1xf32> to vector<34x34xf32>
    %370 = arith.subf %366, %369 : vector<34x34xf32>
    %371 = math.exp %370 : vector<34x34xf32>
    %cst_158 = arith.constant dense<0.000000e+00> : vector<34xf32>
    %372 = vector.multi_reduction <add>, %371, %cst_158 [1] : vector<34x34xf32> to vector<34xf32>
    %373 = vector.shape_cast %372 : vector<34xf32> to vector<34x1xf32>
    %374 = tpu.reciprocal %373 {approx = true} : vector<34x1xf32> -> vector<34x1xf32>
    %375 = vector.broadcast %374 : vector<34x1xf32> to vector<34x34xf32>
    %376 = arith.mulf %371, %375 : vector<34x34xf32>
    %377 = arith.truncf %376 : vector<34x34xf32> to vector<34x34xbf16>
    %378 = vector.extract_strided_slice %336 {offsets = [0, 8], sizes = [34, 8], strides = [1, 1]} : vector<34x64xbf16> to vector<34x8xbf16>
    %cst_159 = arith.constant dense<0.000000e+00> : vector<34x8xf32>
    %379 = tpu.matmul %377, %378, %cst_159 {dimension_numbers = #tpu.dot_dimension_numbers<[1], [0], [0], [1], [0, 0, 1, 1], [], []>} : vector<34x34xbf16>, vector<34x8xbf16>, vector<34x8xf32> -> vector<34x8xf32>
    %380 = arith.truncf %379 : vector<34x8xf32> to vector<34x8xbf16>
    %381 = vector.extract_strided_slice %338 {offsets = [8, 0], sizes = [8, 64], strides = [1, 1]} : vector<64x64xbf16> to vector<8x64xbf16>
    %cst_160 = arith.constant dense<0.000000e+00> : vector<34x64xf32>
    %382 = tpu.matmul %380, %381, %cst_160 {dimension_numbers = #tpu.dot_dimension_numbers<[1], [0], [0], [1], [0, 0, 1, 1], [], []>} : vector<34x8xbf16>, vector<8x64xbf16>, vector<34x64xf32> -> vector<34x64xf32>
    %383 = arith.addf %361, %382 : vector<34x64xf32>
    %384 = vector.extract_strided_slice %332 {offsets = [0, 16], sizes = [34, 8], strides = [1, 1]} : vector<34x64xbf16> to vector<34x8xbf16>
    %385 = vector.extract_strided_slice %334 {offsets = [0, 16], sizes = [34, 8], strides = [1, 1]} : vector<34x64xbf16> to vector<34x8xbf16>
    %cst_161 = arith.constant dense<0.000000e+00> : vector<34x34xf32>
    %386 = tpu.matmul %384, %385, %cst_161 {dimension_numbers = #tpu.dot_dimension_numbers<[1], [1], [0], [0], [0, 0, 1, 0], [], []>} : vector<34x8xbf16>, vector<34x8xbf16>, vector<34x34xf32> -> vector<34x34xf32>
    %c0_162 = arith.constant 0 : index
    %c0_163 = arith.constant 0 : index
    %387 = vector.load %arg6[%c0_162, %c0_163] : memref<34x34xf32, #tpu.memory_space<vmem>>, vector<34x34xf32>
    %388 = arith.addf %386, %387 : vector<34x34xf32>
    %cst_164 = arith.constant dense<0xFF800000> : vector<34xf32>
    %389 = vector.multi_reduction <maximumf>, %388, %cst_164 [1] : vector<34x34xf32> to vector<34xf32>
    %390 = vector.shape_cast %389 : vector<34xf32> to vector<34x1xf32>
    %391 = vector.broadcast %390 : vector<34x1xf32> to vector<34x34xf32>
    %392 = arith.subf %388, %391 : vector<34x34xf32>
    %393 = math.exp %392 : vector<34x34xf32>
    %cst_165 = arith.constant dense<0.000000e+00> : vector<34xf32>
    %394 = vector.multi_reduction <add>, %393, %cst_165 [1] : vector<34x34xf32> to vector<34xf32>
    %395 = vector.shape_cast %394 : vector<34xf32> to vector<34x1xf32>
    %396 = tpu.reciprocal %395 {approx = true} : vector<34x1xf32> -> vector<34x1xf32>
    %397 = vector.broadcast %396 : vector<34x1xf32> to vector<34x34xf32>
    %398 = arith.mulf %393, %397 : vector<34x34xf32>
    %399 = arith.truncf %398 : vector<34x34xf32> to vector<34x34xbf16>
    %400 = vector.extract_strided_slice %336 {offsets = [0, 16], sizes = [34, 8], strides = [1, 1]} : vector<34x64xbf16> to vector<34x8xbf16>
    %cst_166 = arith.constant dense<0.000000e+00> : vector<34x8xf32>
    %401 = tpu.matmul %399, %400, %cst_166 {dimension_numbers = #tpu.dot_dimension_numbers<[1], [0], [0], [1], [0, 0, 1, 1], [], []>} : vector<34x34xbf16>, vector<34x8xbf16>, vector<34x8xf32> -> vector<34x8xf32>
    %402 = arith.truncf %401 : vector<34x8xf32> to vector<34x8xbf16>
    %403 = vector.extract_strided_slice %338 {offsets = [16, 0], sizes = [8, 64], strides = [1, 1]} : vector<64x64xbf16> to vector<8x64xbf16>
    %cst_167 = arith.constant dense<0.000000e+00> : vector<34x64xf32>
    %404 = tpu.matmul %402, %403, %cst_167 {dimension_numbers = #tpu.dot_dimension_numbers<[1], [0], [0], [1], [0, 0, 1, 1], [], []>} : vector<34x8xbf16>, vector<8x64xbf16>, vector<34x64xf32> -> vector<34x64xf32>
    %405 = arith.addf %383, %404 : vector<34x64xf32>
    %406 = vector.extract_strided_slice %332 {offsets = [0, 24], sizes = [34, 8], strides = [1, 1]} : vector<34x64xbf16> to vector<34x8xbf16>
    %407 = vector.extract_strided_slice %334 {offsets = [0, 24], sizes = [34, 8], strides = [1, 1]} : vector<34x64xbf16> to vector<34x8xbf16>
    %cst_168 = arith.constant dense<0.000000e+00> : vector<34x34xf32>
    %408 = tpu.matmul %406, %407, %cst_168 {dimension_numbers = #tpu.dot_dimension_numbers<[1], [1], [0], [0], [0, 0, 1, 0], [], []>} : vector<34x8xbf16>, vector<34x8xbf16>, vector<34x34xf32> -> vector<34x34xf32>
    %c0_169 = arith.constant 0 : index
    %c0_170 = arith.constant 0 : index
    %409 = vector.load %arg6[%c0_169, %c0_170] : memref<34x34xf32, #tpu.memory_space<vmem>>, vector<34x34xf32>
    %410 = arith.addf %408, %409 : vector<34x34xf32>
    %cst_171 = arith.constant dense<0xFF800000> : vector<34xf32>
    %411 = vector.multi_reduction <maximumf>, %410, %cst_171 [1] : vector<34x34xf32> to vector<34xf32>
    %412 = vector.shape_cast %411 : vector<34xf32> to vector<34x1xf32>
    %413 = vector.broadcast %412 : vector<34x1xf32> to vector<34x34xf32>
    %414 = arith.subf %410, %413 : vector<34x34xf32>
    %415 = math.exp %414 : vector<34x34xf32>
    %cst_172 = arith.constant dense<0.000000e+00> : vector<34xf32>
    %416 = vector.multi_reduction <add>, %415, %cst_172 [1] : vector<34x34xf32> to vector<34xf32>
    %417 = vector.shape_cast %416 : vector<34xf32> to vector<34x1xf32>
    %418 = tpu.reciprocal %417 {approx = true} : vector<34x1xf32> -> vector<34x1xf32>
    %419 = vector.broadcast %418 : vector<34x1xf32> to vector<34x34xf32>
    %420 = arith.mulf %415, %419 : vector<34x34xf32>
    %421 = arith.truncf %420 : vector<34x34xf32> to vector<34x34xbf16>
    %422 = vector.extract_strided_slice %336 {offsets = [0, 24], sizes = [34, 8], strides = [1, 1]} : vector<34x64xbf16> to vector<34x8xbf16>
    %cst_173 = arith.constant dense<0.000000e+00> : vector<34x8xf32>
    %423 = tpu.matmul %421, %422, %cst_173 {dimension_numbers = #tpu.dot_dimension_numbers<[1], [0], [0], [1], [0, 0, 1, 1], [], []>} : vector<34x34xbf16>, vector<34x8xbf16>, vector<34x8xf32> -> vector<34x8xf32>
    %424 = arith.truncf %423 : vector<34x8xf32> to vector<34x8xbf16>
    %425 = vector.extract_strided_slice %338 {offsets = [24, 0], sizes = [8, 64], strides = [1, 1]} : vector<64x64xbf16> to vector<8x64xbf16>
    %cst_174 = arith.constant dense<0.000000e+00> : vector<34x64xf32>
    %426 = tpu.matmul %424, %425, %cst_174 {dimension_numbers = #tpu.dot_dimension_numbers<[1], [0], [0], [1], [0, 0, 1, 1], [], []>} : vector<34x8xbf16>, vector<8x64xbf16>, vector<34x64xf32> -> vector<34x64xf32>
    %427 = arith.addf %405, %426 : vector<34x64xf32>
    %428 = vector.extract_strided_slice %332 {offsets = [0, 32], sizes = [34, 8], strides = [1, 1]} : vector<34x64xbf16> to vector<34x8xbf16>
    %429 = vector.extract_strided_slice %334 {offsets = [0, 32], sizes = [34, 8], strides = [1, 1]} : vector<34x64xbf16> to vector<34x8xbf16>
    %cst_175 = arith.constant dense<0.000000e+00> : vector<34x34xf32>
    %430 = tpu.matmul %428, %429, %cst_175 {dimension_numbers = #tpu.dot_dimension_numbers<[1], [1], [0], [0], [0, 0, 1, 0], [], []>} : vector<34x8xbf16>, vector<34x8xbf16>, vector<34x34xf32> -> vector<34x34xf32>
    %c0_176 = arith.constant 0 : index
    %c0_177 = arith.constant 0 : index
    %431 = vector.load %arg6[%c0_176, %c0_177] : memref<34x34xf32, #tpu.memory_space<vmem>>, vector<34x34xf32>
    %432 = arith.addf %430, %431 : vector<34x34xf32>
    %cst_178 = arith.constant dense<0xFF800000> : vector<34xf32>
    %433 = vector.multi_reduction <maximumf>, %432, %cst_178 [1] : vector<34x34xf32> to vector<34xf32>
    %434 = vector.shape_cast %433 : vector<34xf32> to vector<34x1xf32>
    %435 = vector.broadcast %434 : vector<34x1xf32> to vector<34x34xf32>
    %436 = arith.subf %432, %435 : vector<34x34xf32>
    %437 = math.exp %436 : vector<34x34xf32>
    %cst_179 = arith.constant dense<0.000000e+00> : vector<34xf32>
    %438 = vector.multi_reduction <add>, %437, %cst_179 [1] : vector<34x34xf32> to vector<34xf32>
    %439 = vector.shape_cast %438 : vector<34xf32> to vector<34x1xf32>
    %440 = tpu.reciprocal %439 {approx = true} : vector<34x1xf32> -> vector<34x1xf32>
    %441 = vector.broadcast %440 : vector<34x1xf32> to vector<34x34xf32>
    %442 = arith.mulf %437, %441 : vector<34x34xf32>
    %443 = arith.truncf %442 : vector<34x34xf32> to vector<34x34xbf16>
    %444 = vector.extract_strided_slice %336 {offsets = [0, 32], sizes = [34, 8], strides = [1, 1]} : vector<34x64xbf16> to vector<34x8xbf16>
    %cst_180 = arith.constant dense<0.000000e+00> : vector<34x8xf32>
    %445 = tpu.matmul %443, %444, %cst_180 {dimension_numbers = #tpu.dot_dimension_numbers<[1], [0], [0], [1], [0, 0, 1, 1], [], []>} : vector<34x34xbf16>, vector<34x8xbf16>, vector<34x8xf32> -> vector<34x8xf32>
    %446 = arith.truncf %445 : vector<34x8xf32> to vector<34x8xbf16>
    %447 = vector.extract_strided_slice %338 {offsets = [32, 0], sizes = [8, 64], strides = [1, 1]} : vector<64x64xbf16> to vector<8x64xbf16>
    %cst_181 = arith.constant dense<0.000000e+00> : vector<34x64xf32>
    %448 = tpu.matmul %446, %447, %cst_181 {dimension_numbers = #tpu.dot_dimension_numbers<[1], [0], [0], [1], [0, 0, 1, 1], [], []>} : vector<34x8xbf16>, vector<8x64xbf16>, vector<34x64xf32> -> vector<34x64xf32>
    %449 = arith.addf %427, %448 : vector<34x64xf32>
    %450 = vector.extract_strided_slice %332 {offsets = [0, 40], sizes = [34, 8], strides = [1, 1]} : vector<34x64xbf16> to vector<34x8xbf16>
    %451 = vector.extract_strided_slice %334 {offsets = [0, 40], sizes = [34, 8], strides = [1, 1]} : vector<34x64xbf16> to vector<34x8xbf16>
    %cst_182 = arith.constant dense<0.000000e+00> : vector<34x34xf32>
    %452 = tpu.matmul %450, %451, %cst_182 {dimension_numbers = #tpu.dot_dimension_numbers<[1], [1], [0], [0], [0, 0, 1, 0], [], []>} : vector<34x8xbf16>, vector<34x8xbf16>, vector<34x34xf32> -> vector<34x34xf32>
    %c0_183 = arith.constant 0 : index
    %c0_184 = arith.constant 0 : index
    %453 = vector.load %arg6[%c0_183, %c0_184] : memref<34x34xf32, #tpu.memory_space<vmem>>, vector<34x34xf32>
    %454 = arith.addf %452, %453 : vector<34x34xf32>
    %cst_185 = arith.constant dense<0xFF800000> : vector<34xf32>
    %455 = vector.multi_reduction <maximumf>, %454, %cst_185 [1] : vector<34x34xf32> to vector<34xf32>
    %456 = vector.shape_cast %455 : vector<34xf32> to vector<34x1xf32>
    %457 = vector.broadcast %456 : vector<34x1xf32> to vector<34x34xf32>
    %458 = arith.subf %454, %457 : vector<34x34xf32>
    %459 = math.exp %458 : vector<34x34xf32>
    %cst_186 = arith.constant dense<0.000000e+00> : vector<34xf32>
    %460 = vector.multi_reduction <add>, %459, %cst_186 [1] : vector<34x34xf32> to vector<34xf32>
    %461 = vector.shape_cast %460 : vector<34xf32> to vector<34x1xf32>
    %462 = tpu.reciprocal %461 {approx = true} : vector<34x1xf32> -> vector<34x1xf32>
    %463 = vector.broadcast %462 : vector<34x1xf32> to vector<34x34xf32>
    %464 = arith.mulf %459, %463 : vector<34x34xf32>
    %465 = arith.truncf %464 : vector<34x34xf32> to vector<34x34xbf16>
    %466 = vector.extract_strided_slice %336 {offsets = [0, 40], sizes = [34, 8], strides = [1, 1]} : vector<34x64xbf16> to vector<34x8xbf16>
    %cst_187 = arith.constant dense<0.000000e+00> : vector<34x8xf32>
    %467 = tpu.matmul %465, %466, %cst_187 {dimension_numbers = #tpu.dot_dimension_numbers<[1], [0], [0], [1], [0, 0, 1, 1], [], []>} : vector<34x34xbf16>, vector<34x8xbf16>, vector<34x8xf32> -> vector<34x8xf32>
    %468 = arith.truncf %467 : vector<34x8xf32> to vector<34x8xbf16>
    %469 = vector.extract_strided_slice %338 {offsets = [40, 0], sizes = [8, 64], strides = [1, 1]} : vector<64x64xbf16> to vector<8x64xbf16>
    %cst_188 = arith.constant dense<0.000000e+00> : vector<34x64xf32>
    %470 = tpu.matmul %468, %469, %cst_188 {dimension_numbers = #tpu.dot_dimension_numbers<[1], [0], [0], [1], [0, 0, 1, 1], [], []>} : vector<34x8xbf16>, vector<8x64xbf16>, vector<34x64xf32> -> vector<34x64xf32>
    %471 = arith.addf %449, %470 : vector<34x64xf32>
    %472 = vector.extract_strided_slice %332 {offsets = [0, 48], sizes = [34, 8], strides = [1, 1]} : vector<34x64xbf16> to vector<34x8xbf16>
    %473 = vector.extract_strided_slice %334 {offsets = [0, 48], sizes = [34, 8], strides = [1, 1]} : vector<34x64xbf16> to vector<34x8xbf16>
    %cst_189 = arith.constant dense<0.000000e+00> : vector<34x34xf32>
    %474 = tpu.matmul %472, %473, %cst_189 {dimension_numbers = #tpu.dot_dimension_numbers<[1], [1], [0], [0], [0, 0, 1, 0], [], []>} : vector<34x8xbf16>, vector<34x8xbf16>, vector<34x34xf32> -> vector<34x34xf32>
    %c0_190 = arith.constant 0 : index
    %c0_191 = arith.constant 0 : index
    %475 = vector.load %arg6[%c0_190, %c0_191] : memref<34x34xf32, #tpu.memory_space<vmem>>, vector<34x34xf32>
    %476 = arith.addf %474, %475 : vector<34x34xf32>
    %cst_192 = arith.constant dense<0xFF800000> : vector<34xf32>
    %477 = vector.multi_reduction <maximumf>, %476, %cst_192 [1] : vector<34x34xf32> to vector<34xf32>
    %478 = vector.shape_cast %477 : vector<34xf32> to vector<34x1xf32>
    %479 = vector.broadcast %478 : vector<34x1xf32> to vector<34x34xf32>
    %480 = arith.subf %476, %479 : vector<34x34xf32>
    %481 = math.exp %480 : vector<34x34xf32>
    %cst_193 = arith.constant dense<0.000000e+00> : vector<34xf32>
    %482 = vector.multi_reduction <add>, %481, %cst_193 [1] : vector<34x34xf32> to vector<34xf32>
    %483 = vector.shape_cast %482 : vector<34xf32> to vector<34x1xf32>
    %484 = tpu.reciprocal %483 {approx = true} : vector<34x1xf32> -> vector<34x1xf32>
    %485 = vector.broadcast %484 : vector<34x1xf32> to vector<34x34xf32>
    %486 = arith.mulf %481, %485 : vector<34x34xf32>
    %487 = arith.truncf %486 : vector<34x34xf32> to vector<34x34xbf16>
    %488 = vector.extract_strided_slice %336 {offsets = [0, 48], sizes = [34, 8], strides = [1, 1]} : vector<34x64xbf16> to vector<34x8xbf16>
    %cst_194 = arith.constant dense<0.000000e+00> : vector<34x8xf32>
    %489 = tpu.matmul %487, %488, %cst_194 {dimension_numbers = #tpu.dot_dimension_numbers<[1], [0], [0], [1], [0, 0, 1, 1], [], []>} : vector<34x34xbf16>, vector<34x8xbf16>, vector<34x8xf32> -> vector<34x8xf32>
    %490 = arith.truncf %489 : vector<34x8xf32> to vector<34x8xbf16>
    %491 = vector.extract_strided_slice %338 {offsets = [48, 0], sizes = [8, 64], strides = [1, 1]} : vector<64x64xbf16> to vector<8x64xbf16>
    %cst_195 = arith.constant dense<0.000000e+00> : vector<34x64xf32>
    %492 = tpu.matmul %490, %491, %cst_195 {dimension_numbers = #tpu.dot_dimension_numbers<[1], [0], [0], [1], [0, 0, 1, 1], [], []>} : vector<34x8xbf16>, vector<8x64xbf16>, vector<34x64xf32> -> vector<34x64xf32>
    %493 = arith.addf %471, %492 : vector<34x64xf32>
    %494 = vector.extract_strided_slice %332 {offsets = [0, 56], sizes = [34, 8], strides = [1, 1]} : vector<34x64xbf16> to vector<34x8xbf16>
    %495 = vector.extract_strided_slice %334 {offsets = [0, 56], sizes = [34, 8], strides = [1, 1]} : vector<34x64xbf16> to vector<34x8xbf16>
    %cst_196 = arith.constant dense<0.000000e+00> : vector<34x34xf32>
    %496 = tpu.matmul %494, %495, %cst_196 {dimension_numbers = #tpu.dot_dimension_numbers<[1], [1], [0], [0], [0, 0, 1, 0], [], []>} : vector<34x8xbf16>, vector<34x8xbf16>, vector<34x34xf32> -> vector<34x34xf32>
    %c0_197 = arith.constant 0 : index
    %c0_198 = arith.constant 0 : index
    %497 = vector.load %arg6[%c0_197, %c0_198] : memref<34x34xf32, #tpu.memory_space<vmem>>, vector<34x34xf32>
    %498 = arith.addf %496, %497 : vector<34x34xf32>
    %cst_199 = arith.constant dense<0xFF800000> : vector<34xf32>
    %499 = vector.multi_reduction <maximumf>, %498, %cst_199 [1] : vector<34x34xf32> to vector<34xf32>
    %500 = vector.shape_cast %499 : vector<34xf32> to vector<34x1xf32>
    %501 = vector.broadcast %500 : vector<34x1xf32> to vector<34x34xf32>
    %502 = arith.subf %498, %501 : vector<34x34xf32>
    %503 = math.exp %502 : vector<34x34xf32>
    %cst_200 = arith.constant dense<0.000000e+00> : vector<34xf32>
    %504 = vector.multi_reduction <add>, %503, %cst_200 [1] : vector<34x34xf32> to vector<34xf32>
    %505 = vector.shape_cast %504 : vector<34xf32> to vector<34x1xf32>
    %506 = tpu.reciprocal %505 {approx = true} : vector<34x1xf32> -> vector<34x1xf32>
    %507 = vector.broadcast %506 : vector<34x1xf32> to vector<34x34xf32>
    %508 = arith.mulf %503, %507 : vector<34x34xf32>
    %509 = arith.truncf %508 : vector<34x34xf32> to vector<34x34xbf16>
    %510 = vector.extract_strided_slice %336 {offsets = [0, 56], sizes = [34, 8], strides = [1, 1]} : vector<34x64xbf16> to vector<34x8xbf16>
    %cst_201 = arith.constant dense<0.000000e+00> : vector<34x8xf32>
    %511 = tpu.matmul %509, %510, %cst_201 {dimension_numbers = #tpu.dot_dimension_numbers<[1], [0], [0], [1], [0, 0, 1, 1], [], []>} : vector<34x34xbf16>, vector<34x8xbf16>, vector<34x8xf32> -> vector<34x8xf32>
    %512 = arith.truncf %511 : vector<34x8xf32> to vector<34x8xbf16>
    %513 = vector.extract_strided_slice %338 {offsets = [56, 0], sizes = [8, 64], strides = [1, 1]} : vector<64x64xbf16> to vector<8x64xbf16>
    %cst_202 = arith.constant dense<0.000000e+00> : vector<34x64xf32>
    %514 = tpu.matmul %512, %513, %cst_202 {dimension_numbers = #tpu.dot_dimension_numbers<[1], [0], [0], [1], [0, 0, 1, 1], [], []>} : vector<34x8xbf16>, vector<8x64xbf16>, vector<34x64xf32> -> vector<34x64xf32>
    %515 = arith.addf %493, %514 : vector<34x64xf32>
    %c1_203 = arith.constant 1 : index
    %c0_204 = arith.constant 0 : index
    %c0_205 = arith.constant 0 : index
    %516 = vector.load %arg12[%c1_203, %c0_204, %c0_205] : memref<2x1x64xf32, #tpu.memory_space<vmem>>, vector<1x1x64xf32>
    %517 = vector.shape_cast %516 : vector<1x1x64xf32> to vector<1x64xf32>
    %518 = vector.broadcast %517 : vector<1x64xf32> to vector<34x64xf32>
    %519 = arith.addf %515, %518 : vector<34x64xf32>
    %520 = arith.addf %519, %322 : vector<34x64xf32>
    %c1_206 = arith.constant 1 : index
    %c1_207 = arith.constant 1 : index
    %c0_208 = arith.constant 0 : index
    %c0_209 = arith.constant 0 : index
    %521 = vector.load %arg7[%c1_206, %c1_207, %c0_208, %c0_209] : memref<2x2x1x64xf32, #tpu.memory_space<vmem>>, vector<1x1x1x64xf32>
    %522 = vector.shape_cast %521 : vector<1x1x1x64xf32> to vector<1x64xf32>
    %c1_210 = arith.constant 1 : index
    %c1_211 = arith.constant 1 : index
    %c0_212 = arith.constant 0 : index
    %c0_213 = arith.constant 0 : index
    %523 = vector.load %arg8[%c1_210, %c1_211, %c0_212, %c0_213] : memref<2x2x1x64xf32, #tpu.memory_space<vmem>>, vector<1x1x1x64xf32>
    %524 = vector.shape_cast %523 : vector<1x1x1x64xf32> to vector<1x64xf32>
    %cst_214 = arith.constant dense<0.000000e+00> : vector<34xf32>
    %525 = vector.multi_reduction <add>, %520, %cst_214 [1] : vector<34x64xf32> to vector<34xf32>
    %526 = vector.shape_cast %525 : vector<34xf32> to vector<34x1xf32>
    %cst_215 = arith.constant 6.400000e+01 : f32
    %527 = vector.broadcast %cst_215 : f32 to vector<34x1xf32>
    %528 = arith.divf %526, %527 : vector<34x1xf32>
    %529 = vector.broadcast %528 : vector<34x1xf32> to vector<34x64xf32>
    %530 = arith.subf %520, %529 : vector<34x64xf32>
    %531 = arith.mulf %530, %530 : vector<34x64xf32>
    %cst_216 = arith.constant dense<0.000000e+00> : vector<34xf32>
    %532 = vector.multi_reduction <add>, %531, %cst_216 [1] : vector<34x64xf32> to vector<34xf32>
    %533 = vector.shape_cast %532 : vector<34xf32> to vector<34x1xf32>
    %cst_217 = arith.constant 6.400000e+01 : f32
    %534 = vector.broadcast %cst_217 : f32 to vector<34x1xf32>
    %535 = arith.divf %533, %534 : vector<34x1xf32>
    %cst_218 = arith.constant 9.99999974E-6 : f32
    %536 = vector.broadcast %cst_218 : f32 to vector<34x1xf32>
    %537 = arith.addf %535, %536 : vector<34x1xf32>
    %538 = math.rsqrt %537 : vector<34x1xf32>
    %539 = vector.broadcast %538 : vector<34x1xf32> to vector<34x64xf32>
    %540 = arith.mulf %530, %539 : vector<34x64xf32>
    %541 = vector.broadcast %522 : vector<1x64xf32> to vector<34x64xf32>
    %542 = arith.mulf %540, %541 : vector<34x64xf32>
    %543 = vector.broadcast %524 : vector<1x64xf32> to vector<34x64xf32>
    %544 = arith.addf %542, %543 : vector<34x64xf32>
    %545 = arith.truncf %544 : vector<34x64xf32> to vector<34x64xbf16>
    %c1_219 = arith.constant 1 : index
    %c0_220 = arith.constant 0 : index
    %c0_221 = arith.constant 0 : index
    %546 = vector.load %arg13[%c1_219, %c0_220, %c0_221] : memref<2x64x64xbf16, #tpu.memory_space<vmem>>, vector<1x64x64xbf16>
    %547 = vector.shape_cast %546 : vector<1x64x64xbf16> to vector<64x64xbf16>
    %cst_222 = arith.constant dense<0.000000e+00> : vector<34x64xf32>
    %548 = tpu.matmul %545, %547, %cst_222 {dimension_numbers = #tpu.dot_dimension_numbers<[1], [0], [0], [1], [0, 0, 1, 1], [], []>} : vector<34x64xbf16>, vector<64x64xbf16>, vector<34x64xf32> -> vector<34x64xf32>
    %c1_223 = arith.constant 1 : index
    %c0_224 = arith.constant 0 : index
    %c0_225 = arith.constant 0 : index
    %549 = vector.load %arg14[%c1_223, %c0_224, %c0_225] : memref<2x1x64xf32, #tpu.memory_space<vmem>>, vector<1x1x64xf32>
    %550 = vector.shape_cast %549 : vector<1x1x64xf32> to vector<1x64xf32>
    %551 = vector.broadcast %550 : vector<1x64xf32> to vector<34x64xf32>
    %552 = arith.addf %548, %551 : vector<34x64xf32>
    %cst_226 = arith.constant 5.000000e-01 : f32
    %553 = vector.broadcast %cst_226 : f32 to vector<34x64xf32>
    %554 = arith.mulf %553, %552 : vector<34x64xf32>
    %cst_227 = arith.constant 4.471500e-02 : f32
    %555 = vector.broadcast %cst_227 : f32 to vector<34x64xf32>
    %556 = arith.mulf %555, %552 : vector<34x64xf32>
    %557 = arith.mulf %556, %552 : vector<34x64xf32>
    %558 = arith.mulf %557, %552 : vector<34x64xf32>
    %559 = arith.addf %552, %558 : vector<34x64xf32>
    %cst_228 = arith.constant 0.797884583 : f32
    %560 = vector.broadcast %cst_228 : f32 to vector<34x64xf32>
    %561 = arith.mulf %560, %559 : vector<34x64xf32>
    %562 = math.tanh %561 : vector<34x64xf32>
    %cst_229 = arith.constant 1.000000e+00 : f32
    %563 = vector.broadcast %cst_229 : f32 to vector<34x64xf32>
    %564 = arith.addf %563, %562 : vector<34x64xf32>
    %565 = arith.mulf %554, %564 : vector<34x64xf32>
    %566 = arith.truncf %565 : vector<34x64xf32> to vector<34x64xbf16>
    %c1_230 = arith.constant 1 : index
    %c0_231 = arith.constant 0 : index
    %c0_232 = arith.constant 0 : index
    %567 = vector.load %arg15[%c1_230, %c0_231, %c0_232] : memref<2x64x64xbf16, #tpu.memory_space<vmem>>, vector<1x64x64xbf16>
    %568 = vector.shape_cast %567 : vector<1x64x64xbf16> to vector<64x64xbf16>
    %cst_233 = arith.constant dense<0.000000e+00> : vector<34x64xf32>
    %569 = tpu.matmul %566, %568, %cst_233 {dimension_numbers = #tpu.dot_dimension_numbers<[1], [0], [0], [1], [0, 0, 1, 1], [], []>} : vector<34x64xbf16>, vector<64x64xbf16>, vector<34x64xf32> -> vector<34x64xf32>
    %c1_234 = arith.constant 1 : index
    %c0_235 = arith.constant 0 : index
    %c0_236 = arith.constant 0 : index
    %570 = vector.load %arg16[%c1_234, %c0_235, %c0_236] : memref<2x1x64xf32, #tpu.memory_space<vmem>>, vector<1x1x64xf32>
    %571 = vector.shape_cast %570 : vector<1x1x64xf32> to vector<1x64xf32>
    %572 = vector.broadcast %571 : vector<1x64xf32> to vector<34x64xf32>
    %573 = arith.addf %569, %572 : vector<34x64xf32>
    %574 = arith.addf %573, %544 : vector<34x64xf32>
    %575 = vector.extract_strided_slice %574 {offsets = [0, 0], sizes = [1, 64], strides = [1, 1]} : vector<34x64xf32> to vector<1x64xf32>
    %576 = vector.extract_strided_slice %574 {offsets = [17, 0], sizes = [1, 64], strides = [1, 1]} : vector<34x64xf32> to vector<1x64xf32>
    %577 = tpu.concatenate %575, %576 in 0 : vector<1x64xf32>, vector<1x64xf32> -> vector<2x64xf32>
    %578 = arith.truncf %577 : vector<2x64xf32> to vector<2x64xbf16>
    %c0_237 = arith.constant 0 : index
    %c0_238 = arith.constant 0 : index
    %579 = vector.load %arg17[%c0_237, %c0_238] : memref<64x128xbf16, #tpu.memory_space<vmem>>, vector<64x128xbf16>
    %cst_239 = arith.constant dense<0.000000e+00> : vector<2x128xf32>
    %580 = tpu.matmul %578, %579, %cst_239 {dimension_numbers = #tpu.dot_dimension_numbers<[1], [0], [0], [1], [0, 0, 1, 1], [], []>} : vector<2x64xbf16>, vector<64x128xbf16>, vector<2x128xf32> -> vector<2x128xf32>
    %c0_240 = arith.constant 0 : index
    %c0_241 = arith.constant 0 : index
    %581 = vector.load %arg18[%c0_240, %c0_241] : memref<1x128xf32, #tpu.memory_space<vmem>>, vector<1x128xf32>
    %582 = vector.broadcast %581 : vector<1x128xf32> to vector<2x128xf32>
    %583 = arith.addf %580, %582 : vector<2x128xf32>
    %c0_242 = arith.constant 0 : index
    %c0_243 = arith.constant 0 : index
    %584 = vector.load %arg19[%c0_242, %c0_243] : memref<2x128xf32, #tpu.memory_space<vmem>>, vector<2x128xf32>
    tpu.vector_store %arg19[%c0_242, %c0_243], %583 {strides = array<i32>} : memref<2x128xf32, #tpu.memory_space<vmem>>, vector<2x128xf32>,
    return
  }
  func.func @transform_0(%arg0: i32) -> (i32, i32) {
    %c0_i32 = arith.constant 0 : i32
    %c0_i32_0 = arith.constant 0 : i32
    return %arg0, %c0_i32 : i32, i32
  }
  func.func @transform_1(%arg0: i32) -> (i32, i32) {
    %c0_i32 = arith.constant 0 : i32
    %c0_i32_0 = arith.constant 0 : i32
    %c0_i32_1 = arith.constant 0 : i32
    return %c0_i32, %c0_i32_0 : i32, i32
  }
  func.func @transform_2(%arg0: i32) -> (i32, i32) {
    %c0_i32 = arith.constant 0 : i32
    %c0_i32_0 = arith.constant 0 : i32
    %c0_i32_1 = arith.constant 0 : i32
    return %c0_i32, %c0_i32_0 : i32, i32
  }
  func.func @transform_3(%arg0: i32) -> (i32, i32) {
    %c0_i32 = arith.constant 0 : i32
    %c0_i32_0 = arith.constant 0 : i32
    %c0_i32_1 = arith.constant 0 : i32
    return %c0_i32, %c0_i32_0 : i32, i32
  }
  func.func @transform_4(%arg0: i32) -> (i32, i32) {
    %c0_i32 = arith.constant 0 : i32
    %c0_i32_0 = arith.constant 0 : i32
    %c0_i32_1 = arith.constant 0 : i32
    return %c0_i32, %c0_i32_0 : i32, i32
  }
  func.func @transform_5(%arg0: i32) -> (i32, i32) {
    %c0_i32 = arith.constant 0 : i32
    %c0_i32_0 = arith.constant 0 : i32
    %c0_i32_1 = arith.constant 0 : i32
    return %c0_i32, %c0_i32_0 : i32, i32
  }
  func.func @transform_6(%arg0: i32) -> (i32, i32, i32, i32) {
    %c0_i32 = arith.constant 0 : i32
    %c0_i32_0 = arith.constant 0 : i32
    %c0_i32_1 = arith.constant 0 : i32
    %c0_i32_2 = arith.constant 0 : i32
    %c0_i32_3 = arith.constant 0 : i32
    return %c0_i32, %c0_i32_0, %c0_i32_1, %c0_i32_2 : i32, i32, i32, i32
  }
  func.func @transform_7(%arg0: i32) -> (i32, i32, i32, i32) {
    %c0_i32 = arith.constant 0 : i32
    %c0_i32_0 = arith.constant 0 : i32
    %c0_i32_1 = arith.constant 0 : i32
    %c0_i32_2 = arith.constant 0 : i32
    %c0_i32_3 = arith.constant 0 : i32
    return %c0_i32, %c0_i32_0, %c0_i32_1, %c0_i32_2 : i32, i32, i32, i32
  }
  func.func @transform_8(%arg0: i32) -> (i32, i32, i32) {
    %c0_i32 = arith.constant 0 : i32
    %c0_i32_0 = arith.constant 0 : i32
    %c0_i32_1 = arith.constant 0 : i32
    %c0_i32_2 = arith.constant 0 : i32
    return %c0_i32, %c0_i32_0, %c0_i32_1 : i32, i32, i32
  }
  func.func @transform_9(%arg0: i32) -> (i32, i32, i32) {
    %c0_i32 = arith.constant 0 : i32
    %c0_i32_0 = arith.constant 0 : i32
    %c0_i32_1 = arith.constant 0 : i32
    %c0_i32_2 = arith.constant 0 : i32
    return %c0_i32, %c0_i32_0, %c0_i32_1 : i32, i32, i32
  }
  func.func @transform_10(%arg0: i32) -> (i32, i32, i32) {
    %c0_i32 = arith.constant 0 : i32
    %c0_i32_0 = arith.constant 0 : i32
    %c0_i32_1 = arith.constant 0 : i32
    %c0_i32_2 = arith.constant 0 : i32
    return %c0_i32, %c0_i32_0, %c0_i32_1 : i32, i32, i32
  }
  func.func @transform_11(%arg0: i32) -> (i32, i32, i32) {
    %c0_i32 = arith.constant 0 : i32
    %c0_i32_0 = arith.constant 0 : i32
    %c0_i32_1 = arith.constant 0 : i32
    %c0_i32_2 = arith.constant 0 : i32
    return %c0_i32, %c0_i32_0, %c0_i32_1 : i32, i32, i32
  }
  func.func @transform_12(%arg0: i32) -> (i32, i32, i32) {
    %c0_i32 = arith.constant 0 : i32
    %c0_i32_0 = arith.constant 0 : i32
    %c0_i32_1 = arith.constant 0 : i32
    %c0_i32_2 = arith.constant 0 : i32
    return %c0_i32, %c0_i32_0, %c0_i32_1 : i32, i32, i32
  }
  func.func @transform_13(%arg0: i32) -> (i32, i32, i32) {
    %c0_i32 = arith.constant 0 : i32
    %c0_i32_0 = arith.constant 0 : i32
    %c0_i32_1 = arith.constant 0 : i32
    %c0_i32_2 = arith.constant 0 : i32
    return %c0_i32, %c0_i32_0, %c0_i32_1 : i32, i32, i32
  }
  func.func @transform_14(%arg0: i32) -> (i32, i32, i32) {
    %c0_i32 = arith.constant 0 : i32
    %c0_i32_0 = arith.constant 0 : i32
    %c0_i32_1 = arith.constant 0 : i32
    %c0_i32_2 = arith.constant 0 : i32
    return %c0_i32, %c0_i32_0, %c0_i32_1 : i32, i32, i32
  }
  func.func @transform_15(%arg0: i32) -> (i32, i32, i32) {
    %c0_i32 = arith.constant 0 : i32
    %c0_i32_0 = arith.constant 0 : i32
    %c0_i32_1 = arith.constant 0 : i32
    %c0_i32_2 = arith.constant 0 : i32
    return %c0_i32, %c0_i32_0, %c0_i32_1 : i32, i32, i32
  }
  func.func @transform_16(%arg0: i32) -> (i32, i32) {
    %c0_i32 = arith.constant 0 : i32
    %c0_i32_0 = arith.constant 0 : i32
    %c0_i32_1 = arith.constant 0 : i32
    return %c0_i32, %c0_i32_0 : i32, i32
  }
  func.func @transform_17(%arg0: i32) -> (i32, i32) {
    %c0_i32 = arith.constant 0 : i32
    %c0_i32_0 = arith.constant 0 : i32
    %c0_i32_1 = arith.constant 0 : i32
    return %c0_i32, %c0_i32_0 : i32, i32
  }
  func.func @transform_18(%arg0: i32) -> (i32, i32) {
    %c0_i32 = arith.constant 0 : i32
    %c0_i32_0 = arith.constant 0 : i32
    return %arg0, %c0_i32 : i32, i32
  }
}

</mosaic_0001>

<llo_original>
// kernel: eq.8
$region0: #{eq.8}
  %s0 = inlined_call_operand.vmem [shape: s32[2,17], index: 0, kind: input, shape index: {}]
  %s1 = inlined_call_operand.vmem [shape: s32[34], index: 1, kind: output, shape index: {}]
  $region1: #{eq.8} parent=0
    #allocation0 [shape = 'u8[4096]{0}', space=vmem, size = 0x1000, scoped, tag = 'scoped mem for output reshape']
    #allocation1 [shape = 'u8[4096]{0}', space=vmem, size = 0x1000, scoped, tag = 'scoped mem for input reshape']
    %s3 = ssub.s32 4, 1
    %v4 = vld [vmem:[%s0] sm:%s3]
    %5 = vst [vmem:[#allocation1] sm:%s3] %v4
    %v6 = vld [vmem:[#allocation1] sm:$0x1]
    %vm7 = vcmask 138240
    %8 = vst.msk [vmem:[#allocation0] sm:$0x1] %vm7, %v6
    %s9 = scalar_lea.vmem [#allocation1], 1
    %v10 = vld [vmem:[%s9] sm:$0x1]
    %11 = vrot.lane.b32.xlu0 %v10, 17
    %v12 = vpop.permute.xlu0 %11
    %vm13 = vcmask 277640
    %14 = vst.msk [vmem:[#allocation0] sm:$0x1] %vm13, %v12
    %s16 = ssub.s32 2, 1
    %v17 = vld [vmem:[#allocation0] sm:%s16]
    %s19 = ssub.s32 2, 1
    %20 = vst [vmem:[%s1] sm:%s19] %v17

// kernel: forward_pallas.1
$region0: #{forward_pallas.1}
  #allocation0 [shape = 'u32[]', space=smem, size = 0x4, offset = 0x4, fixed_abs, tag = 'smem constant byte address 0x4 - core index']
  #allocation1 [shape = 'u32[72,128]{1,0:T(1,128)}', space=vmem, size = 0x9000, scoped, tag = 'internal scratch']
  %s0 = inlined_call_operand.vmem [shape: f32[2,16], index: 0, kind: input, shape index: {}]
  %s1 = inlined_call_operand.vmem [shape: f32[1,64], index: 1, kind: input, shape index: {}]
  %s2 = inlined_call_operand.vmem [shape: f32[16,64], index: 2, kind: input, shape index: {}]
  %s3 = inlined_call_operand.vmem [shape: f32[1,64], index: 3, kind: input, shape index: {}]
  %s4 = inlined_call_operand.vmem [shape: f32[1,64], index: 4, kind: input, shape index: {}]
  %s5 = inlined_call_operand.vmem [shape: f32[34,34], index: 5, kind: input, shape index: {}]
  %s6 = inlined_call_operand.vmem [shape: f32[2,2,1,64], index: 6, kind: input, shape index: {}]
  %s7 = inlined_call_operand.vmem [shape: f32[2,2,1,64], index: 7, kind: input, shape index: {}]
  %s8 = inlined_call_operand.vmem [shape: bf16[2,64,192], index: 8, kind: input, shape index: {}]
  %s9 = inlined_call_operand.vmem [shape: f32[2,1,192], index: 9, kind: input, shape index: {}]
  %s10 = inlined_call_operand.vmem [shape: bf16[2,64,64], index: 10, kind: input, shape index: {}]
  %s11 = inlined_call_operand.vmem [shape: f32[2,1,64], index: 11, kind: input, shape index: {}]
  %s12 = inlined_call_operand.vmem [shape: bf16[2,64,64], index: 12, kind: input, shape index: {}]
  %s13 = inlined_call_operand.vmem [shape: f32[2,1,64], index: 13, kind: input, shape index: {}]
  %s14 = inlined_call_operand.vmem [shape: bf16[2,64,64], index: 14, kind: input, shape index: {}]
  %s15 = inlined_call_operand.vmem [shape: f32[2,1,64], index: 15, kind: input, shape index: {}]
  %s16 = inlined_call_operand.vmem [shape: bf16[64,128], index: 16, kind: input, shape index: {}]
  %s17 = inlined_call_operand.vmem [shape: f32[1,128], index: 17, kind: input, shape index: {}]
  %s18 = inlined_call_operand.hbm [shape: f32[2,128], index: 18, kind: output, shape index: {}]
  %s19 = sld [smem:[#allocation0]]
  $region82: #{forward_pallas.1} parent=0
    _
  %s21 = ssub.s32 1, %s19
  %s22 = scalar_select 0, %s21, %s19
  $region1: #{forward_pallas.1} parent=0
    #allocation2 [shape = 'u8[1024]{0}', space=vmem, size = 0x400, scoped, tag = 'output window, operand 0, single buffered']
    #allocation3 [shape = 's32[1]{0}', space=sflag, size = 0x4, scoped, tag = 'scoped memory for forward_pallas.1']
    %23 = vsyncpa [#allocation3], 0
    // Predicated region
    $region2: #{forward_pallas.1} parent=1 // pred_check
      _
    $region3: #{forward_pallas.1} parent=1 // pred_check_branch
      %25 = sbr.rel (0) target = $region5
    $region4: #{forward_pallas.1} parent=1 // pred_region
      _
    $region5: #{forward_pallas.1} parent=1 // pred_fallthru
      _
    // Predicated region
    $region6: #{forward_pallas.1} parent=1 // pred_check
      _
    $region7: #{forward_pallas.1} parent=1 // pred_check_branch
      %27 = sbr.rel (0) target = $region9
    $region8: #{forward_pallas.1} parent=1 // pred_region
      _
    $region9: #{forward_pallas.1} parent=1 // pred_fallthru
      _
    // Predicated region
    $region10: #{forward_pallas.1} parent=1 // pred_check
      _
    $region11: #{forward_pallas.1} parent=1 // pred_check_branch
      %29 = sbr.rel (0) target = $region13
    $region12: #{forward_pallas.1} parent=1 // pred_region
      _
    $region13: #{forward_pallas.1} parent=1 // pred_fallthru
      _
    // Predicated region
    $region14: #{forward_pallas.1} parent=1 // pred_check
      _
    $region15: #{forward_pallas.1} parent=1 // pred_check_branch
      %31 = sbr.rel (0) target = $region17
    $region16: #{forward_pallas.1} parent=1 // pred_region
      _
    $region17: #{forward_pallas.1} parent=1 // pred_fallthru
      _
    // Predicated region
    $region18: #{forward_pallas.1} parent=1 // pred_check
      _
    $region19: #{forward_pallas.1} parent=1 // pred_check_branch
      %33 = sbr.rel (0) target = $region21
    $region20: #{forward_pallas.1} parent=1 // pred_region
      _
    $region21: #{forward_pallas.1} parent=1 // pred_fallthru
      _
    // Predicated region
    $region22: #{forward_pallas.1} parent=1 // pred_check
      _
    $region23: #{forward_pallas.1} parent=1 // pred_check_branch
      %35 = sbr.rel (0) target = $region25
    $region24: #{forward_pallas.1} parent=1 // pred_region
      _
    $region25: #{forward_pallas.1} parent=1 // pred_fallthru
      _
    // Predicated region
    $region26: #{forward_pallas.1} parent=1 // pred_check
      _
    $region27: #{forward_pallas.1} parent=1 // pred_check_branch
      %37 = sbr.rel (0) target = $region29
    $region28: #{forward_pallas.1} parent=1 // pred_region
      _
    $region29: #{forward_pallas.1} parent=1 // pred_fallthru
      _
    // Predicated region
    $region30: #{forward_pallas.1} parent=1 // pred_check
      _
    $region31: #{forward_pallas.1} parent=1 // pred_check_branch
      %39 = sbr.rel (0) target = $region33
    $region32: #{forward_pallas.1} parent=1 // pred_region
      _
    $region33: #{forward_pallas.1} parent=1 // pred_fallthru
      _
    // Predicated region
    $region34: #{forward_pallas.1} parent=1 // pred_check
      _
    $region35: #{forward_pallas.1} parent=1 // pred_check_branch
      %41 = sbr.rel (0) target = $region37
    $region36: #{forward_pallas.1} parent=1 // pred_region
      _
    $region37: #{forward_pallas.1} parent=1 // pred_fallthru
      _
    // Predicated region
    $region38: #{forward_pallas.1} parent=1 // pred_check
      _
    $region39: #{forward_pallas.1} parent=1 // pred_check_branch
      %43 = sbr.rel (0) target = $region41
    $region40: #{forward_pallas.1} parent=1 // pred_region
      _
    $region41: #{forward_pallas.1} parent=1 // pred_fallthru
      _
    // Predicated region
    $region42: #{forward_pallas.1} parent=1 // pred_check
      _
    $region43: #{forward_pallas.1} parent=1 // pred_check_branch
      %45 = sbr.rel (0) target = $region45
    $region44: #{forward_pallas.1} parent=1 // pred_region
      _
    $region45: #{forward_pallas.1} parent=1 // pred_fallthru
      _
    // Predicated region
    $region46: #{forward_pallas.1} parent=1 // pred_check
      _
    $region47: #{forward_pallas.1} parent=1 // pred_check_branch
      %47 = sbr.rel (0) target = $region49
    $region48: #{forward_pallas.1} parent=1 // pred_region
      _
    $region49: #{forward_pallas.1} parent=1 // pred_fallthru
      _
    // Predicated region
    $region50: #{forward_pallas.1} parent=1 // pred_check
      _
    $region51: #{forward_pallas.1} parent=1 // pred_check_branch
      %49 = sbr.rel (0) target = $region53
    $region52: #{forward_pallas.1} parent=1 // pred_region
      _
    $region53: #{forward_pallas.1} parent=1 // pred_fallthru
      _
    // Predicated region
    $region54: #{forward_pallas.1} parent=1 // pred_check
      _
    $region55: #{forward_pallas.1} parent=1 // pred_check_branch
      %51 = sbr.rel (0) target = $region57
    $region56: #{forward_pallas.1} parent=1 // pred_region
      _
    $region57: #{forward_pallas.1} parent=1 // pred_fallthru
      _
    // Predicated region
    $region58: #{forward_pallas.1} parent=1 // pred_check
      _
    $region59: #{forward_pallas.1} parent=1 // pred_check_branch
      %53 = sbr.rel (0) target = $region61
    $region60: #{forward_pallas.1} parent=1 // pred_region
      _
    $region61: #{forward_pallas.1} parent=1 // pred_fallthru
      _
    // Predicated region
    $region62: #{forward_pallas.1} parent=1 // pred_check
      _
    $region63: #{forward_pallas.1} parent=1 // pred_check_branch
      %55 = sbr.rel (0) target = $region65
    $region64: #{forward_pallas.1} parent=1 // pred_region
      _
    $region65: #{forward_pallas.1} parent=1 // pred_fallthru
      _
    // Predicated region
    $region66: #{forward_pallas.1} parent=1 // pred_check
      _
    $region67: #{forward_pallas.1} parent=1 // pred_check_branch
      %57 = sbr.rel (0) target = $region69
    $region68: #{forward_pallas.1} parent=1 // pred_region
      _
    $region69: #{forward_pallas.1} parent=1 // pred_fallthru
      _
    // Predicated region
    $region70: #{forward_pallas.1} parent=1 // pred_check
      _
    $region71: #{forward_pallas.1} parent=1 // pred_check_branch
      %59 = sbr.rel (0) target = $region73
    $region72: #{forward_pallas.1} parent=1 // pred_region
      _
    $region73: #{forward_pallas.1} parent=1 // pred_fallthru
      _
    %v61 = vld [vmem:[%s0] sm:$0x3]
    %v62 = vperm.slane %v61, 0
    %v63 = vlaneseq
    %v64 = vshrl.u32 %v63, 7
    %66 = vset.pattern.permute.xlu0 %v64
    %67 = vperm.xlu0 %66, %v62
    %v68 = vpop.permute.xlu0 %67
    %v69 = vlaneseq
    %v70 = vshrl.u32 %v69, 7
    %v71 = vadd.s32 %v70, 8
    %72 = vset.pattern.permute.xlu0 %v71
    %73 = vperm.xlu0 %72, %v62
    %v74 = vpop.permute.xlu0 %73
    %v75 = vperm.slane %v61, 1
    %v76 = vlaneseq
    %v77 = vshrl.u32 %v76, 7
    %79 = vset.pattern.permute.xlu0 %v77
    %80 = vperm.xlu0 %79, %v75
    %v81 = vpop.permute.xlu0 %80
    %v82 = vlaneseq
    %v83 = vshrl.u32 %v82, 7
    %v84 = vadd.s32 %v83, 8
    %85 = vset.pattern.permute.xlu0 %v84
    %86 = vperm.xlu0 %85, %v75
    %v87 = vpop.permute.xlu0 %86
    %v88 = vld [vmem:[%s1] sm:$0x1]
    %v90 = vperm.slane %v88, 0
    %v92 = vmul.f32 %v68, %v90
    %v93 = vmul.f32 %v74, %v90
    %v94 = vmul.f32 %v81, %v90
    %v95 = vmul.f32 %v87, %v90
    %v96 = vld [vmem:[%s2] sm:$0xff]
    %v97 = vld [vmem:[%s2 + $0x8] sm:$0xff]
    %v98 = vadd.f32 %v92, %v96
    %v99 = vadd.f32 %v93, %v97
    %v100 = vadd.f32 %v94, %v96
    %v101 = vadd.f32 %v95, %v97
    %v102 = vtanh.pop %v98
    %v103 = vtanh.pop %v99
    %v104 = vtanh.pop %v100
    %v105 = vtanh.pop %v101
    %v106 = vld [vmem:[%s3] sm:$0x1]
    %v108 = vperm.slane %v106, 0
    %v110 = vadd.f32 %v102, %v108
    %v111 = vadd.f32 %v103, %v108
    %v112 = vadd.f32 %v104, %v108
    %v113 = vadd.f32 %v105, %v108
    %v114 = vld [vmem:[%s4] sm:$0x1]
    %vm117 = vcmask 1040384
    %v118 = vrot.slane %v110, 7
    %v119 = vrot.slane %v111, 7
    %v120 = vsel %vm117, %v118, %v119
    %v125 = vperm.slane %v114, 0
    %vm129 = vcmask 1041408
    %v130 = vrot.slane %v112, 6
    %v131 = vrot.slane %v113, 6
    %v132 = vsel %vm129, %v130, %v131
    %v136 = vsel %vm117, %v114, %v118
    %v137 = vsel %vm117, %v119, %v125
    %v138 = vsel %vm129, %v137, %v130
    %v139 = vld [vmem:[%s6] sm:$0x1]
    %v140 = vld [vmem:[%s7] sm:$0x1]
    %vm141 = vcmask 523264
    %v142 = vsel %vm141, %v136, 0.0
    %143 = vadd.xlane.f32.xlu0 %v142
    %v144 = vpop.xlane.xlu0 %143
    %v145 = vsel %vm141, %v120, 0.0
    %146 = vadd.xlane.f32.xlu0 %v145
    %v147 = vpop.xlane.xlu0 %146
    %v148 = vsel %vm141, %v138, 0.0
    %149 = vadd.xlane.f32.xlu0 %v148
    %v150 = vpop.xlane.xlu0 %149
    %v151 = vsel %vm141, %v132, 0.0
    %152 = vadd.xlane.f32.xlu0 %v151
    %v153 = vpop.xlane.xlu0 %152
    %vm154 = vcmask 517120
    %v155 = vsel %vm154, %v131, 0.0
    %156 = vadd.xlane.f32.xlu0 %v155
    %v157 = vpop.xlane.xlu0 %156
    %v158 = vrcp.pop 64.0
    %v159 = vmul.f32 64.0, %v158
    %v160 = vsub.f32 1.0, %v159
    %v161 = vmul.f32 %v158, %v160
    %v162 = vadd.f32 %v158, %v161
    %vm163 = vweird.f32 %v158
    %v164 = vsel %vm163, %v158, %v162
    %v165 = vmul.f32 %v144, %v164
    %v166 = vmul.f32 %v147, %v164
    %v167 = vmul.f32 %v150, %v164
    %v168 = vmul.f32 %v153, %v164
    %v169 = vmul.f32 %v157, %v164
    %v170 = vsub.f32 %v136, %v165
    %v171 = vsub.f32 %v120, %v166
    %v172 = vsub.f32 %v138, %v167
    %v173 = vsub.f32 %v132, %v168
    %v174 = vsub.f32 %v131, %v169
    %v175 = vmul.f32 %v170, %v170
    %v176 = vmul.f32 %v171, %v171
    %v177 = vmul.f32 %v172, %v172
    %v178 = vmul.f32 %v173, %v173
    %v179 = vmul.f32 %v174, %v174
    %v180 = vsel %vm141, %v175, 0.0
    %181 = vadd.xlane.f32.xlu0 %v180
    %v182 = vpop.xlane.xlu0 %181
    %v183 = vsel %vm141, %v176, 0.0
    %184 = vadd.xlane.f32.xlu0 %v183
    %v185 = vpop.xlane.xlu0 %184
    %v186 = vsel %vm141, %v177, 0.0
    %187 = vadd.xlane.f32.xlu0 %v186
    %v188 = vpop.xlane.xlu0 %187
    %v189 = vsel %vm141, %v178, 0.0
    %190 = vadd.xlane.f32.xlu0 %v189
    %v191 = vpop.xlane.xlu0 %190
    %v192 = vsel %vm154, %v179, 0.0
    %193 = vadd.xlane.f32.xlu0 %v192
    %v194 = vpop.xlane.xlu0 %193
    %v195 = vmul.f32 %v182, %v164
    %v196 = vmul.f32 %v185, %v164
    %v197 = vmul.f32 %v188, %v164
    %v198 = vmul.f32 %v191, %v164
    %v199 = vmul.f32 %v194, %v164
    %v200 = vadd.f32 %v195, 1e-05
    %v201 = vadd.f32 %v196, 1e-05
    %v202 = vadd.f32 %v197, 1e-05
    %v203 = vadd.f32 %v198, 1e-05
    %v204 = vadd.f32 %v199, 1e-05
    %v205 = vrsqrt.pop %v200
    %v206 = vmul.f32 %v205, %v200
    %v207 = vmul.f32 %v206, %v205
    %v208 = vmul.f32 0.5, %v207
    %v209 = vsub.f32 1.5, %v208
    %v210 = vmul.f32 %v205, %v209
    %vm211 = vweird.f32 %v200
    %vm212 = vweird.f32 %v205
    %vm213 = vmor %vm211, %vm212
    %v214 = vsel %vm213, %v205, %v210
    %v215 = vrsqrt.pop %v201
    %v216 = vmul.f32 %v215, %v201
    %v217 = vmul.f32 %v216, %v215
    %v218 = vmul.f32 0.5, %v217
    %v219 = vsub.f32 1.5, %v218
    %v220 = vmul.f32 %v215, %v219
    %vm221 = vweird.f32 %v201
    %vm222 = vweird.f32 %v215
    %vm223 = vmor %vm221, %vm222
    %v224 = vsel %vm223, %v215, %v220
    %v225 = vrsqrt.pop %v202
    %v226 = vmul.f32 %v225, %v202
    %v227 = vmul.f32 %v226, %v225
    %v228 = vmul.f32 0.5, %v227
    %v229 = vsub.f32 1.5, %v228
    %v230 = vmul.f32 %v225, %v229
    %vm231 = vweird.f32 %v202
    %vm232 = vweird.f32 %v225
    %vm233 = vmor %vm231, %vm232
    %v234 = vsel %vm233, %v225, %v230
    %v235 = vrsqrt.pop %v203
    %v236 = vmul.f32 %v235, %v203
    %v237 = vmul.f32 %v236, %v235
    %v238 = vmul.f32 0.5, %v237
    %v239 = vsub.f32 1.5, %v238
    %v240 = vmul.f32 %v235, %v239
    %vm241 = vweird.f32 %v203
    %vm242 = vweird.f32 %v235
    %vm243 = vmor %vm241, %vm242
    %v244 = vsel %vm243, %v235, %v240
    %v245 = vrsqrt.pop %v204
    %v246 = vmul.f32 %v245, %v204
    %v247 = vmul.f32 %v246, %v245
    %v248 = vmul.f32 0.5, %v247
    %v249 = vsub.f32 1.5, %v248
    %v250 = vmul.f32 %v245, %v249
    %vm251 = vweird.f32 %v204
    %vm252 = vweird.f32 %v245
    %vm253 = vmor %vm251, %vm252
    %v254 = vsel %vm253, %v245, %v250
    %v255 = vmul.f32 %v170, %v214
    %v256 = vmul.f32 %v171, %v224
    %v257 = vmul.f32 %v172, %v234
    %v258 = vmul.f32 %v173, %v244
    %v259 = vmul.f32 %v174, %v254
    %v261 = vperm.slane %v139, 0
    %v263 = vmul.f32 %v255, %v261
    %v264 = vmul.f32 %v256, %v261
    %v265 = vmul.f32 %v257, %v261
    %v266 = vmul.f32 %v258, %v261
    %v267 = vmul.f32 %v259, %v261
    %v269 = vperm.slane %v140, 0
    %v271 = vadd.f32 %v263, %v269
    %v272 = vadd.f32 %v264, %v269
    %v273 = vadd.f32 %v265, %v269
    %v274 = vadd.f32 %v266, %v269
    %v275 = vadd.f32 %v267, %v269
    %v276 = vpack.c.bf16 %v272, %v271
    %v277 = vpack.c.bf16 %v274, %v273
    %v278 = vpack.c.bf16 %v275, %v275
    %v279 = vld [vmem:[%s8] sm:$0xff]
    %v280 = vld [vmem:[%s8 + $0x8] sm:$0xff]
    %v281 = vld [vmem:[%s8 + $0x10] sm:$0xff]
    %v282 = vld [vmem:[%s8 + $0x18] sm:$0xff]
    %v283 = vld [vmem:[%s8 + $0x20] sm:$0xff]
    %v284 = vld [vmem:[%s8 + $0x28] sm:$0xff]
    %v285 = vld [vmem:[%s8 + $0x30] sm:$0xff]
    %v286 = vld [vmem:[%s8 + $0x38] sm:$0xff]
    %v287 = vld [vmem:[%s9] sm:$0x3]
    %v289 = vperm.slane %v287, 0
    %v290 = vperm.slane %v287, 1
    %v301 = vunpack.c.l.b16 %v279
    %v302 = vunpack.c.h.b16 %v279
    %v303 = vunpack.c.l.b16 %v280
    %v304 = vunpack.c.h.b16 %v280
    %v305 = vunpack.c.l.b16 %v281
    %v306 = vunpack.c.h.b16 %v281
    %v307 = vunpack.c.l.b16 %v282
    %v308 = vunpack.c.h.b16 %v282
    %v309 = vunpack.c.l.b16 %v283
    %v310 = vunpack.c.h.b16 %v283
    %v311 = vunpack.c.l.b16 %v284
    %v312 = vunpack.c.h.b16 %v284
    %v313 = vunpack.c.l.b16 %v285
    %v314 = vunpack.c.h.b16 %v285
    %v315 = vunpack.c.l.b16 %v286
    %v316 = vunpack.c.h.b16 %v286
    %v317 = vpack.c.b16 %v303, %v301
    %v318 = vpack.c.b16 %v304, %v302
    %v319 = vpack.c.b16 %v307, %v305
    %v320 = vpack.c.b16 %v308, %v306
    %v321 = vpack.c.b16 %v311, %v309
    %v322 = vpack.c.b16 %v312, %v310
    %v323 = vpack.c.b16 %v315, %v313
    %v324 = vpack.c.b16 %v316, %v314
    %v334 = vsel %vm141, %v276, 0
    %v337 = vsel %vm141, %v277, 0
    %v340 = vsel %vm141, %v278, 0
    %342 = vmatpush.bf16.msra.mxu0 0
    %343 = vmatpush.bf16.msra.mxu0 0
    %344 = vmatpush.bf16.msra.mxu0 0
    %345 = vmatpush.bf16.msra.mxu0 0
    %346 = vmatpush.bf16.msra.mxu0 %v323
    %347 = vmatpush.bf16.msra.mxu0 %v321
    %348 = vmatpush.bf16.msra.mxu0 %v319
    %349 = vmatpush.bf16.msra.mxu0 %v317
    %350 = vmatmul.bf16.gmra.mxu0 %v334
    %v351 = vpop.f32.mrf.mxu0
    %v352 = vadd.f32 %v289, %v351
    %v353 = vpop.f32.mrf.mxu0
    %v354 = vadd.f32 %v289, %v353
    %355 = vmatmul.bf16.gmra.mxu0 %v337
    %v356 = vpop.f32.mrf.mxu0
    %v357 = vadd.f32 %v289, %v356
    %v358 = vpop.f32.mrf.mxu0
    %v359 = vadd.f32 %v289, %v358
    %360 = vmatmul.bf16.gmra.mxu0 %v340
    %v361 = vpop.f32.mrf.mxu0
    %v362 = vadd.f32 %v289, %v361
    %v363 = vpop.f32.mrf.mxu0
    %364 = vdwg.mxu0
    %365 = vmatpush.bf16.msra.mxu0 0
    %366 = vmatpush.bf16.msra.mxu0 0
    %367 = vmatpush.bf16.msra.mxu0 0
    %368 = vmatpush.bf16.msra.mxu0 0
    %369 = vmatpush.bf16.msra.mxu0 %v324
    %370 = vmatpush.bf16.msra.mxu0 %v322
    %371 = vmatpush.bf16.msra.mxu0 %v320
    %372 = vmatpush.bf16.msra.mxu0 %v318
    %373 = vmatmul.bf16.gmra.mxu0 %v334
    %v374 = vpop.f32.mrf.mxu0
    %v375 = vadd.f32 %v290, %v374
    %v376 = vpop.f32.mrf.mxu0
    %v377 = vadd.f32 %v290, %v376
    %378 = vmatmul.bf16.gmra.mxu0 %v337
    %v379 = vpop.f32.mrf.mxu0
    %v380 = vadd.f32 %v290, %v379
    %v381 = vpop.f32.mrf.mxu0
    %v382 = vadd.f32 %v290, %v381
    %383 = vmatmul.bf16.gmra.mxu0 %v340
    %v384 = vpop.f32.mrf.mxu0
    %v385 = vadd.f32 %v290, %v384
    %v386 = vpop.f32.mrf.mxu0
    %387 = vdwg.mxu0
    %v388 = vpack.c.bf16 %v352, %v352
    %v389 = vpack.c.bf16 %v354, %v354
    %v390 = vpack.c.bf16 %v357, %v357
    %v391 = vpack.c.bf16 %v359, %v359
    %v392 = vpack.c.bf16 %v362, %v362
    %v393 = vpack.c.bf16 %v375, %v375
    %v394 = vpack.c.bf16 %v377, %v377
    %v395 = vpack.c.bf16 %v380, %v380
    %v396 = vpack.c.bf16 %v382, %v382
    %v397 = vpack.c.bf16 %v385, %v385
    %v398 = vld [vmem:[%s10] sm:$0xf]
    %v399 = vld [vmem:[%s10 + $0x4] sm:$0xf]
    %v400 = vld [vmem:[%s10 + $0x8] sm:$0xf]
    %v401 = vld [vmem:[%s10 + $0xc] sm:$0xf]
    %v402 = vld [vmem:[%s10 + $0x10] sm:$0xf]
    %v403 = vld [vmem:[%s10 + $0x14] sm:$0xf]
    %v404 = vld [vmem:[%s10 + $0x18] sm:$0xf]
    %v405 = vld [vmem:[%s10 + $0x1c] sm:$0xf]
    %v406 = vld [vmem:[%s5] sm:$0xff]
    %v407 = vld [vmem:[%s5 + $0x8] sm:$0xff]
    %v408 = vld [vmem:[%s5 + $0x10] sm:$0xff]
    %v409 = vld [vmem:[%s5 + $0x18] sm:$0xff]
    %v410 = vld [vmem:[%s5 + $0x20] sm:$0x3]
    %v416 = vunpack.c.l.b16 %v388
    %v417 = vunpack.c.l.b16 %v389
    %v418 = vunpack.c.l.b16 %v390
    %v419 = vunpack.c.l.b16 %v391
    %v420 = vunpack.c.l.b16 %v392
    %v421 = vpack.c.b16 %v417, %v416
    %v422 = vpack.c.b16 %v419, %v418
    %v423 = vpack.c.b16 %v420, %v420
    %424 = vrot.lane.b32.xlu0 %v421, 64
    %v425 = vpop.permute.xlu0 %424
    %426 = vrot.lane.b32.xlu0 %v422, 64
    %v427 = vpop.permute.xlu0 %426
    %428 = vrot.lane.b32.xlu0 %v423, 64
    %v429 = vpop.permute.xlu0 %428
    %vm430 = vcmask 64512
    %v432 = vsel %vm430, %v421, 0
    %v435 = vsel %vm430, %v422, 0
    %v438 = vsel %vm430, %v423, 0
    %v441 = vsel %vm430, %v425, 0
    %v444 = vsel %vm430, %v427, 0
    %v447 = vsel %vm430, %v429, 0
    %449 = vmatpush.bf16.xpose.msra.mxu0 0
    %450 = vmatpush.bf16.xpose.msra.mxu0 0
    %451 = vmatpush.bf16.xpose.msra.mxu0 0
    %452 = vmatpush.bf16.xpose.msra.mxu0 0
    %453 = vmatpush.bf16.xpose.msra.mxu0 0
    %454 = vmatpush.bf16.xpose.msra.mxu0 %v447
    %455 = vmatpush.bf16.xpose.msra.mxu0 %v444
    %456 = vmatpush.bf16.xpose.msra.mxu0 %v441
    %457 = vmatmul.bf16.gmra.mxu0 %v432
    %v458 = vpop.f32.mrf.mxu0
    %v459 = vadd.f32 %v406, %v458
    %v460 = vpop.f32.mrf.mxu0
    %v461 = vadd.f32 %v407, %v460
    %462 = vmatmul.bf16.gmra.mxu0 %v435
    %v463 = vpop.f32.mrf.mxu0
    %v464 = vadd.f32 %v408, %v463
    %v465 = vpop.f32.mrf.mxu0
    %v466 = vadd.f32 %v409, %v465
    %467 = vmatmul.bf16.gmra.mxu0 %v438
    %v468 = vpop.f32.mrf.mxu0
    %v469 = vadd.f32 %v410, %v468
    %v470 = vpop.f32.mrf.mxu0
    %471 = vdwg.mxu0
    %vm472 = vcmask 277504
    %v473 = vsel %vm472, %v459, -inf
    %474 = vmax.xlane.f32.xlu0 %v473
    %v475 = vpop.xlane.xlu0 %474
    %v476 = vsel %vm472, %v461, -inf
    %477 = vmax.xlane.f32.xlu0 %v476
    %v478 = vpop.xlane.xlu0 %477
    %v479 = vsel %vm472, %v464, -inf
    %480 = vmax.xlane.f32.xlu0 %v479
    %v481 = vpop.xlane.xlu0 %480
    %v482 = vsel %vm472, %v466, -inf
    %483 = vmax.xlane.f32.xlu0 %v482
    %v484 = vpop.xlane.xlu0 %483
    %vm485 = vcmask 271360
    %v486 = vsel %vm485, %v469, -inf
    %487 = vmax.xlane.f32.xlu0 %v486
    %v488 = vpop.xlane.xlu0 %487
    %v489 = vsub.f32 %v459, %v475
    %v490 = vsub.f32 %v461, %v478
    %v491 = vsub.f32 %v464, %v481
    %v492 = vsub.f32 %v466, %v484
    %v493 = vsub.f32 %v469, %v488
    %v494 = vmul.f32 %v489, 1.442695
    %v495 = vpow.pop %v494
    %v496 = vmul.f32 %v490, 1.442695
    %v497 = vpow.pop %v496
    %v498 = vmul.f32 %v491, 1.442695
    %v499 = vpow.pop %v498
    %v500 = vmul.f32 %v492, 1.442695
    %v501 = vpow.pop %v500
    %v502 = vmul.f32 %v493, 1.442695
    %v503 = vpow.pop %v502
    %v504 = vsel %vm472, %v495, 0.0
    %505 = vadd.xlane.f32.xlu0 %v504
    %v506 = vpop.xlane.xlu0 %505
    %v507 = vsel %vm472, %v497, 0.0
    %508 = vadd.xlane.f32.xlu0 %v507
    %v509 = vpop.xlane.xlu0 %508
    %v510 = vsel %vm472, %v499, 0.0
    %511 = vadd.xlane.f32.xlu0 %v510
    %v512 = vpop.xlane.xlu0 %511
    %v513 = vsel %vm472, %v501, 0.0
    %514 = vadd.xlane.f32.xlu0 %v513
    %v515 = vpop.xlane.xlu0 %514
    %v516 = vsel %vm485, %v503, 0.0
    %517 = vadd.xlane.f32.xlu0 %v516
    %v518 = vpop.xlane.xlu0 %517
    %v519 = vrcp.pop %v506
    %v520 = vrcp.pop %v509
    %v521 = vrcp.pop %v512
    %v522 = vrcp.pop %v515
    %v523 = vrcp.pop %v518
    %v524 = vmul.f32 %v495, %v519
    %v525 = vmul.f32 %v497, %v520
    %v526 = vmul.f32 %v499, %v521
    %v527 = vmul.f32 %v501, %v522
    %v528 = vmul.f32 %v503, %v523
    %v529 = vpack.c.bf16 %v525, %v524
    %v530 = vpack.c.bf16 %v527, %v526
    %v531 = vpack.c.bf16 %v528, %v528
    %v537 = vunpack.c.l.b16 %v393
    %v538 = vunpack.c.l.b16 %v394
    %v539 = vunpack.c.l.b16 %v395
    %v540 = vunpack.c.l.b16 %v396
    %v541 = vunpack.c.l.b16 %v397
    %v542 = vpack.c.b16 %v538, %v537
    %v543 = vpack.c.b16 %v540, %v539
    %v544 = vpack.c.b16 %v541, %v541
    %v548 = vsel %vm472, %v529, 0
    %v551 = vsel %vm472, %v530, 0
    %v554 = vsel %vm472, %v531, 0
    %v557 = vsel %vm117, %v544, 0
    %559 = vmatpush.bf16.msra.mxu0 0
    %560 = vmatpush.bf16.msra.mxu0 0
    %561 = vmatpush.bf16.msra.mxu0 0
    %562 = vmatpush.bf16.msra.mxu0 0
    %563 = vmatpush.bf16.msra.mxu0 0
    %564 = vmatpush.bf16.msra.mxu0 %v557
    %565 = vmatpush.bf16.msra.mxu0 %v543
    %566 = vmatpush.bf16.msra.mxu0 %v542
    %567 = vmatmul.bf16.gmra.mxu0 %v548
    %v568 = vpop.f32.mrf.mxu0
    %v569 = vadd.f32 0.0, %v568
    %v570 = vpop.f32.mrf.mxu0
    %v571 = vadd.f32 0.0, %v570
    %572 = vmatmul.bf16.gmra.mxu0 %v551
    %v573 = vpop.f32.mrf.mxu0
    %v574 = vadd.f32 0.0, %v573
    %v575 = vpop.f32.mrf.mxu0
    %v576 = vadd.f32 0.0, %v575
    %577 = vmatmul.bf16.gmra.mxu0 %v554
    %v578 = vpop.f32.mrf.mxu0
    %v579 = vadd.f32 0.0, %v578
    %v580 = vpop.f32.mrf.mxu0
    %581 = vdwg.mxu0
    %v582 = vpack.c.bf16 %v571, %v569
    %v583 = vpack.c.bf16 %v576, %v574
    %v584 = vpack.c.bf16 %v579, %v579
    %585 = vrot.lane.b32.xlu0 %v421, 120
    %v586 = vpop.permute.xlu0 %585
    %587 = vrot.lane.b32.xlu0 %v422, 120
    %v588 = vpop.permute.xlu0 %587
    %589 = vrot.lane.b32.xlu0 %v423, 120
    %v590 = vpop.permute.xlu0 %589
    %591 = vrot.lane.b32.xlu0 %v421, 56
    %v592 = vpop.permute.xlu0 %591
    %593 = vrot.lane.b32.xlu0 %v422, 56
    %v594 = vpop.permute.xlu0 %593
    %595 = vrot.lane.b32.xlu0 %v423, 56
    %v596 = vpop.permute.xlu0 %595
    %v598 = vsel %vm430, %v586, 0
    %v601 = vsel %vm430, %v588, 0
    %v604 = vsel %vm430, %v590, 0
    %v607 = vsel %vm430, %v592, 0
    %v610 = vsel %vm430, %v594, 0
    %v613 = vsel %vm430, %v596, 0
    %615 = vmatpush.bf16.xpose.msra.mxu0 0
    %616 = vmatpush.bf16.xpose.msra.mxu0 0
    %617 = vmatpush.bf16.xpose.msra.mxu0 0
    %618 = vmatpush.bf16.xpose.msra.mxu0 0
    %619 = vmatpush.bf16.xpose.msra.mxu0 0
    %620 = vmatpush.bf16.xpose.msra.mxu0 %v613
    %621 = vmatpush.bf16.xpose.msra.mxu0 %v610
    %622 = vmatpush.bf16.xpose.msra.mxu0 %v607
    %623 = vmatmul.bf16.gmra.mxu0 %v598
    %v624 = vpop.f32.mrf.mxu0
    %v625 = vadd.f32 %v406, %v624
    %v626 = vpop.f32.mrf.mxu0
    %v627 = vadd.f32 %v407, %v626
    %628 = vmatmul.bf16.gmra.mxu0 %v601
    %v629 = vpop.f32.mrf.mxu0
    %v630 = vadd.f32 %v408, %v629
    %v631 = vpop.f32.mrf.mxu0
    %v632 = vadd.f32 %v409, %v631
    %633 = vmatmul.bf16.gmra.mxu0 %v604
    %v634 = vpop.f32.mrf.mxu0
    %v635 = vadd.f32 %v410, %v634
    %v636 = vpop.f32.mrf.mxu0
    %637 = vdwg.mxu0
    %v638 = vsel %vm472, %v625, -inf
    %639 = vmax.xlane.f32.xlu0 %v638
    %v640 = vpop.xlane.xlu0 %639
    %v641 = vsel %vm472, %v627, -inf
    %642 = vmax.xlane.f32.xlu0 %v641
    %v643 = vpop.xlane.xlu0 %642
    %v644 = vsel %vm472, %v630, -inf
    %645 = vmax.xlane.f32.xlu0 %v644
    %v646 = vpop.xlane.xlu0 %645
    %v647 = vsel %vm472, %v632, -inf
    %648 = vmax.xlane.f32.xlu0 %v647
    %v649 = vpop.xlane.xlu0 %648
    %v650 = vsel %vm485, %v635, -inf
    %651 = vmax.xlane.f32.xlu0 %v650
    %v652 = vpop.xlane.xlu0 %651
    %v653 = vsub.f32 %v625, %v640
    %v654 = vsub.f32 %v627, %v643
    %v655 = vsub.f32 %v630, %v646
    %v656 = vsub.f32 %v632, %v649
    %v657 = vsub.f32 %v635, %v652
    %v658 = vmul.f32 %v653, 1.442695
    %v659 = vpow.pop %v658
    %v660 = vmul.f32 %v654, 1.442695
    %v661 = vpow.pop %v660
    %v662 = vmul.f32 %v655, 1.442695
    %v663 = vpow.pop %v662
    %v664 = vmul.f32 %v656, 1.442695
    %v665 = vpow.pop %v664
    %v666 = vmul.f32 %v657, 1.442695
    %v667 = vpow.pop %v666
    %v668 = vsel %vm472, %v659, 0.0
    %669 = vadd.xlane.f32.xlu0 %v668
    %v670 = vpop.xlane.xlu0 %669
    %v671 = vsel %vm472, %v661, 0.0
    %672 = vadd.xlane.f32.xlu0 %v671
    %v673 = vpop.xlane.xlu0 %672
    %v674 = vsel %vm472, %v663, 0.0
    %675 = vadd.xlane.f32.xlu0 %v674
    %v676 = vpop.xlane.xlu0 %675
    %v677 = vsel %vm472, %v665, 0.0
    %678 = vadd.xlane.f32.xlu0 %v677
    %v679 = vpop.xlane.xlu0 %678
    %v680 = vsel %vm485, %v667, 0.0
    %681 = vadd.xlane.f32.xlu0 %v680
    %v682 = vpop.xlane.xlu0 %681
    %v683 = vrcp.pop %v670
    %v684 = vrcp.pop %v673
    %v685 = vrcp.pop %v676
    %v686 = vrcp.pop %v679
    %v687 = vrcp.pop %v682
    %v688 = vmul.f32 %v659, %v683
    %v689 = vmul.f32 %v661, %v684
    %v690 = vmul.f32 %v663, %v685
    %v691 = vmul.f32 %v665, %v686
    %v692 = vmul.f32 %v667, %v687
    %v693 = vpack.c.bf16 %v689, %v688
    %v694 = vpack.c.bf16 %v691, %v690
    %v695 = vpack.c.bf16 %v692, %v692
    %696 = vrot.lane.b32.xlu0 %v542, 120
    %v697 = vpop.permute.xlu0 %696
    %698 = vrot.lane.b32.xlu0 %v543, 120
    %v699 = vpop.permute.xlu0 %698
    %700 = vrot.lane.b32.xlu0 %v544, 120
    %v701 = vpop.permute.xlu0 %700
    %v705 = vsel %vm472, %v693, 0
    %v708 = vsel %vm472, %v694, 0
    %v711 = vsel %vm472, %v695, 0
    %v714 = vsel %vm117, %v701, 0
    %716 = vmatpush.bf16.msra.mxu0 0
    %717 = vmatpush.bf16.msra.mxu0 0
    %718 = vmatpush.bf16.msra.mxu0 0
    %719 = vmatpush.bf16.msra.mxu0 0
    %720 = vmatpush.bf16.msra.mxu0 0
    %721 = vmatpush.bf16.msra.mxu0 %v714
    %722 = vmatpush.bf16.msra.mxu0 %v699
    %723 = vmatpush.bf16.msra.mxu0 %v697
    %724 = vmatmul.bf16.gmra.mxu0 %v705
    %v725 = vpop.f32.mrf.mxu0
    %v726 = vadd.f32 0.0, %v725
    %v727 = vpop.f32.mrf.mxu0
    %v728 = vadd.f32 0.0, %v727
    %729 = vmatmul.bf16.gmra.mxu0 %v708
    %v730 = vpop.f32.mrf.mxu0
    %v731 = vadd.f32 0.0, %v730
    %v732 = vpop.f32.mrf.mxu0
    %v733 = vadd.f32 0.0, %v732
    %734 = vmatmul.bf16.gmra.mxu0 %v711
    %v735 = vpop.f32.mrf.mxu0
    %v736 = vadd.f32 0.0, %v735
    %v737 = vpop.f32.mrf.mxu0
    %738 = vdwg.mxu0
    %v739 = vpack.c.bf16 %v728, %v726
    %v740 = vpack.c.bf16 %v733, %v731
    %v741 = vpack.c.bf16 %v736, %v736
    %v743 = vsel %vm430, %v739, 0
    %v746 = vsel %vm430, %v740, 0
    %v749 = vsel %vm430, %v741, 0
    %vm751 = vcmask 1043456
    %v753 = vsel %vm751, %v399, 0
    %755 = vmatpush.bf16.msra.mxu0 0
    %756 = vmatpush.bf16.msra.mxu0 0
    %757 = vmatpush.bf16.msra.mxu0 0
    %758 = vmatpush.bf16.msra.mxu0 0
    %759 = vmatpush.bf16.msra.mxu0 0
    %760 = vmatpush.bf16.msra.mxu0 0
    %761 = vmatpush.bf16.msra.mxu0 0
    %762 = vmatpush.bf16.msra.mxu0 %v753
    %763 = vmatmul.bf16.gmra.mxu0 %v743
    %v764 = vpop.f32.mrf.mxu0
    %v765 = vadd.f32 0.0, %v764
    %v766 = vpop.f32.mrf.mxu0
    %v767 = vadd.f32 0.0, %v766
    %768 = vmatmul.bf16.gmra.mxu0 %v746
    %v769 = vpop.f32.mrf.mxu0
    %v770 = vadd.f32 0.0, %v769
    %v771 = vpop.f32.mrf.mxu0
    %v772 = vadd.f32 0.0, %v771
    %773 = vmatmul.bf16.gmra.mxu0 %v749
    %v774 = vpop.f32.mrf.mxu0
    %v775 = vadd.f32 0.0, %v774
    %v776 = vpop.f32.mrf.mxu0
    %777 = vdwg.mxu0
    %v779 = vsel %vm430, %v582, 0
    %v782 = vsel %vm430, %v583, 0
    %v785 = vsel %vm430, %v584, 0
    %v788 = vsel %vm751, %v398, 0
    %790 = vmatpush.bf16.msra.mxu0 0
    %791 = vmatpush.bf16.msra.mxu0 0
    %792 = vmatpush.bf16.msra.mxu0 0
    %793 = vmatpush.bf16.msra.mxu0 0
    %794 = vmatpush.bf16.msra.mxu0 0
    %795 = vmatpush.bf16.msra.mxu0 0
    %796 = vmatpush.bf16.msra.mxu0 0
    %797 = vmatpush.bf16.msra.mxu0 %v788
    %798 = vmatmul.bf16.gmra.mxu0 %v779
    %v799 = vpop.f32.mrf.mxu0
    %v800 = vadd.f32 %v765, %v799
    %v801 = vpop.f32.mrf.mxu0
    %v802 = vadd.f32 %v767, %v801
    %803 = vmatmul.bf16.gmra.mxu0 %v782
    %v804 = vpop.f32.mrf.mxu0
    %v805 = vadd.f32 %v770, %v804
    %v806 = vpop.f32.mrf.mxu0
    %v807 = vadd.f32 %v772, %v806
    %808 = vmatmul.bf16.gmra.mxu0 %v785
    %v809 = vpop.f32.mrf.mxu0
    %v810 = vadd.f32 %v775, %v809
    %v811 = vpop.f32.mrf.mxu0
    %812 = vdwg.mxu0
    %813 = vrot.lane.b32.xlu0 %v421, 112
    %v814 = vpop.permute.xlu0 %813
    %815 = vrot.lane.b32.xlu0 %v422, 112
    %v816 = vpop.permute.xlu0 %815
    %817 = vrot.lane.b32.xlu0 %v423, 112
    %v818 = vpop.permute.xlu0 %817
    %819 = vrot.lane.b32.xlu0 %v421, 48
    %v820 = vpop.permute.xlu0 %819
    %821 = vrot.lane.b32.xlu0 %v422, 48
    %v822 = vpop.permute.xlu0 %821
    %823 = vrot.lane.b32.xlu0 %v423, 48
    %v824 = vpop.permute.xlu0 %823
    %v826 = vsel %vm430, %v814, 0
    %v829 = vsel %vm430, %v816, 0
    %v832 = vsel %vm430, %v818, 0
    %v835 = vsel %vm430, %v820, 0
    %v838 = vsel %vm430, %v822, 0
    %v841 = vsel %vm430, %v824, 0
    %843 = vmatpush.bf16.xpose.msra.mxu0 0
    %844 = vmatpush.bf16.xpose.msra.mxu0 0
    %845 = vmatpush.bf16.xpose.msra.mxu0 0
    %846 = vmatpush.bf16.xpose.msra.mxu0 0
    %847 = vmatpush.bf16.xpose.msra.mxu0 0
    %848 = vmatpush.bf16.xpose.msra.mxu0 %v841
    %849 = vmatpush.bf16.xpose.msra.mxu0 %v838
    %850 = vmatpush.bf16.xpose.msra.mxu0 %v835
    %851 = vmatmul.bf16.gmra.mxu0 %v826
    %v852 = vpop.f32.mrf.mxu0
    %v853 = vadd.f32 %v406, %v852
    %v854 = vpop.f32.mrf.mxu0
    %v855 = vadd.f32 %v407, %v854
    %856 = vmatmul.bf16.gmra.mxu0 %v829
    %v857 = vpop.f32.mrf.mxu0
    %v858 = vadd.f32 %v408, %v857
    %v859 = vpop.f32.mrf.mxu0
    %v860 = vadd.f32 %v409, %v859
    %861 = vmatmul.bf16.gmra.mxu0 %v832
    %v862 = vpop.f32.mrf.mxu0
    %v863 = vadd.f32 %v410, %v862
    %v864 = vpop.f32.mrf.mxu0
    %865 = vdwg.mxu0
    %v866 = vsel %vm472, %v853, -inf
    %867 = vmax.xlane.f32.xlu0 %v866
    %v868 = vpop.xlane.xlu0 %867
    %v869 = vsel %vm472, %v855, -inf
    %870 = vmax.xlane.f32.xlu0 %v869
    %v871 = vpop.xlane.xlu0 %870
    %v872 = vsel %vm472, %v858, -inf
    %873 = vmax.xlane.f32.xlu0 %v872
    %v874 = vpop.xlane.xlu0 %873
    %v875 = vsel %vm472, %v860, -inf
    %876 = vmax.xlane.f32.xlu0 %v875
    %v877 = vpop.xlane.xlu0 %876
    %v878 = vsel %vm485, %v863, -inf
    %879 = vmax.xlane.f32.xlu0 %v878
    %v880 = vpop.xlane.xlu0 %879
    %v881 = vsub.f32 %v853, %v868
    %v882 = vsub.f32 %v855, %v871
    %v883 = vsub.f32 %v858, %v874
    %v884 = vsub.f32 %v860, %v877
    %v885 = vsub.f32 %v863, %v880
    %v886 = vmul.f32 %v881, 1.442695
    %v887 = vpow.pop %v886
    %v888 = vmul.f32 %v882, 1.442695
    %v889 = vpow.pop %v888
    %v890 = vmul.f32 %v883, 1.442695
    %v891 = vpow.pop %v890
    %v892 = vmul.f32 %v884, 1.442695
    %v893 = vpow.pop %v892
    %v894 = vmul.f32 %v885, 1.442695
    %v895 = vpow.pop %v894
    %v896 = vsel %vm472, %v887, 0.0
    %897 = vadd.xlane.f32.xlu0 %v896
    %v898 = vpop.xlane.xlu0 %897
    %v899 = vsel %vm472, %v889, 0.0
    %900 = vadd.xlane.f32.xlu0 %v899
    %v901 = vpop.xlane.xlu0 %900
    %v902 = vsel %vm472, %v891, 0.0
    %903 = vadd.xlane.f32.xlu0 %v902
    %v904 = vpop.xlane.xlu0 %903
    %v905 = vsel %vm472, %v893, 0.0
    %906 = vadd.xlane.f32.xlu0 %v905
    %v907 = vpop.xlane.xlu0 %906
    %v908 = vsel %vm485, %v895, 0.0
    %909 = vadd.xlane.f32.xlu0 %v908
    %v910 = vpop.xlane.xlu0 %909
    %v911 = vrcp.pop %v898
    %v912 = vrcp.pop %v901
    %v913 = vrcp.pop %v904
    %v914 = vrcp.pop %v907
    %v915 = vrcp.pop %v910
    %v916 = vmul.f32 %v887, %v911
    %v917 = vmul.f32 %v889, %v912
    %v918 = vmul.f32 %v891, %v913
    %v919 = vmul.f32 %v893, %v914
    %v920 = vmul.f32 %v895, %v915
    %v921 = vpack.c.bf16 %v917, %v916
    %v922 = vpack.c.bf16 %v919, %v918
    %v923 = vpack.c.bf16 %v920, %v920
    %924 = vrot.lane.b32.xlu0 %v542, 112
    %v925 = vpop.permute.xlu0 %924
    %926 = vrot.lane.b32.xlu0 %v543, 112
    %v927 = vpop.permute.xlu0 %926
    %928 = vrot.lane.b32.xlu0 %v544, 112
    %v929 = vpop.permute.xlu0 %928
    %v933 = vsel %vm472, %v921, 0
    %v936 = vsel %vm472, %v922, 0
    %v939 = vsel %vm472, %v923, 0
    %v942 = vsel %vm117, %v929, 0
    %944 = vmatpush.bf16.msra.mxu0 0
    %945 = vmatpush.bf16.msra.mxu0 0
    %946 = vmatpush.bf16.msra.mxu0 0
    %947 = vmatpush.bf16.msra.mxu0 0
    %948 = vmatpush.bf16.msra.mxu0 0
    %949 = vmatpush.bf16.msra.mxu0 %v942
    %950 = vmatpush.bf16.msra.mxu0 %v927
    %951 = vmatpush.bf16.msra.mxu0 %v925
    %952 = vmatmul.bf16.gmra.mxu0 %v933
    %v953 = vpop.f32.mrf.mxu0
    %v954 = vadd.f32 0.0, %v953
    %v955 = vpop.f32.mrf.mxu0
    %v956 = vadd.f32 0.0, %v955
    %957 = vmatmul.bf16.gmra.mxu0 %v936
    %v958 = vpop.f32.mrf.mxu0
    %v959 = vadd.f32 0.0, %v958
    %v960 = vpop.f32.mrf.mxu0
    %v961 = vadd.f32 0.0, %v960
    %962 = vmatmul.bf16.gmra.mxu0 %v939
    %v963 = vpop.f32.mrf.mxu0
    %v964 = vadd.f32 0.0, %v963
    %v965 = vpop.f32.mrf.mxu0
    %966 = vdwg.mxu0
    %v967 = vpack.c.bf16 %v956, %v954
    %v968 = vpack.c.bf16 %v961, %v959
    %v969 = vpack.c.bf16 %v964, %v964
    %v971 = vsel %vm430, %v967, 0
    %v974 = vsel %vm430, %v968, 0
    %v977 = vsel %vm430, %v969, 0
    %v980 = vsel %vm751, %v400, 0
    %982 = vmatpush.bf16.msra.mxu0 0
    %983 = vmatpush.bf16.msra.mxu0 0
    %984 = vmatpush.bf16.msra.mxu0 0
    %985 = vmatpush.bf16.msra.mxu0 0
    %986 = vmatpush.bf16.msra.mxu0 0
    %987 = vmatpush.bf16.msra.mxu0 0
    %988 = vmatpush.bf16.msra.mxu0 0
    %989 = vmatpush.bf16.msra.mxu0 %v980
    %990 = vmatmul.bf16.gmra.mxu0 %v971
    %v991 = vpop.f32.mrf.mxu0
    %v992 = vadd.f32 0.0, %v991
    %v993 = vpop.f32.mrf.mxu0
    %v994 = vadd.f32 0.0, %v993
    %995 = vmatmul.bf16.gmra.mxu0 %v974
    %v996 = vpop.f32.mrf.mxu0
    %v997 = vadd.f32 0.0, %v996
    %v998 = vpop.f32.mrf.mxu0
    %v999 = vadd.f32 0.0, %v998
    %1000 = vmatmul.bf16.gmra.mxu0 %v977
    %v1001 = vpop.f32.mrf.mxu0
    %v1002 = vadd.f32 0.0, %v1001
    %v1003 = vpop.f32.mrf.mxu0
    %1004 = vdwg.mxu0
    %v1005 = vadd.f32 %v800, %v992
    %v1006 = vadd.f32 %v802, %v994
    %v1007 = vadd.f32 %v805, %v997
    %v1008 = vadd.f32 %v807, %v999
    %v1009 = vadd.f32 %v810, %v1002
    %1010 = vrot.lane.b32.xlu0 %v421, 104
    %v1011 = vpop.permute.xlu0 %1010
    %1012 = vrot.lane.b32.xlu0 %v422, 104
    %v1013 = vpop.permute.xlu0 %1012
    %1014 = vrot.lane.b32.xlu0 %v423, 104
    %v1015 = vpop.permute.xlu0 %1014
    %1016 = vrot.lane.b32.xlu0 %v421, 40
    %v1017 = vpop.permute.xlu0 %1016
    %1018 = vrot.lane.b32.xlu0 %v422, 40
    %v1019 = vpop.permute.xlu0 %1018
    %1020 = vrot.lane.b32.xlu0 %v423, 40
    %v1021 = vpop.permute.xlu0 %1020
    %v1023 = vsel %vm430, %v1011, 0
    %v1026 = vsel %vm430, %v1013, 0
    %v1029 = vsel %vm430, %v1015, 0
    %v1032 = vsel %vm430, %v1017, 0
    %v1035 = vsel %vm430, %v1019, 0
    %v1038 = vsel %vm430, %v1021, 0
    %1040 = vmatpush.bf16.xpose.msra.mxu0 0
    %1041 = vmatpush.bf16.xpose.msra.mxu0 0
    %1042 = vmatpush.bf16.xpose.msra.mxu0 0
    %1043 = vmatpush.bf16.xpose.msra.mxu0 0
    %1044 = vmatpush.bf16.xpose.msra.mxu0 0
    %1045 = vmatpush.bf16.xpose.msra.mxu0 %v1038
    %1046 = vmatpush.bf16.xpose.msra.mxu0 %v1035
    %1047 = vmatpush.bf16.xpose.msra.mxu0 %v1032
    %1048 = vmatmul.bf16.gmra.mxu0 %v1023
    %v1049 = vpop.f32.mrf.mxu0
    %v1050 = vadd.f32 %v406, %v1049
    %v1051 = vpop.f32.mrf.mxu0
    %v1052 = vadd.f32 %v407, %v1051
    %1053 = vmatmul.bf16.gmra.mxu0 %v1026
    %v1054 = vpop.f32.mrf.mxu0
    %v1055 = vadd.f32 %v408, %v1054
    %v1056 = vpop.f32.mrf.mxu0
    %v1057 = vadd.f32 %v409, %v1056
    %1058 = vmatmul.bf16.gmra.mxu0 %v1029
    %v1059 = vpop.f32.mrf.mxu0
    %v1060 = vadd.f32 %v410, %v1059
    %v1061 = vpop.f32.mrf.mxu0
    %1062 = vdwg.mxu0
    %v1063 = vsel %vm472, %v1050, -inf
    %1064 = vmax.xlane.f32.xlu0 %v1063
    %v1065 = vpop.xlane.xlu0 %1064
    %v1066 = vsel %vm472, %v1052, -inf
    %1067 = vmax.xlane.f32.xlu0 %v1066
    %v1068 = vpop.xlane.xlu0 %1067
    %v1069 = vsel %vm472, %v1055, -inf
    %1070 = vmax.xlane.f32.xlu0 %v1069
    %v1071 = vpop.xlane.xlu0 %1070
    %v1072 = vsel %vm472, %v1057, -inf
    %1073 = vmax.xlane.f32.xlu0 %v1072
    %v1074 = vpop.xlane.xlu0 %1073
    %v1075 = vsel %vm485, %v1060, -inf
    %1076 = vmax.xlane.f32.xlu0 %v1075
    %v1077 = vpop.xlane.xlu0 %1076
    %v1078 = vsub.f32 %v1050, %v1065
    %v1079 = vsub.f32 %v1052, %v1068
    %v1080 = vsub.f32 %v1055, %v1071
    %v1081 = vsub.f32 %v1057, %v1074
    %v1082 = vsub.f32 %v1060, %v1077
    %v1083 = vmul.f32 %v1078, 1.442695
    %v1084 = vpow.pop %v1083
    %v1085 = vmul.f32 %v1079, 1.442695
    %v1086 = vpow.pop %v1085
    %v1087 = vmul.f32 %v1080, 1.442695
    %v1088 = vpow.pop %v1087
    %v1089 = vmul.f32 %v1081, 1.442695
    %v1090 = vpow.pop %v1089
    %v1091 = vmul.f32 %v1082, 1.442695
    %v1092 = vpow.pop %v1091
    %v1093 = vsel %vm472, %v1084, 0.0
    %1094 = vadd.xlane.f32.xlu0 %v1093
    %v1095 = vpop.xlane.xlu0 %1094
    %v1096 = vsel %vm472, %v1086, 0.0
    %1097 = vadd.xlane.f32.xlu0 %v1096
    %v1098 = vpop.xlane.xlu0 %1097
    %v1099 = vsel %vm472, %v1088, 0.0
    %1100 = vadd.xlane.f32.xlu0 %v1099
    %v1101 = vpop.xlane.xlu0 %1100
    %v1102 = vsel %vm472, %v1090, 0.0
    %1103 = vadd.xlane.f32.xlu0 %v1102
    %v1104 = vpop.xlane.xlu0 %1103
    %v1105 = vsel %vm485, %v1092, 0.0
    %1106 = vadd.xlane.f32.xlu0 %v1105
    %v1107 = vpop.xlane.xlu0 %1106
    %v1108 = vrcp.pop %v1095
    %v1109 = vrcp.pop %v1098
    %v1110 = vrcp.pop %v1101
    %v1111 = vrcp.pop %v1104
    %v1112 = vrcp.pop %v1107
    %v1113 = vmul.f32 %v1084, %v1108
    %v1114 = vmul.f32 %v1086, %v1109
    %v1115 = vmul.f32 %v1088, %v1110
    %v1116 = vmul.f32 %v1090, %v1111
    %v1117 = vmul.f32 %v1092, %v1112
    %v1118 = vpack.c.bf16 %v1114, %v1113
    %v1119 = vpack.c.bf16 %v1116, %v1115
    %v1120 = vpack.c.bf16 %v1117, %v1117
    %1121 = vrot.lane.b32.xlu0 %v542, 104
    %v1122 = vpop.permute.xlu0 %1121
    %1123 = vrot.lane.b32.xlu0 %v543, 104
    %v1124 = vpop.permute.xlu0 %1123
    %1125 = vrot.lane.b32.xlu0 %v544, 104
    %v1126 = vpop.permute.xlu0 %1125
    %v1130 = vsel %vm472, %v1118, 0
    %v1133 = vsel %vm472, %v1119, 0
    %v1136 = vsel %vm472, %v1120, 0
    %v1139 = vsel %vm117, %v1126, 0
    %1141 = vmatpush.bf16.msra.mxu0 0
    %1142 = vmatpush.bf16.msra.mxu0 0
    %1143 = vmatpush.bf16.msra.mxu0 0
    %1144 = vmatpush.bf16.msra.mxu0 0
    %1145 = vmatpush.bf16.msra.mxu0 0
    %1146 = vmatpush.bf16.msra.mxu0 %v1139
    %1147 = vmatpush.bf16.msra.mxu0 %v1124
    %1148 = vmatpush.bf16.msra.mxu0 %v1122
    %1149 = vmatmul.bf16.gmra.mxu0 %v1130
    %v1150 = vpop.f32.mrf.mxu0
    %v1151 = vadd.f32 0.0, %v1150
    %v1152 = vpop.f32.mrf.mxu0
    %v1153 = vadd.f32 0.0, %v1152
    %1154 = vmatmul.bf16.gmra.mxu0 %v1133
    %v1155 = vpop.f32.mrf.mxu0
    %v1156 = vadd.f32 0.0, %v1155
    %v1157 = vpop.f32.mrf.mxu0
    %v1158 = vadd.f32 0.0, %v1157
    %1159 = vmatmul.bf16.gmra.mxu0 %v1136
    %v1160 = vpop.f32.mrf.mxu0
    %v1161 = vadd.f32 0.0, %v1160
    %v1162 = vpop.f32.mrf.mxu0
    %1163 = vdwg.mxu0
    %v1164 = vpack.c.bf16 %v1153, %v1151
    %v1165 = vpack.c.bf16 %v1158, %v1156
    %v1166 = vpack.c.bf16 %v1161, %v1161
    %v1168 = vsel %vm430, %v1164, 0
    %v1171 = vsel %vm430, %v1165, 0
    %v1174 = vsel %vm430, %v1166, 0
    %v1177 = vsel %vm751, %v401, 0
    %1179 = vmatpush.bf16.msra.mxu0 0
    %1180 = vmatpush.bf16.msra.mxu0 0
    %1181 = vmatpush.bf16.msra.mxu0 0
    %1182 = vmatpush.bf16.msra.mxu0 0
    %1183 = vmatpush.bf16.msra.mxu0 0
    %1184 = vmatpush.bf16.msra.mxu0 0
    %1185 = vmatpush.bf16.msra.mxu0 0
    %1186 = vmatpush.bf16.msra.mxu0 %v1177
    %1187 = vmatmul.bf16.gmra.mxu0 %v1168
    %v1188 = vpop.f32.mrf.mxu0
    %v1189 = vadd.f32 0.0, %v1188
    %v1190 = vpop.f32.mrf.mxu0
    %v1191 = vadd.f32 0.0, %v1190
    %1192 = vmatmul.bf16.gmra.mxu0 %v1171
    %v1193 = vpop.f32.mrf.mxu0
    %v1194 = vadd.f32 0.0, %v1193
    %v1195 = vpop.f32.mrf.mxu0
    %v1196 = vadd.f32 0.0, %v1195
    %1197 = vmatmul.bf16.gmra.mxu0 %v1174
    %v1198 = vpop.f32.mrf.mxu0
    %v1199 = vadd.f32 0.0, %v1198
    %v1200 = vpop.f32.mrf.mxu0
    %1201 = vdwg.mxu0
    %v1202 = vadd.f32 %v1005, %v1189
    %v1203 = vadd.f32 %v1006, %v1191
    %v1204 = vadd.f32 %v1007, %v1194
    %v1205 = vadd.f32 %v1008, %v1196
    %v1206 = vadd.f32 %v1009, %v1199
    %1207 = vrot.lane.b32.xlu0 %v421, 96
    %v1208 = vpop.permute.xlu0 %1207
    %1209 = vrot.lane.b32.xlu0 %v422, 96
    %v1210 = vpop.permute.xlu0 %1209
    %1211 = vrot.lane.b32.xlu0 %v423, 96
    %v1212 = vpop.permute.xlu0 %1211
    %1213 = vrot.lane.b32.xlu0 %v421, 32
    %v1214 = vpop.permute.xlu0 %1213
    %1215 = vrot.lane.b32.xlu0 %v422, 32
    %v1216 = vpop.permute.xlu0 %1215
    %1217 = vrot.lane.b32.xlu0 %v423, 32
    %v1218 = vpop.permute.xlu0 %1217
    %v1220 = vsel %vm430, %v1208, 0
    %v1223 = vsel %vm430, %v1210, 0
    %v1226 = vsel %vm430, %v1212, 0
    %v1229 = vsel %vm430, %v1214, 0
    %v1232 = vsel %vm430, %v1216, 0
    %v1235 = vsel %vm430, %v1218, 0
    %1237 = vmatpush.bf16.xpose.msra.mxu0 0
    %1238 = vmatpush.bf16.xpose.msra.mxu0 0
    %1239 = vmatpush.bf16.xpose.msra.mxu0 0
    %1240 = vmatpush.bf16.xpose.msra.mxu0 0
    %1241 = vmatpush.bf16.xpose.msra.mxu0 0
    %1242 = vmatpush.bf16.xpose.msra.mxu0 %v1235
    %1243 = vmatpush.bf16.xpose.msra.mxu0 %v1232
    %1244 = vmatpush.bf16.xpose.msra.mxu0 %v1229
    %1245 = vmatmul.bf16.gmra.mxu0 %v1220
    %v1246 = vpop.f32.mrf.mxu0
    %v1247 = vadd.f32 %v406, %v1246
    %v1248 = vpop.f32.mrf.mxu0
    %v1249 = vadd.f32 %v407, %v1248
    %1250 = vmatmul.bf16.gmra.mxu0 %v1223
    %v1251 = vpop.f32.mrf.mxu0
    %v1252 = vadd.f32 %v408, %v1251
    %v1253 = vpop.f32.mrf.mxu0
    %v1254 = vadd.f32 %v409, %v1253
    %1255 = vmatmul.bf16.gmra.mxu0 %v1226
    %v1256 = vpop.f32.mrf.mxu0
    %v1257 = vadd.f32 %v410, %v1256
    %v1258 = vpop.f32.mrf.mxu0
    %1259 = vdwg.mxu0
    %v1260 = vsel %vm472, %v1247, -inf
    %1261 = vmax.xlane.f32.xlu0 %v1260
    %v1262 = vpop.xlane.xlu0 %1261
    %v1263 = vsel %vm472, %v1249, -inf
    %1264 = vmax.xlane.f32.xlu0 %v1263
    %v1265 = vpop.xlane.xlu0 %1264
    %v1266 = vsel %vm472, %v1252, -inf
    %1267 = vmax.xlane.f32.xlu0 %v1266
    %v1268 = vpop.xlane.xlu0 %1267
    %v1269 = vsel %vm472, %v1254, -inf
    %1270 = vmax.xlane.f32.xlu0 %v1269
    %v1271 = vpop.xlane.xlu0 %1270
    %v1272 = vsel %vm485, %v1257, -inf
    %1273 = vmax.xlane.f32.xlu0 %v1272
    %v1274 = vpop.xlane.xlu0 %1273
    %v1275 = vsub.f32 %v1247, %v1262
    %v1276 = vsub.f32 %v1249, %v1265
    %v1277 = vsub.f32 %v1252, %v1268
    %v1278 = vsub.f32 %v1254, %v1271
    %v1279 = vsub.f32 %v1257, %v1274
    %v1280 = vmul.f32 %v1275, 1.442695
    %v1281 = vpow.pop %v1280
    %v1282 = vmul.f32 %v1276, 1.442695
    %v1283 = vpow.pop %v1282
    %v1284 = vmul.f32 %v1277, 1.442695
    %v1285 = vpow.pop %v1284
    %v1286 = vmul.f32 %v1278, 1.442695
    %v1287 = vpow.pop %v1286
    %v1288 = vmul.f32 %v1279, 1.442695
    %v1289 = vpow.pop %v1288
    %v1290 = vsel %vm472, %v1281, 0.0
    %1291 = vadd.xlane.f32.xlu0 %v1290
    %v1292 = vpop.xlane.xlu0 %1291
    %v1293 = vsel %vm472, %v1283, 0.0
    %1294 = vadd.xlane.f32.xlu0 %v1293
    %v1295 = vpop.xlane.xlu0 %1294
    %v1296 = vsel %vm472, %v1285, 0.0
    %1297 = vadd.xlane.f32.xlu0 %v1296
    %v1298 = vpop.xlane.xlu0 %1297
    %v1299 = vsel %vm472, %v1287, 0.0
    %1300 = vadd.xlane.f32.xlu0 %v1299
    %v1301 = vpop.xlane.xlu0 %1300
    %v1302 = vsel %vm485, %v1289, 0.0
    %1303 = vadd.xlane.f32.xlu0 %v1302
    %v1304 = vpop.xlane.xlu0 %1303
    %v1305 = vrcp.pop %v1292
    %v1306 = vrcp.pop %v1295
    %v1307 = vrcp.pop %v1298
    %v1308 = vrcp.pop %v1301
    %v1309 = vrcp.pop %v1304
    %v1310 = vmul.f32 %v1281, %v1305
    %v1311 = vmul.f32 %v1283, %v1306
    %v1312 = vmul.f32 %v1285, %v1307
    %v1313 = vmul.f32 %v1287, %v1308
    %v1314 = vmul.f32 %v1289, %v1309
    %v1315 = vpack.c.bf16 %v1311, %v1310
    %v1316 = vpack.c.bf16 %v1313, %v1312
    %v1317 = vpack.c.bf16 %v1314, %v1314
    %1318 = vrot.lane.b32.xlu0 %v542, 96
    %v1319 = vpop.permute.xlu0 %1318
    %1320 = vrot.lane.b32.xlu0 %v543, 96
    %v1321 = vpop.permute.xlu0 %1320
    %1322 = vrot.lane.b32.xlu0 %v544, 96
    %v1323 = vpop.permute.xlu0 %1322
    %v1327 = vsel %vm472, %v1315, 0
    %v1330 = vsel %vm472, %v1316, 0
    %v1333 = vsel %vm472, %v1317, 0
    %v1336 = vsel %vm117, %v1323, 0
    %1338 = vmatpush.bf16.msra.mxu0 0
    %1339 = vmatpush.bf16.msra.mxu0 0
    %1340 = vmatpush.bf16.msra.mxu0 0
    %1341 = vmatpush.bf16.msra.mxu0 0
    %1342 = vmatpush.bf16.msra.mxu0 0
    %1343 = vmatpush.bf16.msra.mxu0 %v1336
    %1344 = vmatpush.bf16.msra.mxu0 %v1321
    %1345 = vmatpush.bf16.msra.mxu0 %v1319
    %1346 = vmatmul.bf16.gmra.mxu0 %v1327
    %v1347 = vpop.f32.mrf.mxu0
    %v1348 = vadd.f32 0.0, %v1347
    %v1349 = vpop.f32.mrf.mxu0
    %v1350 = vadd.f32 0.0, %v1349
    %1351 = vmatmul.bf16.gmra.mxu0 %v1330
    %v1352 = vpop.f32.mrf.mxu0
    %v1353 = vadd.f32 0.0, %v1352
    %v1354 = vpop.f32.mrf.mxu0
    %v1355 = vadd.f32 0.0, %v1354
    %1356 = vmatmul.bf16.gmra.mxu0 %v1333
    %v1357 = vpop.f32.mrf.mxu0
    %v1358 = vadd.f32 0.0, %v1357
    %v1359 = vpop.f32.mrf.mxu0
    %1360 = vdwg.mxu0
    %v1361 = vpack.c.bf16 %v1350, %v1348
    %v1362 = vpack.c.bf16 %v1355, %v1353
    %v1363 = vpack.c.bf16 %v1358, %v1358
    %v1365 = vsel %vm430, %v1361, 0
    %v1368 = vsel %vm430, %v1362, 0
    %v1371 = vsel %vm430, %v1363, 0
    %v1374 = vsel %vm751, %v402, 0
    %1376 = vmatpush.bf16.msra.mxu0 0
    %1377 = vmatpush.bf16.msra.mxu0 0
    %1378 = vmatpush.bf16.msra.mxu0 0
    %1379 = vmatpush.bf16.msra.mxu0 0
    %1380 = vmatpush.bf16.msra.mxu0 0
    %1381 = vmatpush.bf16.msra.mxu0 0
    %1382 = vmatpush.bf16.msra.mxu0 0
    %1383 = vmatpush.bf16.msra.mxu0 %v1374
    %1384 = vmatmul.bf16.gmra.mxu0 %v1365
    %v1385 = vpop.f32.mrf.mxu0
    %v1386 = vadd.f32 0.0, %v1385
    %v1387 = vpop.f32.mrf.mxu0
    %v1388 = vadd.f32 0.0, %v1387
    %1389 = vmatmul.bf16.gmra.mxu0 %v1368
    %v1390 = vpop.f32.mrf.mxu0
    %v1391 = vadd.f32 0.0, %v1390
    %v1392 = vpop.f32.mrf.mxu0
    %v1393 = vadd.f32 0.0, %v1392
    %1394 = vmatmul.bf16.gmra.mxu0 %v1371
    %v1395 = vpop.f32.mrf.mxu0
    %v1396 = vadd.f32 0.0, %v1395
    %v1397 = vpop.f32.mrf.mxu0
    %1398 = vdwg.mxu0
    %v1399 = vadd.f32 %v1202, %v1386
    %v1400 = vadd.f32 %v1203, %v1388
    %v1401 = vadd.f32 %v1204, %v1391
    %v1402 = vadd.f32 %v1205, %v1393
    %v1403 = vadd.f32 %v1206, %v1396
    %1404 = vrot.lane.b32.xlu0 %v421, 88
    %v1405 = vpop.permute.xlu0 %1404
    %1406 = vrot.lane.b32.xlu0 %v422, 88
    %v1407 = vpop.permute.xlu0 %1406
    %1408 = vrot.lane.b32.xlu0 %v423, 88
    %v1409 = vpop.permute.xlu0 %1408
    %1410 = vrot.lane.b32.xlu0 %v421, 24
    %v1411 = vpop.permute.xlu0 %1410
    %1412 = vrot.lane.b32.xlu0 %v422, 24
    %v1413 = vpop.permute.xlu0 %1412
    %1414 = vrot.lane.b32.xlu0 %v423, 24
    %v1415 = vpop.permute.xlu0 %1414
    %v1417 = vsel %vm430, %v1405, 0
    %v1420 = vsel %vm430, %v1407, 0
    %v1423 = vsel %vm430, %v1409, 0
    %v1426 = vsel %vm430, %v1411, 0
    %v1429 = vsel %vm430, %v1413, 0
    %v1432 = vsel %vm430, %v1415, 0
    %1434 = vmatpush.bf16.xpose.msra.mxu0 0
    %1435 = vmatpush.bf16.xpose.msra.mxu0 0
    %1436 = vmatpush.bf16.xpose.msra.mxu0 0
    %1437 = vmatpush.bf16.xpose.msra.mxu0 0
    %1438 = vmatpush.bf16.xpose.msra.mxu0 0
    %1439 = vmatpush.bf16.xpose.msra.mxu0 %v1432
    %1440 = vmatpush.bf16.xpose.msra.mxu0 %v1429
    %1441 = vmatpush.bf16.xpose.msra.mxu0 %v1426
    %1442 = vmatmul.bf16.gmra.mxu0 %v1417
    %v1443 = vpop.f32.mrf.mxu0
    %v1444 = vadd.f32 %v406, %v1443
    %v1445 = vpop.f32.mrf.mxu0
    %v1446 = vadd.f32 %v407, %v1445
    %1447 = vmatmul.bf16.gmra.mxu0 %v1420
    %v1448 = vpop.f32.mrf.mxu0
    %v1449 = vadd.f32 %v408, %v1448
    %v1450 = vpop.f32.mrf.mxu0
    %v1451 = vadd.f32 %v409, %v1450
    %1452 = vmatmul.bf16.gmra.mxu0 %v1423
    %v1453 = vpop.f32.mrf.mxu0
    %v1454 = vadd.f32 %v410, %v1453
    %v1455 = vpop.f32.mrf.mxu0
    %1456 = vdwg.mxu0
    %v1457 = vsel %vm472, %v1444, -inf
    %1458 = vmax.xlane.f32.xlu0 %v1457
    %v1459 = vpop.xlane.xlu0 %1458
    %v1460 = vsel %vm472, %v1446, -inf
    %1461 = vmax.xlane.f32.xlu0 %v1460
    %v1462 = vpop.xlane.xlu0 %1461
    %v1463 = vsel %vm472, %v1449, -inf
    %1464 = vmax.xlane.f32.xlu0 %v1463
    %v1465 = vpop.xlane.xlu0 %1464
    %v1466 = vsel %vm472, %v1451, -inf
    %1467 = vmax.xlane.f32.xlu0 %v1466
    %v1468 = vpop.xlane.xlu0 %1467
    %v1469 = vsel %vm485, %v1454, -inf
    %1470 = vmax.xlane.f32.xlu0 %v1469
    %v1471 = vpop.xlane.xlu0 %1470
    %v1472 = vsub.f32 %v1444, %v1459
    %v1473 = vsub.f32 %v1446, %v1462
    %v1474 = vsub.f32 %v1449, %v1465
    %v1475 = vsub.f32 %v1451, %v1468
    %v1476 = vsub.f32 %v1454, %v1471
    %v1477 = vmul.f32 %v1472, 1.442695
    %v1478 = vpow.pop %v1477
    %v1479 = vmul.f32 %v1473, 1.442695
    %v1480 = vpow.pop %v1479
    %v1481 = vmul.f32 %v1474, 1.442695
    %v1482 = vpow.pop %v1481
    %v1483 = vmul.f32 %v1475, 1.442695
    %v1484 = vpow.pop %v1483
    %v1485 = vmul.f32 %v1476, 1.442695
    %v1486 = vpow.pop %v1485
    %v1487 = vsel %vm472, %v1478, 0.0
    %1488 = vadd.xlane.f32.xlu0 %v1487
    %v1489 = vpop.xlane.xlu0 %1488
    %v1490 = vsel %vm472, %v1480, 0.0
    %1491 = vadd.xlane.f32.xlu0 %v1490
    %v1492 = vpop.xlane.xlu0 %1491
    %v1493 = vsel %vm472, %v1482, 0.0
    %1494 = vadd.xlane.f32.xlu0 %v1493
    %v1495 = vpop.xlane.xlu0 %1494
    %v1496 = vsel %vm472, %v1484, 0.0
    %1497 = vadd.xlane.f32.xlu0 %v1496
    %v1498 = vpop.xlane.xlu0 %1497
    %v1499 = vsel %vm485, %v1486, 0.0
    %1500 = vadd.xlane.f32.xlu0 %v1499
    %v1501 = vpop.xlane.xlu0 %1500
    %v1502 = vrcp.pop %v1489
    %v1503 = vrcp.pop %v1492
    %v1504 = vrcp.pop %v1495
    %v1505 = vrcp.pop %v1498
    %v1506 = vrcp.pop %v1501
    %v1507 = vmul.f32 %v1478, %v1502
    %v1508 = vmul.f32 %v1480, %v1503
    %v1509 = vmul.f32 %v1482, %v1504
    %v1510 = vmul.f32 %v1484, %v1505
    %v1511 = vmul.f32 %v1486, %v1506
    %v1512 = vpack.c.bf16 %v1508, %v1507
    %v1513 = vpack.c.bf16 %v1510, %v1509
    %v1514 = vpack.c.bf16 %v1511, %v1511
    %1515 = vrot.lane.b32.xlu0 %v542, 88
    %v1516 = vpop.permute.xlu0 %1515
    %1517 = vrot.lane.b32.xlu0 %v543, 88
    %v1518 = vpop.permute.xlu0 %1517
    %1519 = vrot.lane.b32.xlu0 %v544, 88
    %v1520 = vpop.permute.xlu0 %1519
    %v1524 = vsel %vm472, %v1512, 0
    %v1527 = vsel %vm472, %v1513, 0
    %v1530 = vsel %vm472, %v1514, 0
    %v1533 = vsel %vm117, %v1520, 0
    %1535 = vmatpush.bf16.msra.mxu0 0
    %1536 = vmatpush.bf16.msra.mxu0 0
    %1537 = vmatpush.bf16.msra.mxu0 0
    %1538 = vmatpush.bf16.msra.mxu0 0
    %1539 = vmatpush.bf16.msra.mxu0 0
    %1540 = vmatpush.bf16.msra.mxu0 %v1533
    %1541 = vmatpush.bf16.msra.mxu0 %v1518
    %1542 = vmatpush.bf16.msra.mxu0 %v1516
    %1543 = vmatmul.bf16.gmra.mxu0 %v1524
    %v1544 = vpop.f32.mrf.mxu0
    %v1545 = vadd.f32 0.0, %v1544
    %v1546 = vpop.f32.mrf.mxu0
    %v1547 = vadd.f32 0.0, %v1546
    %1548 = vmatmul.bf16.gmra.mxu0 %v1527
    %v1549 = vpop.f32.mrf.mxu0
    %v1550 = vadd.f32 0.0, %v1549
    %v1551 = vpop.f32.mrf.mxu0
    %v1552 = vadd.f32 0.0, %v1551
    %1553 = vmatmul.bf16.gmra.mxu0 %v1530
    %v1554 = vpop.f32.mrf.mxu0
    %v1555 = vadd.f32 0.0, %v1554
    %v1556 = vpop.f32.mrf.mxu0
    %1557 = vdwg.mxu0
    %v1558 = vpack.c.bf16 %v1547, %v1545
    %v1559 = vpack.c.bf16 %v1552, %v1550
    %v1560 = vpack.c.bf16 %v1555, %v1555
    %v1562 = vsel %vm430, %v1558, 0
    %v1565 = vsel %vm430, %v1559, 0
    %v1568 = vsel %vm430, %v1560, 0
    %v1571 = vsel %vm751, %v403, 0
    %1573 = vmatpush.bf16.msra.mxu0 0
    %1574 = vmatpush.bf16.msra.mxu0 0
    %1575 = vmatpush.bf16.msra.mxu0 0
    %1576 = vmatpush.bf16.msra.mxu0 0
    %1577 = vmatpush.bf16.msra.mxu0 0
    %1578 = vmatpush.bf16.msra.mxu0 0
    %1579 = vmatpush.bf16.msra.mxu0 0
    %1580 = vmatpush.bf16.msra.mxu0 %v1571
    %1581 = vmatmul.bf16.gmra.mxu0 %v1562
    %v1582 = vpop.f32.mrf.mxu0
    %v1583 = vadd.f32 0.0, %v1582
    %v1584 = vpop.f32.mrf.mxu0
    %v1585 = vadd.f32 0.0, %v1584
    %1586 = vmatmul.bf16.gmra.mxu0 %v1565
    %v1587 = vpop.f32.mrf.mxu0
    %v1588 = vadd.f32 0.0, %v1587
    %v1589 = vpop.f32.mrf.mxu0
    %v1590 = vadd.f32 0.0, %v1589
    %1591 = vmatmul.bf16.gmra.mxu0 %v1568
    %v1592 = vpop.f32.mrf.mxu0
    %v1593 = vadd.f32 0.0, %v1592
    %v1594 = vpop.f32.mrf.mxu0
    %1595 = vdwg.mxu0
    %v1596 = vadd.f32 %v1399, %v1583
    %v1597 = vadd.f32 %v1400, %v1585
    %v1598 = vadd.f32 %v1401, %v1588
    %v1599 = vadd.f32 %v1402, %v1590
    %v1600 = vadd.f32 %v1403, %v1593
    %1601 = vrot.lane.b32.xlu0 %v421, 80
    %v1602 = vpop.permute.xlu0 %1601
    %1603 = vrot.lane.b32.xlu0 %v422, 80
    %v1604 = vpop.permute.xlu0 %1603
    %1605 = vrot.lane.b32.xlu0 %v423, 80
    %v1606 = vpop.permute.xlu0 %1605
    %1607 = vrot.lane.b32.xlu0 %v421, 16
    %v1608 = vpop.permute.xlu0 %1607
    %1609 = vrot.lane.b32.xlu0 %v422, 16
    %v1610 = vpop.permute.xlu0 %1609
    %1611 = vrot.lane.b32.xlu0 %v423, 16
    %v1612 = vpop.permute.xlu0 %1611
    %v1614 = vsel %vm430, %v1602, 0
    %v1617 = vsel %vm430, %v1604, 0
    %v1620 = vsel %vm430, %v1606, 0
    %v1623 = vsel %vm430, %v1608, 0
    %v1626 = vsel %vm430, %v1610, 0
    %v1629 = vsel %vm430, %v1612, 0
    %1631 = vmatpush.bf16.xpose.msra.mxu0 0
    %1632 = vmatpush.bf16.xpose.msra.mxu0 0
    %1633 = vmatpush.bf16.xpose.msra.mxu0 0
    %1634 = vmatpush.bf16.xpose.msra.mxu0 0
    %1635 = vmatpush.bf16.xpose.msra.mxu0 0
    %1636 = vmatpush.bf16.xpose.msra.mxu0 %v1629
    %1637 = vmatpush.bf16.xpose.msra.mxu0 %v1626
    %1638 = vmatpush.bf16.xpose.msra.mxu0 %v1623
    %1639 = vmatmul.bf16.gmra.mxu0 %v1614
    %v1640 = vpop.f32.mrf.mxu0
    %v1641 = vadd.f32 %v406, %v1640
    %v1642 = vpop.f32.mrf.mxu0
    %v1643 = vadd.f32 %v407, %v1642
    %1644 = vmatmul.bf16.gmra.mxu0 %v1617
    %v1645 = vpop.f32.mrf.mxu0
    %v1646 = vadd.f32 %v408, %v1645
    %v1647 = vpop.f32.mrf.mxu0
    %v1648 = vadd.f32 %v409, %v1647
    %1649 = vmatmul.bf16.gmra.mxu0 %v1620
    %v1650 = vpop.f32.mrf.mxu0
    %v1651 = vadd.f32 %v410, %v1650
    %v1652 = vpop.f32.mrf.mxu0
    %1653 = vdwg.mxu0
    %v1654 = vsel %vm472, %v1641, -inf
    %1655 = vmax.xlane.f32.xlu0 %v1654
    %v1656 = vpop.xlane.xlu0 %1655
    %v1657 = vsel %vm472, %v1643, -inf
    %1658 = vmax.xlane.f32.xlu0 %v1657
    %v1659 = vpop.xlane.xlu0 %1658
    %v1660 = vsel %vm472, %v1646, -inf
    %1661 = vmax.xlane.f32.xlu0 %v1660
    %v1662 = vpop.xlane.xlu0 %1661
    %v1663 = vsel %vm472, %v1648, -inf
    %1664 = vmax.xlane.f32.xlu0 %v1663
    %v1665 = vpop.xlane.xlu0 %1664
    %v1666 = vsel %vm485, %v1651, -inf
    %1667 = vmax.xlane.f32.xlu0 %v1666
    %v1668 = vpop.xlane.xlu0 %1667
    %v1669 = vsub.f32 %v1641, %v1656
    %v1670 = vsub.f32 %v1643, %v1659
    %v1671 = vsub.f32 %v1646, %v1662
    %v1672 = vsub.f32 %v1648, %v1665
    %v1673 = vsub.f32 %v1651, %v1668
    %v1674 = vmul.f32 %v1669, 1.442695
    %v1675 = vpow.pop %v1674
    %v1676 = vmul.f32 %v1670, 1.442695
    %v1677 = vpow.pop %v1676
    %v1678 = vmul.f32 %v1671, 1.442695
    %v1679 = vpow.pop %v1678
    %v1680 = vmul.f32 %v1672, 1.442695
    %v1681 = vpow.pop %v1680
    %v1682 = vmul.f32 %v1673, 1.442695
    %v1683 = vpow.pop %v1682
    %v1684 = vsel %vm472, %v1675, 0.0
    %1685 = vadd.xlane.f32.xlu0 %v1684
    %v1686 = vpop.xlane.xlu0 %1685
    %v1687 = vsel %vm472, %v1677, 0.0
    %1688 = vadd.xlane.f32.xlu0 %v1687
    %v1689 = vpop.xlane.xlu0 %1688
    %v1690 = vsel %vm472, %v1679, 0.0
    %1691 = vadd.xlane.f32.xlu0 %v1690
    %v1692 = vpop.xlane.xlu0 %1691
    %v1693 = vsel %vm472, %v1681, 0.0
    %1694 = vadd.xlane.f32.xlu0 %v1693
    %v1695 = vpop.xlane.xlu0 %1694
    %v1696 = vsel %vm485, %v1683, 0.0
    %1697 = vadd.xlane.f32.xlu0 %v1696
    %v1698 = vpop.xlane.xlu0 %1697
    %v1699 = vrcp.pop %v1686
    %v1700 = vrcp.pop %v1689
    %v1701 = vrcp.pop %v1692
    %v1702 = vrcp.pop %v1695
    %v1703 = vrcp.pop %v1698
    %v1704 = vmul.f32 %v1675, %v1699
    %v1705 = vmul.f32 %v1677, %v1700
    %v1706 = vmul.f32 %v1679, %v1701
    %v1707 = vmul.f32 %v1681, %v1702
    %v1708 = vmul.f32 %v1683, %v1703
    %v1709 = vpack.c.bf16 %v1705, %v1704
    %v1710 = vpack.c.bf16 %v1707, %v1706
    %v1711 = vpack.c.bf16 %v1708, %v1708
    %1712 = vrot.lane.b32.xlu0 %v542, 80
    %v1713 = vpop.permute.xlu0 %1712
    %1714 = vrot.lane.b32.xlu0 %v543, 80
    %v1715 = vpop.permute.xlu0 %1714
    %1716 = vrot.lane.b32.xlu0 %v544, 80
    %v1717 = vpop.permute.xlu0 %1716
    %v1721 = vsel %vm472, %v1709, 0
    %v1724 = vsel %vm472, %v1710, 0
    %v1727 = vsel %vm472, %v1711, 0
    %v1730 = vsel %vm117, %v1717, 0
    %1732 = vmatpush.bf16.msra.mxu0 0
    %1733 = vmatpush.bf16.msra.mxu0 0
    %1734 = vmatpush.bf16.msra.mxu0 0
    %1735 = vmatpush.bf16.msra.mxu0 0
    %1736 = vmatpush.bf16.msra.mxu0 0
    %1737 = vmatpush.bf16.msra.mxu0 %v1730
    %1738 = vmatpush.bf16.msra.mxu0 %v1715
    %1739 = vmatpush.bf16.msra.mxu0 %v1713
    %1740 = vmatmul.bf16.gmra.mxu0 %v1721
    %v1741 = vpop.f32.mrf.mxu0
    %v1742 = vadd.f32 0.0, %v1741
    %v1743 = vpop.f32.mrf.mxu0
    %v1744 = vadd.f32 0.0, %v1743
    %1745 = vmatmul.bf16.gmra.mxu0 %v1724
    %v1746 = vpop.f32.mrf.mxu0
    %v1747 = vadd.f32 0.0, %v1746
    %v1748 = vpop.f32.mrf.mxu0
    %v1749 = vadd.f32 0.0, %v1748
    %1750 = vmatmul.bf16.gmra.mxu0 %v1727
    %v1751 = vpop.f32.mrf.mxu0
    %v1752 = vadd.f32 0.0, %v1751
    %v1753 = vpop.f32.mrf.mxu0
    %1754 = vdwg.mxu0
    %v1755 = vpack.c.bf16 %v1744, %v1742
    %v1756 = vpack.c.bf16 %v1749, %v1747
    %v1757 = vpack.c.bf16 %v1752, %v1752
    %v1759 = vsel %vm430, %v1755, 0
    %v1762 = vsel %vm430, %v1756, 0
    %v1765 = vsel %vm430, %v1757, 0
    %v1768 = vsel %vm751, %v404, 0
    %1770 = vmatpush.bf16.msra.mxu0 0
    %1771 = vmatpush.bf16.msra.mxu0 0
    %1772 = vmatpush.bf16.msra.mxu0 0
    %1773 = vmatpush.bf16.msra.mxu0 0
    %1774 = vmatpush.bf16.msra.mxu0 0
    %1775 = vmatpush.bf16.msra.mxu0 0
    %1776 = vmatpush.bf16.msra.mxu0 0
    %1777 = vmatpush.bf16.msra.mxu0 %v1768
    %1778 = vmatmul.bf16.gmra.mxu0 %v1759
    %v1779 = vpop.f32.mrf.mxu0
    %v1780 = vadd.f32 0.0, %v1779
    %v1781 = vpop.f32.mrf.mxu0
    %v1782 = vadd.f32 0.0, %v1781
    %1783 = vmatmul.bf16.gmra.mxu0 %v1762
    %v1784 = vpop.f32.mrf.mxu0
    %v1785 = vadd.f32 0.0, %v1784
    %v1786 = vpop.f32.mrf.mxu0
    %v1787 = vadd.f32 0.0, %v1786
    %1788 = vmatmul.bf16.gmra.mxu0 %v1765
    %v1789 = vpop.f32.mrf.mxu0
    %v1790 = vadd.f32 0.0, %v1789
    %v1791 = vpop.f32.mrf.mxu0
    %1792 = vdwg.mxu0
    %v1793 = vadd.f32 %v1596, %v1780
    %v1794 = vadd.f32 %v1597, %v1782
    %v1795 = vadd.f32 %v1598, %v1785
    %v1796 = vadd.f32 %v1599, %v1787
    %v1797 = vadd.f32 %v1600, %v1790
    %1798 = vrot.lane.b32.xlu0 %v421, 72
    %v1799 = vpop.permute.xlu0 %1798
    %1800 = vrot.lane.b32.xlu0 %v422, 72
    %v1801 = vpop.permute.xlu0 %1800
    %1802 = vrot.lane.b32.xlu0 %v423, 72
    %v1803 = vpop.permute.xlu0 %1802
    %1804 = vrot.lane.b32.xlu0 %v421, 8
    %v1805 = vpop.permute.xlu0 %1804
    %1806 = vrot.lane.b32.xlu0 %v422, 8
    %v1807 = vpop.permute.xlu0 %1806
    %1808 = vrot.lane.b32.xlu0 %v423, 8
    %v1809 = vpop.permute.xlu0 %1808
    %v1811 = vsel %vm430, %v1799, 0
    %v1814 = vsel %vm430, %v1801, 0
    %v1817 = vsel %vm430, %v1803, 0
    %v1820 = vsel %vm430, %v1805, 0
    %v1823 = vsel %vm430, %v1807, 0
    %v1826 = vsel %vm430, %v1809, 0
    %1828 = vmatpush.bf16.xpose.msra.mxu0 0
    %1829 = vmatpush.bf16.xpose.msra.mxu0 0
    %1830 = vmatpush.bf16.xpose.msra.mxu0 0
    %1831 = vmatpush.bf16.xpose.msra.mxu0 0
    %1832 = vmatpush.bf16.xpose.msra.mxu0 0
    %1833 = vmatpush.bf16.xpose.msra.mxu0 %v1826
    %1834 = vmatpush.bf16.xpose.msra.mxu0 %v1823
    %1835 = vmatpush.bf16.xpose.msra.mxu0 %v1820
    %1836 = vmatmul.bf16.gmra.mxu0 %v1811
    %v1837 = vpop.f32.mrf.mxu0
    %v1838 = vadd.f32 %v406, %v1837
    %v1839 = vpop.f32.mrf.mxu0
    %v1840 = vadd.f32 %v407, %v1839
    %1841 = vmatmul.bf16.gmra.mxu0 %v1814
    %v1842 = vpop.f32.mrf.mxu0
    %v1843 = vadd.f32 %v408, %v1842
    %v1844 = vpop.f32.mrf.mxu0
    %v1845 = vadd.f32 %v409, %v1844
    %1846 = vmatmul.bf16.gmra.mxu0 %v1817
    %v1847 = vpop.f32.mrf.mxu0
    %v1848 = vadd.f32 %v410, %v1847
    %v1849 = vpop.f32.mrf.mxu0
    %1850 = vdwg.mxu0
    %v1851 = vsel %vm472, %v1838, -inf
    %1852 = vmax.xlane.f32.xlu0 %v1851
    %v1853 = vpop.xlane.xlu0 %1852
    %v1854 = vsel %vm472, %v1840, -inf
    %1855 = vmax.xlane.f32.xlu0 %v1854
    %v1856 = vpop.xlane.xlu0 %1855
    %v1857 = vsel %vm472, %v1843, -inf
    %1858 = vmax.xlane.f32.xlu0 %v1857
    %v1859 = vpop.xlane.xlu0 %1858
    %v1860 = vsel %vm472, %v1845, -inf
    %1861 = vmax.xlane.f32.xlu0 %v1860
    %v1862 = vpop.xlane.xlu0 %1861
    %v1863 = vsel %vm485, %v1848, -inf
    %1864 = vmax.xlane.f32.xlu0 %v1863
    %v1865 = vpop.xlane.xlu0 %1864
    %v1866 = vsub.f32 %v1838, %v1853
    %v1867 = vsub.f32 %v1840, %v1856
    %v1868 = vsub.f32 %v1843, %v1859
    %v1869 = vsub.f32 %v1845, %v1862
    %v1870 = vsub.f32 %v1848, %v1865
    %v1871 = vmul.f32 %v1866, 1.442695
    %v1872 = vpow.pop %v1871
    %v1873 = vmul.f32 %v1867, 1.442695
    %v1874 = vpow.pop %v1873
    %v1875 = vmul.f32 %v1868, 1.442695
    %v1876 = vpow.pop %v1875
    %v1877 = vmul.f32 %v1869, 1.442695
    %v1878 = vpow.pop %v1877
    %v1879 = vmul.f32 %v1870, 1.442695
    %v1880 = vpow.pop %v1879
    %v1881 = vsel %vm472, %v1872, 0.0
    %1882 = vadd.xlane.f32.xlu0 %v1881
    %v1883 = vpop.xlane.xlu0 %1882
    %v1884 = vsel %vm472, %v1874, 0.0
    %1885 = vadd.xlane.f32.xlu0 %v1884
    %v1886 = vpop.xlane.xlu0 %1885
    %v1887 = vsel %vm472, %v1876, 0.0
    %1888 = vadd.xlane.f32.xlu0 %v1887
    %v1889 = vpop.xlane.xlu0 %1888
    %v1890 = vsel %vm472, %v1878, 0.0
    %1891 = vadd.xlane.f32.xlu0 %v1890
    %v1892 = vpop.xlane.xlu0 %1891
    %v1893 = vsel %vm485, %v1880, 0.0
    %1894 = vadd.xlane.f32.xlu0 %v1893
    %v1895 = vpop.xlane.xlu0 %1894
    %v1896 = vrcp.pop %v1883
    %v1897 = vrcp.pop %v1886
    %v1898 = vrcp.pop %v1889
    %v1899 = vrcp.pop %v1892
    %v1900 = vrcp.pop %v1895
    %v1901 = vmul.f32 %v1872, %v1896
    %v1902 = vmul.f32 %v1874, %v1897
    %v1903 = vmul.f32 %v1876, %v1898
    %v1904 = vmul.f32 %v1878, %v1899
    %v1905 = vmul.f32 %v1880, %v1900
    %v1906 = vpack.c.bf16 %v1902, %v1901
    %v1907 = vpack.c.bf16 %v1904, %v1903
    %v1908 = vpack.c.bf16 %v1905, %v1905
    %1909 = vrot.lane.b32.xlu0 %v542, 72
    %v1910 = vpop.permute.xlu0 %1909
    %1911 = vrot.lane.b32.xlu0 %v543, 72
    %v1912 = vpop.permute.xlu0 %1911
    %1913 = vrot.lane.b32.xlu0 %v544, 72
    %v1914 = vpop.permute.xlu0 %1913
    %v1918 = vsel %vm472, %v1906, 0
    %v1921 = vsel %vm472, %v1907, 0
    %v1924 = vsel %vm472, %v1908, 0
    %v1927 = vsel %vm117, %v1914, 0
    %1929 = vmatpush.bf16.msra.mxu0 0
    %1930 = vmatpush.bf16.msra.mxu0 0
    %1931 = vmatpush.bf16.msra.mxu0 0
    %1932 = vmatpush.bf16.msra.mxu0 0
    %1933 = vmatpush.bf16.msra.mxu0 0
    %1934 = vmatpush.bf16.msra.mxu0 %v1927
    %1935 = vmatpush.bf16.msra.mxu0 %v1912
    %1936 = vmatpush.bf16.msra.mxu0 %v1910
    %1937 = vmatmul.bf16.gmra.mxu0 %v1918
    %v1938 = vpop.f32.mrf.mxu0
    %v1939 = vadd.f32 0.0, %v1938
    %v1940 = vpop.f32.mrf.mxu0
    %v1941 = vadd.f32 0.0, %v1940
    %1942 = vmatmul.bf16.gmra.mxu0 %v1921
    %v1943 = vpop.f32.mrf.mxu0
    %v1944 = vadd.f32 0.0, %v1943
    %v1945 = vpop.f32.mrf.mxu0
    %v1946 = vadd.f32 0.0, %v1945
    %1947 = vmatmul.bf16.gmra.mxu0 %v1924
    %v1948 = vpop.f32.mrf.mxu0
    %v1949 = vadd.f32 0.0, %v1948
    %v1950 = vpop.f32.mrf.mxu0
    %1951 = vdwg.mxu0
    %v1952 = vpack.c.bf16 %v1941, %v1939
    %v1953 = vpack.c.bf16 %v1946, %v1944
    %v1954 = vpack.c.bf16 %v1949, %v1949
    %v1956 = vsel %vm430, %v1952, 0
    %v1959 = vsel %vm430, %v1953, 0
    %v1962 = vsel %vm430, %v1954, 0
    %v1965 = vsel %vm751, %v405, 0
    %1967 = vmatpush.bf16.msra.mxu0 0
    %1968 = vmatpush.bf16.msra.mxu0 0
    %1969 = vmatpush.bf16.msra.mxu0 0
    %1970 = vmatpush.bf16.msra.mxu0 0
    %1971 = vmatpush.bf16.msra.mxu0 0
    %1972 = vmatpush.bf16.msra.mxu0 0
    %1973 = vmatpush.bf16.msra.mxu0 0
    %1974 = vmatpush.bf16.msra.mxu0 %v1965
    %1975 = vmatmul.bf16.gmra.mxu0 %v1956
    %v1976 = vpop.f32.mrf.mxu0
    %v1977 = vadd.f32 0.0, %v1976
    %v1978 = vpop.f32.mrf.mxu0
    %v1979 = vadd.f32 0.0, %v1978
    %1980 = vmatmul.bf16.gmra.mxu0 %v1959
    %v1981 = vpop.f32.mrf.mxu0
    %v1982 = vadd.f32 0.0, %v1981
    %v1983 = vpop.f32.mrf.mxu0
    %v1984 = vadd.f32 0.0, %v1983
    %1985 = vmatmul.bf16.gmra.mxu0 %v1962
    %v1986 = vpop.f32.mrf.mxu0
    %v1987 = vadd.f32 0.0, %v1986
    %v1988 = vpop.f32.mrf.mxu0
    %1989 = vdwg.mxu0
    %v1990 = vadd.f32 %v1793, %v1977
    %v1991 = vadd.f32 %v1794, %v1979
    %v1992 = vadd.f32 %v1795, %v1982
    %v1993 = vadd.f32 %v1796, %v1984
    %v1994 = vadd.f32 %v1797, %v1987
    %v1995 = vld [vmem:[%s11] sm:$0x1]
    %v1997 = vperm.slane %v1995, 0
    %v1999 = vadd.f32 %v1990, %v1997
    %v2000 = vadd.f32 %v1991, %v1997
    %v2001 = vadd.f32 %v1992, %v1997
    %v2002 = vadd.f32 %v1993, %v1997
    %v2003 = vadd.f32 %v1994, %v1997
    %v2004 = vadd.f32 %v1999, %v271
    %v2005 = vadd.f32 %v2000, %v272
    %v2006 = vadd.f32 %v2001, %v273
    %v2007 = vadd.f32 %v2002, %v274
    %v2008 = vadd.f32 %v2003, %v275
    %s2009 = scalar_lea.vmem %s6, 1
    %v2010 = vld [vmem:[%s2009] sm:$0x1]
    %s2011 = scalar_lea.vmem %s7, 1
    %v2012 = vld [vmem:[%s2011] sm:$0x1]
    %v2013 = vsel %vm141, %v2004, 0.0
    %2014 = vadd.xlane.f32.xlu0 %v2013
    %v2015 = vpop.xlane.xlu0 %2014
    %v2016 = vsel %vm141, %v2005, 0.0
    %2017 = vadd.xlane.f32.xlu0 %v2016
    %v2018 = vpop.xlane.xlu0 %2017
    %v2019 = vsel %vm141, %v2006, 0.0
    %2020 = vadd.xlane.f32.xlu0 %v2019
    %v2021 = vpop.xlane.xlu0 %2020
    %v2022 = vsel %vm141, %v2007, 0.0
    %2023 = vadd.xlane.f32.xlu0 %v2022
    %v2024 = vpop.xlane.xlu0 %2023
    %v2025 = vsel %vm154, %v2008, 0.0
    %2026 = vadd.xlane.f32.xlu0 %v2025
    %v2027 = vpop.xlane.xlu0 %2026
    %v2028 = vmul.f32 %v2015, %v164
    %v2029 = vmul.f32 %v2018, %v164
    %v2030 = vmul.f32 %v2021, %v164
    %v2031 = vmul.f32 %v2024, %v164
    %v2032 = vmul.f32 %v2027, %v164
    %v2033 = vsub.f32 %v2004, %v2028
    %v2034 = vsub.f32 %v2005, %v2029
    %v2035 = vsub.f32 %v2006, %v2030
    %v2036 = vsub.f32 %v2007, %v2031
    %v2037 = vsub.f32 %v2008, %v2032
    %v2038 = vmul.f32 %v2033, %v2033
    %v2039 = vmul.f32 %v2034, %v2034
    %v2040 = vmul.f32 %v2035, %v2035
    %v2041 = vmul.f32 %v2036, %v2036
    %v2042 = vmul.f32 %v2037, %v2037
    %v2043 = vsel %vm141, %v2038, 0.0
    %2044 = vadd.xlane.f32.xlu0 %v2043
    %v2045 = vpop.xlane.xlu0 %2044
    %v2046 = vsel %vm141, %v2039, 0.0
    %2047 = vadd.xlane.f32.xlu0 %v2046
    %v2048 = vpop.xlane.xlu0 %2047
    %v2049 = vsel %vm141, %v2040, 0.0
    %2050 = vadd.xlane.f32.xlu0 %v2049
    %v2051 = vpop.xlane.xlu0 %2050
    %v2052 = vsel %vm141, %v2041, 0.0
    %2053 = vadd.xlane.f32.xlu0 %v2052
    %v2054 = vpop.xlane.xlu0 %2053
    %v2055 = vsel %vm154, %v2042, 0.0
    %2056 = vadd.xlane.f32.xlu0 %v2055
    %v2057 = vpop.xlane.xlu0 %2056
    %v2058 = vmul.f32 %v2045, %v164
    %v2059 = vmul.f32 %v2048, %v164
    %v2060 = vmul.f32 %v2051, %v164
    %v2061 = vmul.f32 %v2054, %v164
    %v2062 = vmul.f32 %v2057, %v164
    %v2063 = vadd.f32 %v2058, 1e-05
    %v2064 = vadd.f32 %v2059, 1e-05
    %v2065 = vadd.f32 %v2060, 1e-05
    %v2066 = vadd.f32 %v2061, 1e-05
    %v2067 = vadd.f32 %v2062, 1e-05
    %v2068 = vrsqrt.pop %v2063
    %v2069 = vmul.f32 %v2068, %v2063
    %v2070 = vmul.f32 %v2069, %v2068
    %v2071 = vmul.f32 0.5, %v2070
    %v2072 = vsub.f32 1.5, %v2071
    %v2073 = vmul.f32 %v2068, %v2072
    %vm2074 = vweird.f32 %v2063
    %vm2075 = vweird.f32 %v2068
    %vm2076 = vmor %vm2074, %vm2075
    %v2077 = vsel %vm2076, %v2068, %v2073
    %v2078 = vrsqrt.pop %v2064
    %v2079 = vmul.f32 %v2078, %v2064
    %v2080 = vmul.f32 %v2079, %v2078
    %v2081 = vmul.f32 0.5, %v2080
    %v2082 = vsub.f32 1.5, %v2081
    %v2083 = vmul.f32 %v2078, %v2082
    %vm2084 = vweird.f32 %v2064
    %vm2085 = vweird.f32 %v2078
    %vm2086 = vmor %vm2084, %vm2085
    %v2087 = vsel %vm2086, %v2078, %v2083
    %v2088 = vrsqrt.pop %v2065
    %v2089 = vmul.f32 %v2088, %v2065
    %v2090 = vmul.f32 %v2089, %v2088
    %v2091 = vmul.f32 0.5, %v2090
    %v2092 = vsub.f32 1.5, %v2091
    %v2093 = vmul.f32 %v2088, %v2092
    %vm2094 = vweird.f32 %v2065
    %vm2095 = vweird.f32 %v2088
    %vm2096 = vmor %vm2094, %vm2095
    %v2097 = vsel %vm2096, %v2088, %v2093
    %v2098 = vrsqrt.pop %v2066
    %v2099 = vmul.f32 %v2098, %v2066
    %v2100 = vmul.f32 %v2099, %v2098
    %v2101 = vmul.f32 0.5, %v2100
    %v2102 = vsub.f32 1.5, %v2101
    %v2103 = vmul.f32 %v2098, %v2102
    %vm2104 = vweird.f32 %v2066
    %vm2105 = vweird.f32 %v2098
    %vm2106 = vmor %vm2104, %vm2105
    %v2107 = vsel %vm2106, %v2098, %v2103
    %v2108 = vrsqrt.pop %v2067
    %v2109 = vmul.f32 %v2108, %v2067
    %v2110 = vmul.f32 %v2109, %v2108
    %v2111 = vmul.f32 0.5, %v2110
    %v2112 = vsub.f32 1.5, %v2111
    %v2113 = vmul.f32 %v2108, %v2112
    %vm2114 = vweird.f32 %v2067
    %vm2115 = vweird.f32 %v2108
    %vm2116 = vmor %vm2114, %vm2115
    %v2117 = vsel %vm2116, %v2108, %v2113
    %v2118 = vmul.f32 %v2033, %v2077
    %v2119 = vmul.f32 %v2034, %v2087
    %v2120 = vmul.f32 %v2035, %v2097
    %v2121 = vmul.f32 %v2036, %v2107
    %v2122 = vmul.f32 %v2037, %v2117
    %v2124 = vperm.slane %v2010, 0
    %v2126 = vmul.f32 %v2118, %v2124
    %v2127 = vmul.f32 %v2119, %v2124
    %v2128 = vmul.f32 %v2120, %v2124
    %v2129 = vmul.f32 %v2121, %v2124
    %v2130 = vmul.f32 %v2122, %v2124
    %v2132 = vperm.slane %v2012, 0
    %v2134 = vadd.f32 %v2126, %v2132
    %v2135 = vadd.f32 %v2127, %v2132
    %v2136 = vadd.f32 %v2128, %v2132
    %v2137 = vadd.f32 %v2129, %v2132
    %v2138 = vadd.f32 %v2130, %v2132
    %v2139 = vpack.c.bf16 %v2135, %v2134
    %v2140 = vpack.c.bf16 %v2137, %v2136
    %v2141 = vpack.c.bf16 %v2138, %v2138
    %v2142 = vld [vmem:[%s12] sm:$0xf]
    %v2143 = vld [vmem:[%s12 + $0x4] sm:$0xf]
    %v2144 = vld [vmem:[%s12 + $0x8] sm:$0xf]
    %v2145 = vld [vmem:[%s12 + $0xc] sm:$0xf]
    %v2146 = vld [vmem:[%s12 + $0x10] sm:$0xf]
    %v2147 = vld [vmem:[%s12 + $0x14] sm:$0xf]
    %v2148 = vld [vmem:[%s12 + $0x18] sm:$0xf]
    %v2149 = vld [vmem:[%s12 + $0x1c] sm:$0xf]
    %v2150 = vld [vmem:[%s13] sm:$0x1]
    %v2152 = vperm.slane %v2150, 0
    %v2162 = vunpack.c.l.b16 %v2142
    %v2163 = vunpack.c.l.b16 %v2143
    %v2164 = vunpack.c.l.b16 %v2144
    %v2165 = vunpack.c.l.b16 %v2145
    %v2166 = vunpack.c.l.b16 %v2146
    %v2167 = vunpack.c.l.b16 %v2147
    %v2168 = vunpack.c.l.b16 %v2148
    %v2169 = vunpack.c.l.b16 %v2149
    %v2170 = vpack.c.b16 %v2163, %v2162
    %v2171 = vpack.c.b16 %v2165, %v2164
    %v2172 = vpack.c.b16 %v2167, %v2166
    %v2173 = vpack.c.b16 %v2169, %v2168
    %v2179 = vsel %vm141, %v2139, 0
    %v2182 = vsel %vm141, %v2140, 0
    %v2185 = vsel %vm141, %v2141, 0
    %2187 = vmatpush.bf16.msra.mxu0 0
    %2188 = vmatpush.bf16.msra.mxu0 0
    %2189 = vmatpush.bf16.msra.mxu0 0
    %2190 = vmatpush.bf16.msra.mxu0 0
    %2191 = vmatpush.bf16.msra.mxu0 %v2173
    %2192 = vmatpush.bf16.msra.mxu0 %v2172
    %2193 = vmatpush.bf16.msra.mxu0 %v2171
    %2194 = vmatpush.bf16.msra.mxu0 %v2170
    %2195 = vmatmul.bf16.gmra.mxu0 %v2179
    %v2196 = vpop.f32.mrf.mxu0
    %v2197 = vadd.f32 %v2152, %v2196
    %v2198 = vpop.f32.mrf.mxu0
    %v2199 = vadd.f32 %v2152, %v2198
    %2200 = vmatmul.bf16.gmra.mxu0 %v2182
    %v2201 = vpop.f32.mrf.mxu0
    %v2202 = vadd.f32 %v2152, %v2201
    %v2203 = vpop.f32.mrf.mxu0
    %v2204 = vadd.f32 %v2152, %v2203
    %2205 = vmatmul.bf16.gmra.mxu0 %v2185
    %v2206 = vpop.f32.mrf.mxu0
    %v2207 = vadd.f32 %v2152, %v2206
    %v2208 = vpop.f32.mrf.mxu0
    %2209 = vdwg.mxu0
    %v2210 = vmul.f32 %v2197, 0.5
    %v2211 = vmul.f32 %v2199, 0.5
    %v2212 = vmul.f32 %v2202, 0.5
    %v2213 = vmul.f32 %v2204, 0.5
    %v2214 = vmul.f32 %v2207, 0.5
    %v2215 = vmul.f32 %v2197, 0.044715
    %v2216 = vmul.f32 %v2199, 0.044715
    %v2217 = vmul.f32 %v2202, 0.044715
    %v2218 = vmul.f32 %v2204, 0.044715
    %v2219 = vmul.f32 %v2207, 0.044715
    %v2220 = vmul.f32 %v2215, %v2197
    %v2221 = vmul.f32 %v2216, %v2199
    %v2222 = vmul.f32 %v2217, %v2202
    %v2223 = vmul.f32 %v2218, %v2204
    %v2224 = vmul.f32 %v2219, %v2207
    %v2225 = vmul.f32 %v2220, %v2197
    %v2226 = vmul.f32 %v2221, %v2199
    %v2227 = vmul.f32 %v2222, %v2202
    %v2228 = vmul.f32 %v2223, %v2204
    %v2229 = vmul.f32 %v2224, %v2207
    %v2230 = vadd.f32 %v2197, %v2225
    %v2231 = vadd.f32 %v2199, %v2226
    %v2232 = vadd.f32 %v2202, %v2227
    %v2233 = vadd.f32 %v2204, %v2228
    %v2234 = vadd.f32 %v2207, %v2229
    %v2235 = vmul.f32 %v2230, 0.7978846
    %v2236 = vmul.f32 %v2231, 0.7978846
    %v2237 = vmul.f32 %v2232, 0.7978846
    %v2238 = vmul.f32 %v2233, 0.7978846
    %v2239 = vmul.f32 %v2234, 0.7978846
    %v2240 = vtanh.pop %v2235
    %v2241 = vtanh.pop %v2236
    %v2242 = vtanh.pop %v2237
    %v2243 = vtanh.pop %v2238
    %v2244 = vtanh.pop %v2239
    %v2245 = vadd.f32 %v2240, 1.0
    %v2246 = vadd.f32 %v2241, 1.0
    %v2247 = vadd.f32 %v2242, 1.0
    %v2248 = vadd.f32 %v2243, 1.0
    %v2249 = vadd.f32 %v2244, 1.0
    %v2250 = vmul.f32 %v2210, %v2245
    %v2251 = vmul.f32 %v2211, %v2246
    %v2252 = vmul.f32 %v2212, %v2247
    %v2253 = vmul.f32 %v2213, %v2248
    %v2254 = vmul.f32 %v2214, %v2249
    %v2255 = vpack.c.bf16 %v2251, %v2250
    %v2256 = vpack.c.bf16 %v2253, %v2252
    %v2257 = vpack.c.bf16 %v2254, %v2254
    %v2258 = vld [vmem:[%s14] sm:$0xf]
    %v2259 = vld [vmem:[%s14 + $0x4] sm:$0xf]
    %v2260 = vld [vmem:[%s14 + $0x8] sm:$0xf]
    %v2261 = vld [vmem:[%s14 + $0xc] sm:$0xf]
    %v2262 = vld [vmem:[%s14 + $0x10] sm:$0xf]
    %v2263 = vld [vmem:[%s14 + $0x14] sm:$0xf]
    %v2264 = vld [vmem:[%s14 + $0x18] sm:$0xf]
    %v2265 = vld [vmem:[%s14 + $0x1c] sm:$0xf]
    %v2266 = vld [vmem:[%s15] sm:$0x1]
    %v2268 = vperm.slane %v2266, 0
    %v2278 = vunpack.c.l.b16 %v2258
    %v2279 = vunpack.c.l.b16 %v2259
    %v2280 = vunpack.c.l.b16 %v2260
    %v2281 = vunpack.c.l.b16 %v2261
    %v2282 = vunpack.c.l.b16 %v2262
    %v2283 = vunpack.c.l.b16 %v2263
    %v2284 = vunpack.c.l.b16 %v2264
    %v2285 = vunpack.c.l.b16 %v2265
    %v2286 = vpack.c.b16 %v2279, %v2278
    %v2287 = vpack.c.b16 %v2281, %v2280
    %v2288 = vpack.c.b16 %v2283, %v2282
    %v2289 = vpack.c.b16 %v2285, %v2284
    %v2295 = vsel %vm141, %v2255, 0
    %v2298 = vsel %vm141, %v2256, 0
    %v2301 = vsel %vm141, %v2257, 0
    %2303 = vmatpush.bf16.msra.mxu0 0
    %2304 = vmatpush.bf16.msra.mxu0 0
    %2305 = vmatpush.bf16.msra.mxu0 0
    %2306 = vmatpush.bf16.msra.mxu0 0
    %2307 = vmatpush.bf16.msra.mxu0 %v2289
    %2308 = vmatpush.bf16.msra.mxu0 %v2288
    %2309 = vmatpush.bf16.msra.mxu0 %v2287
    %2310 = vmatpush.bf16.msra.mxu0 %v2286
    %2311 = vmatmul.bf16.gmra.mxu0 %v2295
    %v2312 = vpop.f32.mrf.mxu0
    %v2313 = vadd.f32 %v2268, %v2312
    %v2314 = vpop.f32.mrf.mxu0
    %v2315 = vadd.f32 %v2268, %v2314
    %2316 = vmatmul.bf16.gmra.mxu0 %v2298
    %v2317 = vpop.f32.mrf.mxu0
    %v2318 = vadd.f32 %v2268, %v2317
    %v2319 = vpop.f32.mrf.mxu0
    %v2320 = vadd.f32 %v2268, %v2319
    %2321 = vmatmul.bf16.gmra.mxu0 %v2301
    %v2322 = vpop.f32.mrf.mxu0
    %v2323 = vadd.f32 %v2268, %v2322
    %v2324 = vpop.f32.mrf.mxu0
    %2325 = vdwg.mxu0
    %v2326 = vadd.f32 %v2313, %v2134
    %v2327 = vadd.f32 %v2315, %v2135
    %v2328 = vadd.f32 %v2318, %v2136
    %v2329 = vadd.f32 %v2320, %v2137
    %v2330 = vadd.f32 %v2323, %v2138
    %s2331 = scalar_lea.vmem %s6, 2
    %v2332 = vld [vmem:[%s2331] sm:$0x1]
    %s2333 = scalar_lea.vmem %s7, 2
    %v2334 = vld [vmem:[%s2333] sm:$0x1]
    %v2335 = vsel %vm141, %v2326, 0.0
    %2336 = vadd.xlane.f32.xlu0 %v2335
    %v2337 = vpop.xlane.xlu0 %2336
    %v2338 = vsel %vm141, %v2327, 0.0
    %2339 = vadd.xlane.f32.xlu0 %v2338
    %v2340 = vpop.xlane.xlu0 %2339
    %v2341 = vsel %vm141, %v2328, 0.0
    %2342 = vadd.xlane.f32.xlu0 %v2341
    %v2343 = vpop.xlane.xlu0 %2342
    %v2344 = vsel %vm141, %v2329, 0.0
    %2345 = vadd.xlane.f32.xlu0 %v2344
    %v2346 = vpop.xlane.xlu0 %2345
    %v2347 = vsel %vm154, %v2330, 0.0
    %2348 = vadd.xlane.f32.xlu0 %v2347
    %v2349 = vpop.xlane.xlu0 %2348
    %v2350 = vmul.f32 %v2337, %v164
    %v2351 = vmul.f32 %v2340, %v164
    %v2352 = vmul.f32 %v2343, %v164
    %v2353 = vmul.f32 %v2346, %v164
    %v2354 = vmul.f32 %v2349, %v164
    %v2355 = vsub.f32 %v2326, %v2350
    %v2356 = vsub.f32 %v2327, %v2351
    %v2357 = vsub.f32 %v2328, %v2352
    %v2358 = vsub.f32 %v2329, %v2353
    %v2359 = vsub.f32 %v2330, %v2354
    %v2360 = vmul.f32 %v2355, %v2355
    %v2361 = vmul.f32 %v2356, %v2356
    %v2362 = vmul.f32 %v2357, %v2357
    %v2363 = vmul.f32 %v2358, %v2358
    %v2364 = vmul.f32 %v2359, %v2359
    %v2365 = vsel %vm141, %v2360, 0.0
    %2366 = vadd.xlane.f32.xlu0 %v2365
    %v2367 = vpop.xlane.xlu0 %2366
    %v2368 = vsel %vm141, %v2361, 0.0
    %2369 = vadd.xlane.f32.xlu0 %v2368
    %v2370 = vpop.xlane.xlu0 %2369
    %v2371 = vsel %vm141, %v2362, 0.0
    %2372 = vadd.xlane.f32.xlu0 %v2371
    %v2373 = vpop.xlane.xlu0 %2372
    %v2374 = vsel %vm141, %v2363, 0.0
    %2375 = vadd.xlane.f32.xlu0 %v2374
    %v2376 = vpop.xlane.xlu0 %2375
    %v2377 = vsel %vm154, %v2364, 0.0
    %2378 = vadd.xlane.f32.xlu0 %v2377
    %v2379 = vpop.xlane.xlu0 %2378
    %v2380 = vmul.f32 %v2367, %v164
    %v2381 = vmul.f32 %v2370, %v164
    %v2382 = vmul.f32 %v2373, %v164
    %v2383 = vmul.f32 %v2376, %v164
    %v2384 = vmul.f32 %v2379, %v164
    %v2385 = vadd.f32 %v2380, 1e-05
    %v2386 = vadd.f32 %v2381, 1e-05
    %v2387 = vadd.f32 %v2382, 1e-05
    %v2388 = vadd.f32 %v2383, 1e-05
    %v2389 = vadd.f32 %v2384, 1e-05
    %v2390 = vrsqrt.pop %v2385
    %v2391 = vmul.f32 %v2390, %v2385
    %v2392 = vmul.f32 %v2391, %v2390
    %v2393 = vmul.f32 0.5, %v2392
    %v2394 = vsub.f32 1.5, %v2393
    %v2395 = vmul.f32 %v2390, %v2394
    %vm2396 = vweird.f32 %v2385
    %vm2397 = vweird.f32 %v2390
    %vm2398 = vmor %vm2396, %vm2397
    %v2399 = vsel %vm2398, %v2390, %v2395
    %v2400 = vrsqrt.pop %v2386
    %v2401 = vmul.f32 %v2400, %v2386
    %v2402 = vmul.f32 %v2401, %v2400
    %v2403 = vmul.f32 0.5, %v2402
    %v2404 = vsub.f32 1.5, %v2403
    %v2405 = vmul.f32 %v2400, %v2404
    %vm2406 = vweird.f32 %v2386
    %vm2407 = vweird.f32 %v2400
    %vm2408 = vmor %vm2406, %vm2407
    %v2409 = vsel %vm2408, %v2400, %v2405
    %v2410 = vrsqrt.pop %v2387
    %v2411 = vmul.f32 %v2410, %v2387
    %v2412 = vmul.f32 %v2411, %v2410
    %v2413 = vmul.f32 0.5, %v2412
    %v2414 = vsub.f32 1.5, %v2413
    %v2415 = vmul.f32 %v2410, %v2414
    %vm2416 = vweird.f32 %v2387
    %vm2417 = vweird.f32 %v2410
    %vm2418 = vmor %vm2416, %vm2417
    %v2419 = vsel %vm2418, %v2410, %v2415
    %v2420 = vrsqrt.pop %v2388
    %v2421 = vmul.f32 %v2420, %v2388
    %v2422 = vmul.f32 %v2421, %v2420
    %v2423 = vmul.f32 0.5, %v2422
    %v2424 = vsub.f32 1.5, %v2423
    %v2425 = vmul.f32 %v2420, %v2424
    %vm2426 = vweird.f32 %v2388
    %vm2427 = vweird.f32 %v2420
    %vm2428 = vmor %vm2426, %vm2427
    %v2429 = vsel %vm2428, %v2420, %v2425
    %v2430 = vrsqrt.pop %v2389
    %v2431 = vmul.f32 %v2430, %v2389
    %v2432 = vmul.f32 %v2431, %v2430
    %v2433 = vmul.f32 0.5, %v2432
    %v2434 = vsub.f32 1.5, %v2433
    %v2435 = vmul.f32 %v2430, %v2434
    %vm2436 = vweird.f32 %v2389
    %vm2437 = vweird.f32 %v2430
    %vm2438 = vmor %vm2436, %vm2437
    %v2439 = vsel %vm2438, %v2430, %v2435
    %v2440 = vmul.f32 %v2355, %v2399
    %v2441 = vmul.f32 %v2356, %v2409
    %v2442 = vmul.f32 %v2357, %v2419
    %v2443 = vmul.f32 %v2358, %v2429
    %v2444 = vmul.f32 %v2359, %v2439
    %v2446 = vperm.slane %v2332, 0
    %v2448 = vmul.f32 %v2440, %v2446
    %v2449 = vmul.f32 %v2441, %v2446
    %v2450 = vmul.f32 %v2442, %v2446
    %v2451 = vmul.f32 %v2443, %v2446
    %v2452 = vmul.f32 %v2444, %v2446
    %v2454 = vperm.slane %v2334, 0
    %v2456 = vadd.f32 %v2448, %v2454
    %v2457 = vadd.f32 %v2449, %v2454
    %v2458 = vadd.f32 %v2450, %v2454
    %v2459 = vadd.f32 %v2451, %v2454
    %v2460 = vadd.f32 %v2452, %v2454
    %v2461 = vpack.c.bf16 %v2457, %v2456
    %v2462 = vpack.c.bf16 %v2459, %v2458
    %v2463 = vpack.c.bf16 %v2460, %v2460
    %s2464 = scalar_lea.vmem %s8, 64
    %v2465 = vld [vmem:[%s2464] sm:$0xff]
    %v2466 = vld [vmem:[%s2464 + $0x8] sm:$0xff]
    %v2467 = vld [vmem:[%s2464 + $0x10] sm:$0xff]
    %v2468 = vld [vmem:[%s2464 + $0x18] sm:$0xff]
    %v2469 = vld [vmem:[%s2464 + $0x20] sm:$0xff]
    %v2470 = vld [vmem:[%s2464 + $0x28] sm:$0xff]
    %v2471 = vld [vmem:[%s2464 + $0x30] sm:$0xff]
    %v2472 = vld [vmem:[%s2464 + $0x38] sm:$0xff]
    %s2473 = scalar_lea.vmem %s9, 2
    %v2474 = vld [vmem:[%s2473] sm:$0x3]
    %v2476 = vperm.slane %v2474, 0
    %v2477 = vperm.slane %v2474, 1
    %v2488 = vunpack.c.l.b16 %v2465
    %v2489 = vunpack.c.h.b16 %v2465
    %v2490 = vunpack.c.l.b16 %v2466
    %v2491 = vunpack.c.h.b16 %v2466
    %v2492 = vunpack.c.l.b16 %v2467
    %v2493 = vunpack.c.h.b16 %v2467
    %v2494 = vunpack.c.l.b16 %v2468
    %v2495 = vunpack.c.h.b16 %v2468
    %v2496 = vunpack.c.l.b16 %v2469
    %v2497 = vunpack.c.h.b16 %v2469
    %v2498 = vunpack.c.l.b16 %v2470
    %v2499 = vunpack.c.h.b16 %v2470
    %v2500 = vunpack.c.l.b16 %v2471
    %v2501 = vunpack.c.h.b16 %v2471
    %v2502 = vunpack.c.l.b16 %v2472
    %v2503 = vunpack.c.h.b16 %v2472
    %v2504 = vpack.c.b16 %v2490, %v2488
    %v2505 = vpack.c.b16 %v2491, %v2489
    %v2506 = vpack.c.b16 %v2494, %v2492
    %v2507 = vpack.c.b16 %v2495, %v2493
    %v2508 = vpack.c.b16 %v2498, %v2496
    %v2509 = vpack.c.b16 %v2499, %v2497
    %v2510 = vpack.c.b16 %v2502, %v2500
    %v2511 = vpack.c.b16 %v2503, %v2501
    %v2521 = vsel %vm141, %v2461, 0
    %v2524 = vsel %vm141, %v2462, 0
    %v2527 = vsel %vm141, %v2463, 0
    %2529 = vmatpush.bf16.msra.mxu0 0
    %2530 = vmatpush.bf16.msra.mxu0 0
    %2531 = vmatpush.bf16.msra.mxu0 0
    %2532 = vmatpush.bf16.msra.mxu0 0
    %2533 = vmatpush.bf16.msra.mxu0 %v2510
    %2534 = vmatpush.bf16.msra.mxu0 %v2508
    %2535 = vmatpush.bf16.msra.mxu0 %v2506
    %2536 = vmatpush.bf16.msra.mxu0 %v2504
    %2537 = vmatmul.bf16.gmra.mxu0 %v2521
    %v2538 = vpop.f32.mrf.mxu0
    %v2539 = vadd.f32 %v2476, %v2538
    %v2540 = vpop.f32.mrf.mxu0
    %v2541 = vadd.f32 %v2476, %v2540
    %2542 = vmatmul.bf16.gmra.mxu0 %v2524
    %v2543 = vpop.f32.mrf.mxu0
    %v2544 = vadd.f32 %v2476, %v2543
    %v2545 = vpop.f32.mrf.mxu0
    %v2546 = vadd.f32 %v2476, %v2545
    %2547 = vmatmul.bf16.gmra.mxu0 %v2527
    %v2548 = vpop.f32.mrf.mxu0
    %v2549 = vadd.f32 %v2476, %v2548
    %v2550 = vpop.f32.mrf.mxu0
    %2551 = vdwg.mxu0
    %2552 = vmatpush.bf16.msra.mxu0 0
    %2553 = vmatpush.bf16.msra.mxu0 0
    %2554 = vmatpush.bf16.msra.mxu0 0
    %2555 = vmatpush.bf16.msra.mxu0 0
    %2556 = vmatpush.bf16.msra.mxu0 %v2511
    %2557 = vmatpush.bf16.msra.mxu0 %v2509
    %2558 = vmatpush.bf16.msra.mxu0 %v2507
    %2559 = vmatpush.bf16.msra.mxu0 %v2505
    %2560 = vmatmul.bf16.gmra.mxu0 %v2521
    %v2561 = vpop.f32.mrf.mxu0
    %v2562 = vadd.f32 %v2477, %v2561
    %v2563 = vpop.f32.mrf.mxu0
    %v2564 = vadd.f32 %v2477, %v2563
    %2565 = vmatmul.bf16.gmra.mxu0 %v2524
    %v2566 = vpop.f32.mrf.mxu0
    %v2567 = vadd.f32 %v2477, %v2566
    %v2568 = vpop.f32.mrf.mxu0
    %v2569 = vadd.f32 %v2477, %v2568
    %2570 = vmatmul.bf16.gmra.mxu0 %v2527
    %v2571 = vpop.f32.mrf.mxu0
    %v2572 = vadd.f32 %v2477, %v2571
    %v2573 = vpop.f32.mrf.mxu0
    %2574 = vdwg.mxu0
    %v2575 = vpack.c.bf16 %v2539, %v2539
    %v2576 = vpack.c.bf16 %v2541, %v2541
    %v2577 = vpack.c.bf16 %v2544, %v2544
    %v2578 = vpack.c.bf16 %v2546, %v2546
    %v2579 = vpack.c.bf16 %v2549, %v2549
    %v2580 = vpack.c.bf16 %v2562, %v2562
    %v2581 = vpack.c.bf16 %v2564, %v2564
    %v2582 = vpack.c.bf16 %v2567, %v2567
    %v2583 = vpack.c.bf16 %v2569, %v2569
    %v2584 = vpack.c.bf16 %v2572, %v2572
    %s2585 = scalar_lea.vmem %s10, 32
    %v2586 = vld [vmem:[%s2585] sm:$0xf]
    %v2587 = vld [vmem:[%s2585 + $0x4] sm:$0xf]
    %v2588 = vld [vmem:[%s2585 + $0x8] sm:$0xf]
    %v2589 = vld [vmem:[%s2585 + $0xc] sm:$0xf]
    %v2590 = vld [vmem:[%s2585 + $0x10] sm:$0xf]
    %v2591 = vld [vmem:[%s2585 + $0x14] sm:$0xf]
    %v2592 = vld [vmem:[%s2585 + $0x18] sm:$0xf]
    %v2593 = vld [vmem:[%s2585 + $0x1c] sm:$0xf]
    %v2599 = vunpack.c.l.b16 %v2575
    %v2600 = vunpack.c.l.b16 %v2576
    %v2601 = vunpack.c.l.b16 %v2577
    %v2602 = vunpack.c.l.b16 %v2578
    %v2603 = vunpack.c.l.b16 %v2579
    %v2604 = vpack.c.b16 %v2600, %v2599
    %v2605 = vpack.c.b16 %v2602, %v2601
    %v2606 = vpack.c.b16 %v2603, %v2603
    %2607 = vrot.lane.b32.xlu0 %v2604, 64
    %v2608 = vpop.permute.xlu0 %2607
    %2609 = vrot.lane.b32.xlu0 %v2605, 64
    %v2610 = vpop.permute.xlu0 %2609
    %2611 = vrot.lane.b32.xlu0 %v2606, 64
    %v2612 = vpop.permute.xlu0 %2611
    %v2614 = vsel %vm430, %v2604, 0
    %v2617 = vsel %vm430, %v2605, 0
    %v2620 = vsel %vm430, %v2606, 0
    %v2623 = vsel %vm430, %v2608, 0
    %v2626 = vsel %vm430, %v2610, 0
    %v2629 = vsel %vm430, %v2612, 0
    %2631 = vmatpush.bf16.xpose.msra.mxu0 0
    %2632 = vmatpush.bf16.xpose.msra.mxu0 0
    %2633 = vmatpush.bf16.xpose.msra.mxu0 0
    %2634 = vmatpush.bf16.xpose.msra.mxu0 0
    %2635 = vmatpush.bf16.xpose.msra.mxu0 0
    %2636 = vmatpush.bf16.xpose.msra.mxu0 %v2629
    %2637 = vmatpush.bf16.xpose.msra.mxu0 %v2626
    %2638 = vmatpush.bf16.xpose.msra.mxu0 %v2623
    %2639 = vmatmul.bf16.gmra.mxu0 %v2614
    %v2640 = vpop.f32.mrf.mxu0
    %v2641 = vadd.f32 %v406, %v2640
    %v2642 = vpop.f32.mrf.mxu0
    %v2643 = vadd.f32 %v407, %v2642
    %2644 = vmatmul.bf16.gmra.mxu0 %v2617
    %v2645 = vpop.f32.mrf.mxu0
    %v2646 = vadd.f32 %v408, %v2645
    %v2647 = vpop.f32.mrf.mxu0
    %v2648 = vadd.f32 %v409, %v2647
    %2649 = vmatmul.bf16.gmra.mxu0 %v2620
    %v2650 = vpop.f32.mrf.mxu0
    %v2651 = vadd.f32 %v410, %v2650
    %v2652 = vpop.f32.mrf.mxu0
    %2653 = vdwg.mxu0
    %v2654 = vsel %vm472, %v2641, -inf
    %2655 = vmax.xlane.f32.xlu0 %v2654
    %v2656 = vpop.xlane.xlu0 %2655
    %v2657 = vsel %vm472, %v2643, -inf
    %2658 = vmax.xlane.f32.xlu0 %v2657
    %v2659 = vpop.xlane.xlu0 %2658
    %v2660 = vsel %vm472, %v2646, -inf
    %2661 = vmax.xlane.f32.xlu0 %v2660
    %v2662 = vpop.xlane.xlu0 %2661
    %v2663 = vsel %vm472, %v2648, -inf
    %2664 = vmax.xlane.f32.xlu0 %v2663
    %v2665 = vpop.xlane.xlu0 %2664
    %v2666 = vsel %vm485, %v2651, -inf
    %2667 = vmax.xlane.f32.xlu0 %v2666
    %v2668 = vpop.xlane.xlu0 %2667
    %v2669 = vsub.f32 %v2641, %v2656
    %v2670 = vsub.f32 %v2643, %v2659
    %v2671 = vsub.f32 %v2646, %v2662
    %v2672 = vsub.f32 %v2648, %v2665
    %v2673 = vsub.f32 %v2651, %v2668
    %v2674 = vmul.f32 %v2669, 1.442695
    %v2675 = vpow.pop %v2674
    %v2676 = vmul.f32 %v2670, 1.442695
    %v2677 = vpow.pop %v2676
    %v2678 = vmul.f32 %v2671, 1.442695
    %v2679 = vpow.pop %v2678
    %v2680 = vmul.f32 %v2672, 1.442695
    %v2681 = vpow.pop %v2680
    %v2682 = vmul.f32 %v2673, 1.442695
    %v2683 = vpow.pop %v2682
    %v2684 = vsel %vm472, %v2675, 0.0
    %2685 = vadd.xlane.f32.xlu0 %v2684
    %v2686 = vpop.xlane.xlu0 %2685
    %v2687 = vsel %vm472, %v2677, 0.0
    %2688 = vadd.xlane.f32.xlu0 %v2687
    %v2689 = vpop.xlane.xlu0 %2688
    %v2690 = vsel %vm472, %v2679, 0.0
    %2691 = vadd.xlane.f32.xlu0 %v2690
    %v2692 = vpop.xlane.xlu0 %2691
    %v2693 = vsel %vm472, %v2681, 0.0
    %2694 = vadd.xlane.f32.xlu0 %v2693
    %v2695 = vpop.xlane.xlu0 %2694
    %v2696 = vsel %vm485, %v2683, 0.0
    %2697 = vadd.xlane.f32.xlu0 %v2696
    %v2698 = vpop.xlane.xlu0 %2697
    %v2699 = vrcp.pop %v2686
    %v2700 = vrcp.pop %v2689
    %v2701 = vrcp.pop %v2692
    %v2702 = vrcp.pop %v2695
    %v2703 = vrcp.pop %v2698
    %v2704 = vmul.f32 %v2675, %v2699
    %v2705 = vmul.f32 %v2677, %v2700
    %v2706 = vmul.f32 %v2679, %v2701
    %v2707 = vmul.f32 %v2681, %v2702
    %v2708 = vmul.f32 %v2683, %v2703
    %v2709 = vpack.c.bf16 %v2705, %v2704
    %v2710 = vpack.c.bf16 %v2707, %v2706
    %v2711 = vpack.c.bf16 %v2708, %v2708
    %v2717 = vunpack.c.l.b16 %v2580
    %v2718 = vunpack.c.l.b16 %v2581
    %v2719 = vunpack.c.l.b16 %v2582
    %v2720 = vunpack.c.l.b16 %v2583
    %v2721 = vunpack.c.l.b16 %v2584
    %v2722 = vpack.c.b16 %v2718, %v2717
    %v2723 = vpack.c.b16 %v2720, %v2719
    %v2724 = vpack.c.b16 %v2721, %v2721
    %v2728 = vsel %vm472, %v2709, 0
    %v2731 = vsel %vm472, %v2710, 0
    %v2734 = vsel %vm472, %v2711, 0
    %v2737 = vsel %vm117, %v2724, 0
    %2739 = vmatpush.bf16.msra.mxu0 0
    %2740 = vmatpush.bf16.msra.mxu0 0
    %2741 = vmatpush.bf16.msra.mxu0 0
    %2742 = vmatpush.bf16.msra.mxu0 0
    %2743 = vmatpush.bf16.msra.mxu0 0
    %2744 = vmatpush.bf16.msra.mxu0 %v2737
    %2745 = vmatpush.bf16.msra.mxu0 %v2723
    %2746 = vmatpush.bf16.msra.mxu0 %v2722
    %2747 = vmatmul.bf16.gmra.mxu0 %v2728
    %v2748 = vpop.f32.mrf.mxu0
    %v2749 = vadd.f32 0.0, %v2748
    %v2750 = vpop.f32.mrf.mxu0
    %v2751 = vadd.f32 0.0, %v2750
    %2752 = vmatmul.bf16.gmra.mxu0 %v2731
    %v2753 = vpop.f32.mrf.mxu0
    %v2754 = vadd.f32 0.0, %v2753
    %v2755 = vpop.f32.mrf.mxu0
    %v2756 = vadd.f32 0.0, %v2755
    %2757 = vmatmul.bf16.gmra.mxu0 %v2734
    %v2758 = vpop.f32.mrf.mxu0
    %v2759 = vadd.f32 0.0, %v2758
    %v2760 = vpop.f32.mrf.mxu0
    %2761 = vdwg.mxu0
    %v2762 = vpack.c.bf16 %v2751, %v2749
    %v2763 = vpack.c.bf16 %v2756, %v2754
    %v2764 = vpack.c.bf16 %v2759, %v2759
    %2765 = vrot.lane.b32.xlu0 %v2604, 120
    %v2766 = vpop.permute.xlu0 %2765
    %2767 = vrot.lane.b32.xlu0 %v2605, 120
    %v2768 = vpop.permute.xlu0 %2767
    %2769 = vrot.lane.b32.xlu0 %v2606, 120
    %v2770 = vpop.permute.xlu0 %2769
    %2771 = vrot.lane.b32.xlu0 %v2604, 56
    %v2772 = vpop.permute.xlu0 %2771
    %2773 = vrot.lane.b32.xlu0 %v2605, 56
    %v2774 = vpop.permute.xlu0 %2773
    %2775 = vrot.lane.b32.xlu0 %v2606, 56
    %v2776 = vpop.permute.xlu0 %2775
    %v2778 = vsel %vm430, %v2766, 0
    %v2781 = vsel %vm430, %v2768, 0
    %v2784 = vsel %vm430, %v2770, 0
    %v2787 = vsel %vm430, %v2772, 0
    %v2790 = vsel %vm430, %v2774, 0
    %v2793 = vsel %vm430, %v2776, 0
    %2795 = vmatpush.bf16.xpose.msra.mxu0 0
    %2796 = vmatpush.bf16.xpose.msra.mxu0 0
    %2797 = vmatpush.bf16.xpose.msra.mxu0 0
    %2798 = vmatpush.bf16.xpose.msra.mxu0 0
    %2799 = vmatpush.bf16.xpose.msra.mxu0 0
    %2800 = vmatpush.bf16.xpose.msra.mxu0 %v2793
    %2801 = vmatpush.bf16.xpose.msra.mxu0 %v2790
    %2802 = vmatpush.bf16.xpose.msra.mxu0 %v2787
    %2803 = vmatmul.bf16.gmra.mxu0 %v2778
    %v2804 = vpop.f32.mrf.mxu0
    %v2805 = vadd.f32 %v406, %v2804
    %v2806 = vpop.f32.mrf.mxu0
    %v2807 = vadd.f32 %v407, %v2806
    %2808 = vmatmul.bf16.gmra.mxu0 %v2781
    %v2809 = vpop.f32.mrf.mxu0
    %v2810 = vadd.f32 %v408, %v2809
    %v2811 = vpop.f32.mrf.mxu0
    %v2812 = vadd.f32 %v409, %v2811
    %2813 = vmatmul.bf16.gmra.mxu0 %v2784
    %v2814 = vpop.f32.mrf.mxu0
    %v2815 = vadd.f32 %v410, %v2814
    %v2816 = vpop.f32.mrf.mxu0
    %2817 = vdwg.mxu0
    %v2818 = vsel %vm472, %v2805, -inf
    %2819 = vmax.xlane.f32.xlu0 %v2818
    %v2820 = vpop.xlane.xlu0 %2819
    %v2821 = vsel %vm472, %v2807, -inf
    %2822 = vmax.xlane.f32.xlu0 %v2821
    %v2823 = vpop.xlane.xlu0 %2822
    %v2824 = vsel %vm472, %v2810, -inf
    %2825 = vmax.xlane.f32.xlu0 %v2824
    %v2826 = vpop.xlane.xlu0 %2825
    %v2827 = vsel %vm472, %v2812, -inf
    %2828 = vmax.xlane.f32.xlu0 %v2827
    %v2829 = vpop.xlane.xlu0 %2828
    %v2830 = vsel %vm485, %v2815, -inf
    %2831 = vmax.xlane.f32.xlu0 %v2830
    %v2832 = vpop.xlane.xlu0 %2831
    %v2833 = vsub.f32 %v2805, %v2820
    %v2834 = vsub.f32 %v2807, %v2823
    %v2835 = vsub.f32 %v2810, %v2826
    %v2836 = vsub.f32 %v2812, %v2829
    %v2837 = vsub.f32 %v2815, %v2832
    %v2838 = vmul.f32 %v2833, 1.442695
    %v2839 = vpow.pop %v2838
    %v2840 = vmul.f32 %v2834, 1.442695
    %v2841 = vpow.pop %v2840
    %v2842 = vmul.f32 %v2835, 1.442695
    %v2843 = vpow.pop %v2842
    %v2844 = vmul.f32 %v2836, 1.442695
    %v2845 = vpow.pop %v2844
    %v2846 = vmul.f32 %v2837, 1.442695
    %v2847 = vpow.pop %v2846
    %v2848 = vsel %vm472, %v2839, 0.0
    %2849 = vadd.xlane.f32.xlu0 %v2848
    %v2850 = vpop.xlane.xlu0 %2849
    %v2851 = vsel %vm472, %v2841, 0.0
    %2852 = vadd.xlane.f32.xlu0 %v2851
    %v2853 = vpop.xlane.xlu0 %2852
    %v2854 = vsel %vm472, %v2843, 0.0
    %2855 = vadd.xlane.f32.xlu0 %v2854
    %v2856 = vpop.xlane.xlu0 %2855
    %v2857 = vsel %vm472, %v2845, 0.0
    %2858 = vadd.xlane.f32.xlu0 %v2857
    %v2859 = vpop.xlane.xlu0 %2858
    %v2860 = vsel %vm485, %v2847, 0.0
    %2861 = vadd.xlane.f32.xlu0 %v2860
    %v2862 = vpop.xlane.xlu0 %2861
    %v2863 = vrcp.pop %v2850
    %v2864 = vrcp.pop %v2853
    %v2865 = vrcp.pop %v2856
    %v2866 = vrcp.pop %v2859
    %v2867 = vrcp.pop %v2862
    %v2868 = vmul.f32 %v2839, %v2863
    %v2869 = vmul.f32 %v2841, %v2864
    %v2870 = vmul.f32 %v2843, %v2865
    %v2871 = vmul.f32 %v2845, %v2866
    %v2872 = vmul.f32 %v2847, %v2867
    %v2873 = vpack.c.bf16 %v2869, %v2868
    %v2874 = vpack.c.bf16 %v2871, %v2870
    %v2875 = vpack.c.bf16 %v2872, %v2872
    %2876 = vrot.lane.b32.xlu0 %v2722, 120
    %v2877 = vpop.permute.xlu0 %2876
    %2878 = vrot.lane.b32.xlu0 %v2723, 120
    %v2879 = vpop.permute.xlu0 %2878
    %2880 = vrot.lane.b32.xlu0 %v2724, 120
    %v2881 = vpop.permute.xlu0 %2880
    %v2885 = vsel %vm472, %v2873, 0
    %v2888 = vsel %vm472, %v2874, 0
    %v2891 = vsel %vm472, %v2875, 0
    %v2894 = vsel %vm117, %v2881, 0
    %2896 = vmatpush.bf16.msra.mxu0 0
    %2897 = vmatpush.bf16.msra.mxu0 0
    %2898 = vmatpush.bf16.msra.mxu0 0
    %2899 = vmatpush.bf16.msra.mxu0 0
    %2900 = vmatpush.bf16.msra.mxu0 0
    %2901 = vmatpush.bf16.msra.mxu0 %v2894
    %2902 = vmatpush.bf16.msra.mxu0 %v2879
    %2903 = vmatpush.bf16.msra.mxu0 %v2877
    %2904 = vmatmul.bf16.gmra.mxu0 %v2885
    %v2905 = vpop.f32.mrf.mxu0
    %v2906 = vadd.f32 0.0, %v2905
    %v2907 = vpop.f32.mrf.mxu0
    %v2908 = vadd.f32 0.0, %v2907
    %2909 = vmatmul.bf16.gmra.mxu0 %v2888
    %v2910 = vpop.f32.mrf.mxu0
    %v2911 = vadd.f32 0.0, %v2910
    %v2912 = vpop.f32.mrf.mxu0
    %v2913 = vadd.f32 0.0, %v2912
    %2914 = vmatmul.bf16.gmra.mxu0 %v2891
    %v2915 = vpop.f32.mrf.mxu0
    %v2916 = vadd.f32 0.0, %v2915
    %v2917 = vpop.f32.mrf.mxu0
    %2918 = vdwg.mxu0
    %v2919 = vpack.c.bf16 %v2908, %v2906
    %v2920 = vpack.c.bf16 %v2913, %v2911
    %v2921 = vpack.c.bf16 %v2916, %v2916
    %v2923 = vsel %vm430, %v2919, 0
    %v2926 = vsel %vm430, %v2920, 0
    %v2929 = vsel %vm430, %v2921, 0
    %v2932 = vsel %vm751, %v2587, 0
    %2934 = vmatpush.bf16.msra.mxu0 0
    %2935 = vmatpush.bf16.msra.mxu0 0
    %2936 = vmatpush.bf16.msra.mxu0 0
    %2937 = vmatpush.bf16.msra.mxu0 0
    %2938 = vmatpush.bf16.msra.mxu0 0
    %2939 = vmatpush.bf16.msra.mxu0 0
    %2940 = vmatpush.bf16.msra.mxu0 0
    %2941 = vmatpush.bf16.msra.mxu0 %v2932
    %2942 = vmatmul.bf16.gmra.mxu0 %v2923
    %v2943 = vpop.f32.mrf.mxu0
    %v2944 = vadd.f32 0.0, %v2943
    %v2945 = vpop.f32.mrf.mxu0
    %v2946 = vadd.f32 0.0, %v2945
    %2947 = vmatmul.bf16.gmra.mxu0 %v2926
    %v2948 = vpop.f32.mrf.mxu0
    %v2949 = vadd.f32 0.0, %v2948
    %v2950 = vpop.f32.mrf.mxu0
    %v2951 = vadd.f32 0.0, %v2950
    %2952 = vmatmul.bf16.gmra.mxu0 %v2929
    %v2953 = vpop.f32.mrf.mxu0
    %v2954 = vadd.f32 0.0, %v2953
    %v2955 = vpop.f32.mrf.mxu0
    %2956 = vdwg.mxu0
    %v2958 = vsel %vm430, %v2762, 0
    %v2961 = vsel %vm430, %v2763, 0
    %v2964 = vsel %vm430, %v2764, 0
    %v2967 = vsel %vm751, %v2586, 0
    %2969 = vmatpush.bf16.msra.mxu0 0
    %2970 = vmatpush.bf16.msra.mxu0 0
    %2971 = vmatpush.bf16.msra.mxu0 0
    %2972 = vmatpush.bf16.msra.mxu0 0
    %2973 = vmatpush.bf16.msra.mxu0 0
    %2974 = vmatpush.bf16.msra.mxu0 0
    %2975 = vmatpush.bf16.msra.mxu0 0
    %2976 = vmatpush.bf16.msra.mxu0 %v2967
    %2977 = vmatmul.bf16.gmra.mxu0 %v2958
    %v2978 = vpop.f32.mrf.mxu0
    %v2979 = vadd.f32 %v2944, %v2978
    %v2980 = vpop.f32.mrf.mxu0
    %v2981 = vadd.f32 %v2946, %v2980
    %2982 = vmatmul.bf16.gmra.mxu0 %v2961
    %v2983 = vpop.f32.mrf.mxu0
    %v2984 = vadd.f32 %v2949, %v2983
    %v2985 = vpop.f32.mrf.mxu0
    %v2986 = vadd.f32 %v2951, %v2985
    %2987 = vmatmul.bf16.gmra.mxu0 %v2964
    %v2988 = vpop.f32.mrf.mxu0
    %v2989 = vadd.f32 %v2954, %v2988
    %v2990 = vpop.f32.mrf.mxu0
    %2991 = vdwg.mxu0
    %2992 = vrot.lane.b32.xlu0 %v2604, 112
    %v2993 = vpop.permute.xlu0 %2992
    %2994 = vrot.lane.b32.xlu0 %v2605, 112
    %v2995 = vpop.permute.xlu0 %2994
    %2996 = vrot.lane.b32.xlu0 %v2606, 112
    %v2997 = vpop.permute.xlu0 %2996
    %2998 = vrot.lane.b32.xlu0 %v2604, 48
    %v2999 = vpop.permute.xlu0 %2998
    %3000 = vrot.lane.b32.xlu0 %v2605, 48
    %v3001 = vpop.permute.xlu0 %3000
    %3002 = vrot.lane.b32.xlu0 %v2606, 48
    %v3003 = vpop.permute.xlu0 %3002
    %v3005 = vsel %vm430, %v2993, 0
    %v3008 = vsel %vm430, %v2995, 0
    %v3011 = vsel %vm430, %v2997, 0
    %v3014 = vsel %vm430, %v2999, 0
    %v3017 = vsel %vm430, %v3001, 0
    %v3020 = vsel %vm430, %v3003, 0
    %3022 = vmatpush.bf16.xpose.msra.mxu0 0
    %3023 = vmatpush.bf16.xpose.msra.mxu0 0
    %3024 = vmatpush.bf16.xpose.msra.mxu0 0
    %3025 = vmatpush.bf16.xpose.msra.mxu0 0
    %3026 = vmatpush.bf16.xpose.msra.mxu0 0
    %3027 = vmatpush.bf16.xpose.msra.mxu0 %v3020
    %3028 = vmatpush.bf16.xpose.msra.mxu0 %v3017
    %3029 = vmatpush.bf16.xpose.msra.mxu0 %v3014
    %3030 = vmatmul.bf16.gmra.mxu0 %v3005
    %v3031 = vpop.f32.mrf.mxu0
    %v3032 = vadd.f32 %v406, %v3031
    %v3033 = vpop.f32.mrf.mxu0
    %v3034 = vadd.f32 %v407, %v3033
    %3035 = vmatmul.bf16.gmra.mxu0 %v3008
    %v3036 = vpop.f32.mrf.mxu0
    %v3037 = vadd.f32 %v408, %v3036
    %v3038 = vpop.f32.mrf.mxu0
    %v3039 = vadd.f32 %v409, %v3038
    %3040 = vmatmul.bf16.gmra.mxu0 %v3011
    %v3041 = vpop.f32.mrf.mxu0
    %v3042 = vadd.f32 %v410, %v3041
    %v3043 = vpop.f32.mrf.mxu0
    %3044 = vdwg.mxu0
    %v3045 = vsel %vm472, %v3032, -inf
    %3046 = vmax.xlane.f32.xlu0 %v3045
    %v3047 = vpop.xlane.xlu0 %3046
    %v3048 = vsel %vm472, %v3034, -inf
    %3049 = vmax.xlane.f32.xlu0 %v3048
    %v3050 = vpop.xlane.xlu0 %3049
    %v3051 = vsel %vm472, %v3037, -inf
    %3052 = vmax.xlane.f32.xlu0 %v3051
    %v3053 = vpop.xlane.xlu0 %3052
    %v3054 = vsel %vm472, %v3039, -inf
    %3055 = vmax.xlane.f32.xlu0 %v3054
    %v3056 = vpop.xlane.xlu0 %3055
    %v3057 = vsel %vm485, %v3042, -inf
    %3058 = vmax.xlane.f32.xlu0 %v3057
    %v3059 = vpop.xlane.xlu0 %3058
    %v3060 = vsub.f32 %v3032, %v3047
    %v3061 = vsub.f32 %v3034, %v3050
    %v3062 = vsub.f32 %v3037, %v3053
    %v3063 = vsub.f32 %v3039, %v3056
    %v3064 = vsub.f32 %v3042, %v3059
    %v3065 = vmul.f32 %v3060, 1.442695
    %v3066 = vpow.pop %v3065
    %v3067 = vmul.f32 %v3061, 1.442695
    %v3068 = vpow.pop %v3067
    %v3069 = vmul.f32 %v3062, 1.442695
    %v3070 = vpow.pop %v3069
    %v3071 = vmul.f32 %v3063, 1.442695
    %v3072 = vpow.pop %v3071
    %v3073 = vmul.f32 %v3064, 1.442695
    %v3074 = vpow.pop %v3073
    %v3075 = vsel %vm472, %v3066, 0.0
    %3076 = vadd.xlane.f32.xlu0 %v3075
    %v3077 = vpop.xlane.xlu0 %3076
    %v3078 = vsel %vm472, %v3068, 0.0
    %3079 = vadd.xlane.f32.xlu0 %v3078
    %v3080 = vpop.xlane.xlu0 %3079
    %v3081 = vsel %vm472, %v3070, 0.0
    %3082 = vadd.xlane.f32.xlu0 %v3081
    %v3083 = vpop.xlane.xlu0 %3082
    %v3084 = vsel %vm472, %v3072, 0.0
    %3085 = vadd.xlane.f32.xlu0 %v3084
    %v3086 = vpop.xlane.xlu0 %3085
    %v3087 = vsel %vm485, %v3074, 0.0
    %3088 = vadd.xlane.f32.xlu0 %v3087
    %v3089 = vpop.xlane.xlu0 %3088
    %v3090 = vrcp.pop %v3077
    %v3091 = vrcp.pop %v3080
    %v3092 = vrcp.pop %v3083
    %v3093 = vrcp.pop %v3086
    %v3094 = vrcp.pop %v3089
    %v3095 = vmul.f32 %v3066, %v3090
    %v3096 = vmul.f32 %v3068, %v3091
    %v3097 = vmul.f32 %v3070, %v3092
    %v3098 = vmul.f32 %v3072, %v3093
    %v3099 = vmul.f32 %v3074, %v3094
    %v3100 = vpack.c.bf16 %v3096, %v3095
    %v3101 = vpack.c.bf16 %v3098, %v3097
    %v3102 = vpack.c.bf16 %v3099, %v3099
    %3103 = vrot.lane.b32.xlu0 %v2722, 112
    %v3104 = vpop.permute.xlu0 %3103
    %3105 = vrot.lane.b32.xlu0 %v2723, 112
    %v3106 = vpop.permute.xlu0 %3105
    %3107 = vrot.lane.b32.xlu0 %v2724, 112
    %v3108 = vpop.permute.xlu0 %3107
    %v3112 = vsel %vm472, %v3100, 0
    %v3115 = vsel %vm472, %v3101, 0
    %v3118 = vsel %vm472, %v3102, 0
    %v3121 = vsel %vm117, %v3108, 0
    %3123 = vmatpush.bf16.msra.mxu0 0
    %3124 = vmatpush.bf16.msra.mxu0 0
    %3125 = vmatpush.bf16.msra.mxu0 0
    %3126 = vmatpush.bf16.msra.mxu0 0
    %3127 = vmatpush.bf16.msra.mxu0 0
    %3128 = vmatpush.bf16.msra.mxu0 %v3121
    %3129 = vmatpush.bf16.msra.mxu0 %v3106
    %3130 = vmatpush.bf16.msra.mxu0 %v3104
    %3131 = vmatmul.bf16.gmra.mxu0 %v3112
    %v3132 = vpop.f32.mrf.mxu0
    %v3133 = vadd.f32 0.0, %v3132
    %v3134 = vpop.f32.mrf.mxu0
    %v3135 = vadd.f32 0.0, %v3134
    %3136 = vmatmul.bf16.gmra.mxu0 %v3115
    %v3137 = vpop.f32.mrf.mxu0
    %v3138 = vadd.f32 0.0, %v3137
    %v3139 = vpop.f32.mrf.mxu0
    %v3140 = vadd.f32 0.0, %v3139
    %3141 = vmatmul.bf16.gmra.mxu0 %v3118
    %v3142 = vpop.f32.mrf.mxu0
    %v3143 = vadd.f32 0.0, %v3142
    %v3144 = vpop.f32.mrf.mxu0
    %3145 = vdwg.mxu0
    %v3146 = vpack.c.bf16 %v3135, %v3133
    %v3147 = vpack.c.bf16 %v3140, %v3138
    %v3148 = vpack.c.bf16 %v3143, %v3143
    %v3150 = vsel %vm430, %v3146, 0
    %v3153 = vsel %vm430, %v3147, 0
    %v3156 = vsel %vm430, %v3148, 0
    %v3159 = vsel %vm751, %v2588, 0
    %3161 = vmatpush.bf16.msra.mxu0 0
    %3162 = vmatpush.bf16.msra.mxu0 0
    %3163 = vmatpush.bf16.msra.mxu0 0
    %3164 = vmatpush.bf16.msra.mxu0 0
    %3165 = vmatpush.bf16.msra.mxu0 0
    %3166 = vmatpush.bf16.msra.mxu0 0
    %3167 = vmatpush.bf16.msra.mxu0 0
    %3168 = vmatpush.bf16.msra.mxu0 %v3159
    %3169 = vmatmul.bf16.gmra.mxu0 %v3150
    %v3170 = vpop.f32.mrf.mxu0
    %v3171 = vadd.f32 0.0, %v3170
    %v3172 = vpop.f32.mrf.mxu0
    %v3173 = vadd.f32 0.0, %v3172
    %3174 = vmatmul.bf16.gmra.mxu0 %v3153
    %v3175 = vpop.f32.mrf.mxu0
    %v3176 = vadd.f32 0.0, %v3175
    %v3177 = vpop.f32.mrf.mxu0
    %v3178 = vadd.f32 0.0, %v3177
    %3179 = vmatmul.bf16.gmra.mxu0 %v3156
    %v3180 = vpop.f32.mrf.mxu0
    %v3181 = vadd.f32 0.0, %v3180
    %v3182 = vpop.f32.mrf.mxu0
    %3183 = vdwg.mxu0
    %v3184 = vadd.f32 %v2979, %v3171
    %v3185 = vadd.f32 %v2981, %v3173
    %v3186 = vadd.f32 %v2984, %v3176
    %v3187 = vadd.f32 %v2986, %v3178
    %v3188 = vadd.f32 %v2989, %v3181
    %3189 = vrot.lane.b32.xlu0 %v2604, 104
    %v3190 = vpop.permute.xlu0 %3189
    %3191 = vrot.lane.b32.xlu0 %v2605, 104
    %v3192 = vpop.permute.xlu0 %3191
    %3193 = vrot.lane.b32.xlu0 %v2606, 104
    %v3194 = vpop.permute.xlu0 %3193
    %3195 = vrot.lane.b32.xlu0 %v2604, 40
    %v3196 = vpop.permute.xlu0 %3195
    %3197 = vrot.lane.b32.xlu0 %v2605, 40
    %v3198 = vpop.permute.xlu0 %3197
    %3199 = vrot.lane.b32.xlu0 %v2606, 40
    %v3200 = vpop.permute.xlu0 %3199
    %v3202 = vsel %vm430, %v3190, 0
    %v3205 = vsel %vm430, %v3192, 0
    %v3208 = vsel %vm430, %v3194, 0
    %v3211 = vsel %vm430, %v3196, 0
    %v3214 = vsel %vm430, %v3198, 0
    %v3217 = vsel %vm430, %v3200, 0
    %3219 = vmatpush.bf16.xpose.msra.mxu0 0
    %3220 = vmatpush.bf16.xpose.msra.mxu0 0
    %3221 = vmatpush.bf16.xpose.msra.mxu0 0
    %3222 = vmatpush.bf16.xpose.msra.mxu0 0
    %3223 = vmatpush.bf16.xpose.msra.mxu0 0
    %3224 = vmatpush.bf16.xpose.msra.mxu0 %v3217
    %3225 = vmatpush.bf16.xpose.msra.mxu0 %v3214
    %3226 = vmatpush.bf16.xpose.msra.mxu0 %v3211
    %3227 = vmatmul.bf16.gmra.mxu0 %v3202
    %v3228 = vpop.f32.mrf.mxu0
    %v3229 = vadd.f32 %v406, %v3228
    %v3230 = vpop.f32.mrf.mxu0
    %v3231 = vadd.f32 %v407, %v3230
    %3232 = vmatmul.bf16.gmra.mxu0 %v3205
    %v3233 = vpop.f32.mrf.mxu0
    %v3234 = vadd.f32 %v408, %v3233
    %v3235 = vpop.f32.mrf.mxu0
    %v3236 = vadd.f32 %v409, %v3235
    %3237 = vmatmul.bf16.gmra.mxu0 %v3208
    %v3238 = vpop.f32.mrf.mxu0
    %v3239 = vadd.f32 %v410, %v3238
    %v3240 = vpop.f32.mrf.mxu0
    %3241 = vdwg.mxu0
    %v3242 = vsel %vm472, %v3229, -inf
    %3243 = vmax.xlane.f32.xlu0 %v3242
    %v3244 = vpop.xlane.xlu0 %3243
    %v3245 = vsel %vm472, %v3231, -inf
    %3246 = vmax.xlane.f32.xlu0 %v3245
    %v3247 = vpop.xlane.xlu0 %3246
    %v3248 = vsel %vm472, %v3234, -inf
    %3249 = vmax.xlane.f32.xlu0 %v3248
    %v3250 = vpop.xlane.xlu0 %3249
    %v3251 = vsel %vm472, %v3236, -inf
    %3252 = vmax.xlane.f32.xlu0 %v3251
    %v3253 = vpop.xlane.xlu0 %3252
    %v3254 = vsel %vm485, %v3239, -inf
    %3255 = vmax.xlane.f32.xlu0 %v3254
    %v3256 = vpop.xlane.xlu0 %3255
    %v3257 = vsub.f32 %v3229, %v3244
    %v3258 = vsub.f32 %v3231, %v3247
    %v3259 = vsub.f32 %v3234, %v3250
    %v3260 = vsub.f32 %v3236, %v3253
    %v3261 = vsub.f32 %v3239, %v3256
    %v3262 = vmul.f32 %v3257, 1.442695
    %v3263 = vpow.pop %v3262
    %v3264 = vmul.f32 %v3258, 1.442695
    %v3265 = vpow.pop %v3264
    %v3266 = vmul.f32 %v3259, 1.442695
    %v3267 = vpow.pop %v3266
    %v3268 = vmul.f32 %v3260, 1.442695
    %v3269 = vpow.pop %v3268
    %v3270 = vmul.f32 %v3261, 1.442695
    %v3271 = vpow.pop %v3270
    %v3272 = vsel %vm472, %v3263, 0.0
    %3273 = vadd.xlane.f32.xlu0 %v3272
    %v3274 = vpop.xlane.xlu0 %3273
    %v3275 = vsel %vm472, %v3265, 0.0
    %3276 = vadd.xlane.f32.xlu0 %v3275
    %v3277 = vpop.xlane.xlu0 %3276
    %v3278 = vsel %vm472, %v3267, 0.0
    %3279 = vadd.xlane.f32.xlu0 %v3278
    %v3280 = vpop.xlane.xlu0 %3279
    %v3281 = vsel %vm472, %v3269, 0.0
    %3282 = vadd.xlane.f32.xlu0 %v3281
    %v3283 = vpop.xlane.xlu0 %3282
    %v3284 = vsel %vm485, %v3271, 0.0
    %3285 = vadd.xlane.f32.xlu0 %v3284
    %v3286 = vpop.xlane.xlu0 %3285
    %v3287 = vrcp.pop %v3274
    %v3288 = vrcp.pop %v3277
    %v3289 = vrcp.pop %v3280
    %v3290 = vrcp.pop %v3283
    %v3291 = vrcp.pop %v3286
    %v3292 = vmul.f32 %v3263, %v3287
    %v3293 = vmul.f32 %v3265, %v3288
    %v3294 = vmul.f32 %v3267, %v3289
    %v3295 = vmul.f32 %v3269, %v3290
    %v3296 = vmul.f32 %v3271, %v3291
    %v3297 = vpack.c.bf16 %v3293, %v3292
    %v3298 = vpack.c.bf16 %v3295, %v3294
    %v3299 = vpack.c.bf16 %v3296, %v3296
    %3300 = vrot.lane.b32.xlu0 %v2722, 104
    %v3301 = vpop.permute.xlu0 %3300
    %3302 = vrot.lane.b32.xlu0 %v2723, 104
    %v3303 = vpop.permute.xlu0 %3302
    %3304 = vrot.lane.b32.xlu0 %v2724, 104
    %v3305 = vpop.permute.xlu0 %3304
    %v3309 = vsel %vm472, %v3297, 0
    %v3312 = vsel %vm472, %v3298, 0
    %v3315 = vsel %vm472, %v3299, 0
    %v3318 = vsel %vm117, %v3305, 0
    %3320 = vmatpush.bf16.msra.mxu0 0
    %3321 = vmatpush.bf16.msra.mxu0 0
    %3322 = vmatpush.bf16.msra.mxu0 0
    %3323 = vmatpush.bf16.msra.mxu0 0
    %3324 = vmatpush.bf16.msra.mxu0 0
    %3325 = vmatpush.bf16.msra.mxu0 %v3318
    %3326 = vmatpush.bf16.msra.mxu0 %v3303
    %3327 = vmatpush.bf16.msra.mxu0 %v3301
    %3328 = vmatmul.bf16.gmra.mxu0 %v3309
    %v3329 = vpop.f32.mrf.mxu0
    %v3330 = vadd.f32 0.0, %v3329
    %v3331 = vpop.f32.mrf.mxu0
    %v3332 = vadd.f32 0.0, %v3331
    %3333 = vmatmul.bf16.gmra.mxu0 %v3312
    %v3334 = vpop.f32.mrf.mxu0
    %v3335 = vadd.f32 0.0, %v3334
    %v3336 = vpop.f32.mrf.mxu0
    %v3337 = vadd.f32 0.0, %v3336
    %3338 = vmatmul.bf16.gmra.mxu0 %v3315
    %v3339 = vpop.f32.mrf.mxu0
    %v3340 = vadd.f32 0.0, %v3339
    %v3341 = vpop.f32.mrf.mxu0
    %3342 = vdwg.mxu0
    %v3343 = vpack.c.bf16 %v3332, %v3330
    %v3344 = vpack.c.bf16 %v3337, %v3335
    %v3345 = vpack.c.bf16 %v3340, %v3340
    %v3347 = vsel %vm430, %v3343, 0
    %v3350 = vsel %vm430, %v3344, 0
    %v3353 = vsel %vm430, %v3345, 0
    %v3356 = vsel %vm751, %v2589, 0
    %3358 = vmatpush.bf16.msra.mxu0 0
    %3359 = vmatpush.bf16.msra.mxu0 0
    %3360 = vmatpush.bf16.msra.mxu0 0
    %3361 = vmatpush.bf16.msra.mxu0 0
    %3362 = vmatpush.bf16.msra.mxu0 0
    %3363 = vmatpush.bf16.msra.mxu0 0
    %3364 = vmatpush.bf16.msra.mxu0 0
    %3365 = vmatpush.bf16.msra.mxu0 %v3356
    %3366 = vmatmul.bf16.gmra.mxu0 %v3347
    %v3367 = vpop.f32.mrf.mxu0
    %v3368 = vadd.f32 0.0, %v3367
    %v3369 = vpop.f32.mrf.mxu0
    %v3370 = vadd.f32 0.0, %v3369
    %3371 = vmatmul.bf16.gmra.mxu0 %v3350
    %v3372 = vpop.f32.mrf.mxu0
    %v3373 = vadd.f32 0.0, %v3372
    %v3374 = vpop.f32.mrf.mxu0
    %v3375 = vadd.f32 0.0, %v3374
    %3376 = vmatmul.bf16.gmra.mxu0 %v3353
    %v3377 = vpop.f32.mrf.mxu0
    %v3378 = vadd.f32 0.0, %v3377
    %v3379 = vpop.f32.mrf.mxu0
    %3380 = vdwg.mxu0
    %v3381 = vadd.f32 %v3184, %v3368
    %v3382 = vadd.f32 %v3185, %v3370
    %v3383 = vadd.f32 %v3186, %v3373
    %v3384 = vadd.f32 %v3187, %v3375
    %v3385 = vadd.f32 %v3188, %v3378
    %3386 = vrot.lane.b32.xlu0 %v2604, 96
    %v3387 = vpop.permute.xlu0 %3386
    %3388 = vrot.lane.b32.xlu0 %v2605, 96
    %v3389 = vpop.permute.xlu0 %3388
    %3390 = vrot.lane.b32.xlu0 %v2606, 96
    %v3391 = vpop.permute.xlu0 %3390
    %3392 = vrot.lane.b32.xlu0 %v2604, 32
    %v3393 = vpop.permute.xlu0 %3392
    %3394 = vrot.lane.b32.xlu0 %v2605, 32
    %v3395 = vpop.permute.xlu0 %3394
    %3396 = vrot.lane.b32.xlu0 %v2606, 32
    %v3397 = vpop.permute.xlu0 %3396
    %v3399 = vsel %vm430, %v3387, 0
    %v3402 = vsel %vm430, %v3389, 0
    %v3405 = vsel %vm430, %v3391, 0
    %v3408 = vsel %vm430, %v3393, 0
    %v3411 = vsel %vm430, %v3395, 0
    %v3414 = vsel %vm430, %v3397, 0
    %3416 = vmatpush.bf16.xpose.msra.mxu0 0
    %3417 = vmatpush.bf16.xpose.msra.mxu0 0
    %3418 = vmatpush.bf16.xpose.msra.mxu0 0
    %3419 = vmatpush.bf16.xpose.msra.mxu0 0
    %3420 = vmatpush.bf16.xpose.msra.mxu0 0
    %3421 = vmatpush.bf16.xpose.msra.mxu0 %v3414
    %3422 = vmatpush.bf16.xpose.msra.mxu0 %v3411
    %3423 = vmatpush.bf16.xpose.msra.mxu0 %v3408
    %3424 = vmatmul.bf16.gmra.mxu0 %v3399
    %v3425 = vpop.f32.mrf.mxu0
    %v3426 = vadd.f32 %v406, %v3425
    %v3427 = vpop.f32.mrf.mxu0
    %v3428 = vadd.f32 %v407, %v3427
    %3429 = vmatmul.bf16.gmra.mxu0 %v3402
    %v3430 = vpop.f32.mrf.mxu0
    %v3431 = vadd.f32 %v408, %v3430
    %v3432 = vpop.f32.mrf.mxu0
    %v3433 = vadd.f32 %v409, %v3432
    %3434 = vmatmul.bf16.gmra.mxu0 %v3405
    %v3435 = vpop.f32.mrf.mxu0
    %v3436 = vadd.f32 %v410, %v3435
    %v3437 = vpop.f32.mrf.mxu0
    %3438 = vdwg.mxu0
    %v3439 = vsel %vm472, %v3426, -inf
    %3440 = vmax.xlane.f32.xlu0 %v3439
    %v3441 = vpop.xlane.xlu0 %3440
    %v3442 = vsel %vm472, %v3428, -inf
    %3443 = vmax.xlane.f32.xlu0 %v3442
    %v3444 = vpop.xlane.xlu0 %3443
    %v3445 = vsel %vm472, %v3431, -inf
    %3446 = vmax.xlane.f32.xlu0 %v3445
    %v3447 = vpop.xlane.xlu0 %3446
    %v3448 = vsel %vm472, %v3433, -inf
    %3449 = vmax.xlane.f32.xlu0 %v3448
    %v3450 = vpop.xlane.xlu0 %3449
    %v3451 = vsel %vm485, %v3436, -inf
    %3452 = vmax.xlane.f32.xlu0 %v3451
    %v3453 = vpop.xlane.xlu0 %3452
    %v3454 = vsub.f32 %v3426, %v3441
    %v3455 = vsub.f32 %v3428, %v3444
    %v3456 = vsub.f32 %v3431, %v3447
    %v3457 = vsub.f32 %v3433, %v3450
    %v3458 = vsub.f32 %v3436, %v3453
    %v3459 = vmul.f32 %v3454, 1.442695
    %v3460 = vpow.pop %v3459
    %v3461 = vmul.f32 %v3455, 1.442695
    %v3462 = vpow.pop %v3461
    %v3463 = vmul.f32 %v3456, 1.442695
    %v3464 = vpow.pop %v3463
    %v3465 = vmul.f32 %v3457, 1.442695
    %v3466 = vpow.pop %v3465
    %v3467 = vmul.f32 %v3458, 1.442695
    %v3468 = vpow.pop %v3467
    %v3469 = vsel %vm472, %v3460, 0.0
    %3470 = vadd.xlane.f32.xlu0 %v3469
    %v3471 = vpop.xlane.xlu0 %3470
    %v3472 = vsel %vm472, %v3462, 0.0
    %3473 = vadd.xlane.f32.xlu0 %v3472
    %v3474 = vpop.xlane.xlu0 %3473
    %v3475 = vsel %vm472, %v3464, 0.0
    %3476 = vadd.xlane.f32.xlu0 %v3475
    %v3477 = vpop.xlane.xlu0 %3476
    %v3478 = vsel %vm472, %v3466, 0.0
    %3479 = vadd.xlane.f32.xlu0 %v3478
    %v3480 = vpop.xlane.xlu0 %3479
    %v3481 = vsel %vm485, %v3468, 0.0
    %3482 = vadd.xlane.f32.xlu0 %v3481
    %v3483 = vpop.xlane.xlu0 %3482
    %v3484 = vrcp.pop %v3471
    %v3485 = vrcp.pop %v3474
    %v3486 = vrcp.pop %v3477
    %v3487 = vrcp.pop %v3480
    %v3488 = vrcp.pop %v3483
    %v3489 = vmul.f32 %v3460, %v3484
    %v3490 = vmul.f32 %v3462, %v3485
    %v3491 = vmul.f32 %v3464, %v3486
    %v3492 = vmul.f32 %v3466, %v3487
    %v3493 = vmul.f32 %v3468, %v3488
    %v3494 = vpack.c.bf16 %v3490, %v3489
    %v3495 = vpack.c.bf16 %v3492, %v3491
    %v3496 = vpack.c.bf16 %v3493, %v3493
    %3497 = vrot.lane.b32.xlu0 %v2722, 96
    %v3498 = vpop.permute.xlu0 %3497
    %3499 = vrot.lane.b32.xlu0 %v2723, 96
    %v3500 = vpop.permute.xlu0 %3499
    %3501 = vrot.lane.b32.xlu0 %v2724, 96
    %v3502 = vpop.permute.xlu0 %3501
    %v3506 = vsel %vm472, %v3494, 0
    %v3509 = vsel %vm472, %v3495, 0
    %v3512 = vsel %vm472, %v3496, 0
    %v3515 = vsel %vm117, %v3502, 0
    %3517 = vmatpush.bf16.msra.mxu0 0
    %3518 = vmatpush.bf16.msra.mxu0 0
    %3519 = vmatpush.bf16.msra.mxu0 0
    %3520 = vmatpush.bf16.msra.mxu0 0
    %3521 = vmatpush.bf16.msra.mxu0 0
    %3522 = vmatpush.bf16.msra.mxu0 %v3515
    %3523 = vmatpush.bf16.msra.mxu0 %v3500
    %3524 = vmatpush.bf16.msra.mxu0 %v3498
    %3525 = vmatmul.bf16.gmra.mxu0 %v3506
    %v3526 = vpop.f32.mrf.mxu0
    %v3527 = vadd.f32 0.0, %v3526
    %v3528 = vpop.f32.mrf.mxu0
    %v3529 = vadd.f32 0.0, %v3528
    %3530 = vmatmul.bf16.gmra.mxu0 %v3509
    %v3531 = vpop.f32.mrf.mxu0
    %v3532 = vadd.f32 0.0, %v3531
    %v3533 = vpop.f32.mrf.mxu0
    %v3534 = vadd.f32 0.0, %v3533
    %3535 = vmatmul.bf16.gmra.mxu0 %v3512
    %v3536 = vpop.f32.mrf.mxu0
    %v3537 = vadd.f32 0.0, %v3536
    %v3538 = vpop.f32.mrf.mxu0
    %3539 = vdwg.mxu0
    %v3540 = vpack.c.bf16 %v3529, %v3527
    %v3541 = vpack.c.bf16 %v3534, %v3532
    %v3542 = vpack.c.bf16 %v3537, %v3537
    %v3544 = vsel %vm430, %v3540, 0
    %v3547 = vsel %vm430, %v3541, 0
    %v3550 = vsel %vm430, %v3542, 0
    %v3553 = vsel %vm751, %v2590, 0
    %3555 = vmatpush.bf16.msra.mxu0 0
    %3556 = vmatpush.bf16.msra.mxu0 0
    %3557 = vmatpush.bf16.msra.mxu0 0
    %3558 = vmatpush.bf16.msra.mxu0 0
    %3559 = vmatpush.bf16.msra.mxu0 0
    %3560 = vmatpush.bf16.msra.mxu0 0
    %3561 = vmatpush.bf16.msra.mxu0 0
    %3562 = vmatpush.bf16.msra.mxu0 %v3553
    %3563 = vmatmul.bf16.gmra.mxu0 %v3544
    %v3564 = vpop.f32.mrf.mxu0
    %v3565 = vadd.f32 0.0, %v3564
    %v3566 = vpop.f32.mrf.mxu0
    %v3567 = vadd.f32 0.0, %v3566
    %3568 = vmatmul.bf16.gmra.mxu0 %v3547
    %v3569 = vpop.f32.mrf.mxu0
    %v3570 = vadd.f32 0.0, %v3569
    %v3571 = vpop.f32.mrf.mxu0
    %v3572 = vadd.f32 0.0, %v3571
    %3573 = vmatmul.bf16.gmra.mxu0 %v3550
    %v3574 = vpop.f32.mrf.mxu0
    %v3575 = vadd.f32 0.0, %v3574
    %v3576 = vpop.f32.mrf.mxu0
    %3577 = vdwg.mxu0
    %v3578 = vadd.f32 %v3381, %v3565
    %v3579 = vadd.f32 %v3382, %v3567
    %v3580 = vadd.f32 %v3383, %v3570
    %v3581 = vadd.f32 %v3384, %v3572
    %v3582 = vadd.f32 %v3385, %v3575
    %3583 = vrot.lane.b32.xlu0 %v2604, 88
    %v3584 = vpop.permute.xlu0 %3583
    %3585 = vrot.lane.b32.xlu0 %v2605, 88
    %v3586 = vpop.permute.xlu0 %3585
    %3587 = vrot.lane.b32.xlu0 %v2606, 88
    %v3588 = vpop.permute.xlu0 %3587
    %3589 = vrot.lane.b32.xlu0 %v2604, 24
    %v3590 = vpop.permute.xlu0 %3589
    %3591 = vrot.lane.b32.xlu0 %v2605, 24
    %v3592 = vpop.permute.xlu0 %3591
    %3593 = vrot.lane.b32.xlu0 %v2606, 24
    %v3594 = vpop.permute.xlu0 %3593
    %v3596 = vsel %vm430, %v3584, 0
    %v3599 = vsel %vm430, %v3586, 0
    %v3602 = vsel %vm430, %v3588, 0
    %v3605 = vsel %vm430, %v3590, 0
    %v3608 = vsel %vm430, %v3592, 0
    %v3611 = vsel %vm430, %v3594, 0
    %3613 = vmatpush.bf16.xpose.msra.mxu0 0
    %3614 = vmatpush.bf16.xpose.msra.mxu0 0
    %3615 = vmatpush.bf16.xpose.msra.mxu0 0
    %3616 = vmatpush.bf16.xpose.msra.mxu0 0
    %3617 = vmatpush.bf16.xpose.msra.mxu0 0
    %3618 = vmatpush.bf16.xpose.msra.mxu0 %v3611
    %3619 = vmatpush.bf16.xpose.msra.mxu0 %v3608
    %3620 = vmatpush.bf16.xpose.msra.mxu0 %v3605
    %3621 = vmatmul.bf16.gmra.mxu0 %v3596
    %v3622 = vpop.f32.mrf.mxu0
    %v3623 = vadd.f32 %v406, %v3622
    %v3624 = vpop.f32.mrf.mxu0
    %v3625 = vadd.f32 %v407, %v3624
    %3626 = vmatmul.bf16.gmra.mxu0 %v3599
    %v3627 = vpop.f32.mrf.mxu0
    %v3628 = vadd.f32 %v408, %v3627
    %v3629 = vpop.f32.mrf.mxu0
    %v3630 = vadd.f32 %v409, %v3629
    %3631 = vmatmul.bf16.gmra.mxu0 %v3602
    %v3632 = vpop.f32.mrf.mxu0
    %v3633 = vadd.f32 %v410, %v3632
    %v3634 = vpop.f32.mrf.mxu0
    %3635 = vdwg.mxu0
    %v3636 = vsel %vm472, %v3623, -inf
    %3637 = vmax.xlane.f32.xlu0 %v3636
    %v3638 = vpop.xlane.xlu0 %3637
    %v3639 = vsel %vm472, %v3625, -inf
    %3640 = vmax.xlane.f32.xlu0 %v3639
    %v3641 = vpop.xlane.xlu0 %3640
    %v3642 = vsel %vm472, %v3628, -inf
    %3643 = vmax.xlane.f32.xlu0 %v3642
    %v3644 = vpop.xlane.xlu0 %3643
    %v3645 = vsel %vm472, %v3630, -inf
    %3646 = vmax.xlane.f32.xlu0 %v3645
    %v3647 = vpop.xlane.xlu0 %3646
    %v3648 = vsel %vm485, %v3633, -inf
    %3649 = vmax.xlane.f32.xlu0 %v3648
    %v3650 = vpop.xlane.xlu0 %3649
    %v3651 = vsub.f32 %v3623, %v3638
    %v3652 = vsub.f32 %v3625, %v3641
    %v3653 = vsub.f32 %v3628, %v3644
    %v3654 = vsub.f32 %v3630, %v3647
    %v3655 = vsub.f32 %v3633, %v3650
    %v3656 = vmul.f32 %v3651, 1.442695
    %v3657 = vpow.pop %v3656
    %v3658 = vmul.f32 %v3652, 1.442695
    %v3659 = vpow.pop %v3658
    %v3660 = vmul.f32 %v3653, 1.442695
    %v3661 = vpow.pop %v3660
    %v3662 = vmul.f32 %v3654, 1.442695
    %v3663 = vpow.pop %v3662
    %v3664 = vmul.f32 %v3655, 1.442695
    %v3665 = vpow.pop %v3664
    %v3666 = vsel %vm472, %v3657, 0.0
    %3667 = vadd.xlane.f32.xlu0 %v3666
    %v3668 = vpop.xlane.xlu0 %3667
    %v3669 = vsel %vm472, %v3659, 0.0
    %3670 = vadd.xlane.f32.xlu0 %v3669
    %v3671 = vpop.xlane.xlu0 %3670
    %v3672 = vsel %vm472, %v3661, 0.0
    %3673 = vadd.xlane.f32.xlu0 %v3672
    %v3674 = vpop.xlane.xlu0 %3673
    %v3675 = vsel %vm472, %v3663, 0.0
    %3676 = vadd.xlane.f32.xlu0 %v3675
    %v3677 = vpop.xlane.xlu0 %3676
    %v3678 = vsel %vm485, %v3665, 0.0
    %3679 = vadd.xlane.f32.xlu0 %v3678
    %v3680 = vpop.xlane.xlu0 %3679
    %v3681 = vrcp.pop %v3668
    %v3682 = vrcp.pop %v3671
    %v3683 = vrcp.pop %v3674
    %v3684 = vrcp.pop %v3677
    %v3685 = vrcp.pop %v3680
    %v3686 = vmul.f32 %v3657, %v3681
    %v3687 = vmul.f32 %v3659, %v3682
    %v3688 = vmul.f32 %v3661, %v3683
    %v3689 = vmul.f32 %v3663, %v3684
    %v3690 = vmul.f32 %v3665, %v3685
    %v3691 = vpack.c.bf16 %v3687, %v3686
    %v3692 = vpack.c.bf16 %v3689, %v3688
    %v3693 = vpack.c.bf16 %v3690, %v3690
    %3694 = vrot.lane.b32.xlu0 %v2722, 88
    %v3695 = vpop.permute.xlu0 %3694
    %3696 = vrot.lane.b32.xlu0 %v2723, 88
    %v3697 = vpop.permute.xlu0 %3696
    %3698 = vrot.lane.b32.xlu0 %v2724, 88
    %v3699 = vpop.permute.xlu0 %3698
    %v3703 = vsel %vm472, %v3691, 0
    %v3706 = vsel %vm472, %v3692, 0
    %v3709 = vsel %vm472, %v3693, 0
    %v3712 = vsel %vm117, %v3699, 0
    %3714 = vmatpush.bf16.msra.mxu0 0
    %3715 = vmatpush.bf16.msra.mxu0 0
    %3716 = vmatpush.bf16.msra.mxu0 0
    %3717 = vmatpush.bf16.msra.mxu0 0
    %3718 = vmatpush.bf16.msra.mxu0 0
    %3719 = vmatpush.bf16.msra.mxu0 %v3712
    %3720 = vmatpush.bf16.msra.mxu0 %v3697
    %3721 = vmatpush.bf16.msra.mxu0 %v3695
    %3722 = vmatmul.bf16.gmra.mxu0 %v3703
    %v3723 = vpop.f32.mrf.mxu0
    %v3724 = vadd.f32 0.0, %v3723
    %v3725 = vpop.f32.mrf.mxu0
    %v3726 = vadd.f32 0.0, %v3725
    %3727 = vmatmul.bf16.gmra.mxu0 %v3706
    %v3728 = vpop.f32.mrf.mxu0
    %v3729 = vadd.f32 0.0, %v3728
    %v3730 = vpop.f32.mrf.mxu0
    %v3731 = vadd.f32 0.0, %v3730
    %3732 = vmatmul.bf16.gmra.mxu0 %v3709
    %v3733 = vpop.f32.mrf.mxu0
    %v3734 = vadd.f32 0.0, %v3733
    %v3735 = vpop.f32.mrf.mxu0
    %3736 = vdwg.mxu0
    %v3737 = vpack.c.bf16 %v3726, %v3724
    %v3738 = vpack.c.bf16 %v3731, %v3729
    %v3739 = vpack.c.bf16 %v3734, %v3734
    %v3741 = vsel %vm430, %v3737, 0
    %v3744 = vsel %vm430, %v3738, 0
    %v3747 = vsel %vm430, %v3739, 0
    %v3750 = vsel %vm751, %v2591, 0
    %3752 = vmatpush.bf16.msra.mxu0 0
    %3753 = vmatpush.bf16.msra.mxu0 0
    %3754 = vmatpush.bf16.msra.mxu0 0
    %3755 = vmatpush.bf16.msra.mxu0 0
    %3756 = vmatpush.bf16.msra.mxu0 0
    %3757 = vmatpush.bf16.msra.mxu0 0
    %3758 = vmatpush.bf16.msra.mxu0 0
    %3759 = vmatpush.bf16.msra.mxu0 %v3750
    %3760 = vmatmul.bf16.gmra.mxu0 %v3741
    %v3761 = vpop.f32.mrf.mxu0
    %v3762 = vadd.f32 0.0, %v3761
    %v3763 = vpop.f32.mrf.mxu0
    %v3764 = vadd.f32 0.0, %v3763
    %3765 = vmatmul.bf16.gmra.mxu0 %v3744
    %v3766 = vpop.f32.mrf.mxu0
    %v3767 = vadd.f32 0.0, %v3766
    %v3768 = vpop.f32.mrf.mxu0
    %v3769 = vadd.f32 0.0, %v3768
    %3770 = vmatmul.bf16.gmra.mxu0 %v3747
    %v3771 = vpop.f32.mrf.mxu0
    %v3772 = vadd.f32 0.0, %v3771
    %v3773 = vpop.f32.mrf.mxu0
    %3774 = vdwg.mxu0
    %v3775 = vadd.f32 %v3578, %v3762
    %v3776 = vadd.f32 %v3579, %v3764
    %v3777 = vadd.f32 %v3580, %v3767
    %v3778 = vadd.f32 %v3581, %v3769
    %v3779 = vadd.f32 %v3582, %v3772
    %3780 = vrot.lane.b32.xlu0 %v2604, 80
    %v3781 = vpop.permute.xlu0 %3780
    %3782 = vrot.lane.b32.xlu0 %v2605, 80
    %v3783 = vpop.permute.xlu0 %3782
    %3784 = vrot.lane.b32.xlu0 %v2606, 80
    %v3785 = vpop.permute.xlu0 %3784
    %3786 = vrot.lane.b32.xlu0 %v2604, 16
    %v3787 = vpop.permute.xlu0 %3786
    %3788 = vrot.lane.b32.xlu0 %v2605, 16
    %v3789 = vpop.permute.xlu0 %3788
    %3790 = vrot.lane.b32.xlu0 %v2606, 16
    %v3791 = vpop.permute.xlu0 %3790
    %v3793 = vsel %vm430, %v3781, 0
    %v3796 = vsel %vm430, %v3783, 0
    %v3799 = vsel %vm430, %v3785, 0
    %v3802 = vsel %vm430, %v3787, 0
    %v3805 = vsel %vm430, %v3789, 0
    %v3808 = vsel %vm430, %v3791, 0
    %3810 = vmatpush.bf16.xpose.msra.mxu0 0
    %3811 = vmatpush.bf16.xpose.msra.mxu0 0
    %3812 = vmatpush.bf16.xpose.msra.mxu0 0
    %3813 = vmatpush.bf16.xpose.msra.mxu0 0
    %3814 = vmatpush.bf16.xpose.msra.mxu0 0
    %3815 = vmatpush.bf16.xpose.msra.mxu0 %v3808
    %3816 = vmatpush.bf16.xpose.msra.mxu0 %v3805
    %3817 = vmatpush.bf16.xpose.msra.mxu0 %v3802
    %3818 = vmatmul.bf16.gmra.mxu0 %v3793
    %v3819 = vpop.f32.mrf.mxu0
    %v3820 = vadd.f32 %v406, %v3819
    %v3821 = vpop.f32.mrf.mxu0
    %v3822 = vadd.f32 %v407, %v3821
    %3823 = vmatmul.bf16.gmra.mxu0 %v3796
    %v3824 = vpop.f32.mrf.mxu0
    %v3825 = vadd.f32 %v408, %v3824
    %v3826 = vpop.f32.mrf.mxu0
    %v3827 = vadd.f32 %v409, %v3826
    %3828 = vmatmul.bf16.gmra.mxu0 %v3799
    %v3829 = vpop.f32.mrf.mxu0
    %v3830 = vadd.f32 %v410, %v3829
    %v3831 = vpop.f32.mrf.mxu0
    %3832 = vdwg.mxu0
    %v3833 = vsel %vm472, %v3820, -inf
    %3834 = vmax.xlane.f32.xlu0 %v3833
    %v3835 = vpop.xlane.xlu0 %3834
    %v3836 = vsel %vm472, %v3822, -inf
    %3837 = vmax.xlane.f32.xlu0 %v3836
    %v3838 = vpop.xlane.xlu0 %3837
    %v3839 = vsel %vm472, %v3825, -inf
    %3840 = vmax.xlane.f32.xlu0 %v3839
    %v3841 = vpop.xlane.xlu0 %3840
    %v3842 = vsel %vm472, %v3827, -inf
    %3843 = vmax.xlane.f32.xlu0 %v3842
    %v3844 = vpop.xlane.xlu0 %3843
    %v3845 = vsel %vm485, %v3830, -inf
    %3846 = vmax.xlane.f32.xlu0 %v3845
    %v3847 = vpop.xlane.xlu0 %3846
    %v3848 = vsub.f32 %v3820, %v3835
    %v3849 = vsub.f32 %v3822, %v3838
    %v3850 = vsub.f32 %v3825, %v3841
    %v3851 = vsub.f32 %v3827, %v3844
    %v3852 = vsub.f32 %v3830, %v3847
    %v3853 = vmul.f32 %v3848, 1.442695
    %v3854 = vpow.pop %v3853
    %v3855 = vmul.f32 %v3849, 1.442695
    %v3856 = vpow.pop %v3855
    %v3857 = vmul.f32 %v3850, 1.442695
    %v3858 = vpow.pop %v3857
    %v3859 = vmul.f32 %v3851, 1.442695
    %v3860 = vpow.pop %v3859
    %v3861 = vmul.f32 %v3852, 1.442695
    %v3862 = vpow.pop %v3861
    %v3863 = vsel %vm472, %v3854, 0.0
    %3864 = vadd.xlane.f32.xlu0 %v3863
    %v3865 = vpop.xlane.xlu0 %3864
    %v3866 = vsel %vm472, %v3856, 0.0
    %3867 = vadd.xlane.f32.xlu0 %v3866
    %v3868 = vpop.xlane.xlu0 %3867
    %v3869 = vsel %vm472, %v3858, 0.0
    %3870 = vadd.xlane.f32.xlu0 %v3869
    %v3871 = vpop.xlane.xlu0 %3870
    %v3872 = vsel %vm472, %v3860, 0.0
    %3873 = vadd.xlane.f32.xlu0 %v3872
    %v3874 = vpop.xlane.xlu0 %3873
    %v3875 = vsel %vm485, %v3862, 0.0
    %3876 = vadd.xlane.f32.xlu0 %v3875
    %v3877 = vpop.xlane.xlu0 %3876
    %v3878 = vrcp.pop %v3865
    %v3879 = vrcp.pop %v3868
    %v3880 = vrcp.pop %v3871
    %v3881 = vrcp.pop %v3874
    %v3882 = vrcp.pop %v3877
    %v3883 = vmul.f32 %v3854, %v3878
    %v3884 = vmul.f32 %v3856, %v3879
    %v3885 = vmul.f32 %v3858, %v3880
    %v3886 = vmul.f32 %v3860, %v3881
    %v3887 = vmul.f32 %v3862, %v3882
    %v3888 = vpack.c.bf16 %v3884, %v3883
    %v3889 = vpack.c.bf16 %v3886, %v3885
    %v3890 = vpack.c.bf16 %v3887, %v3887
    %3891 = vrot.lane.b32.xlu0 %v2722, 80
    %v3892 = vpop.permute.xlu0 %3891
    %3893 = vrot.lane.b32.xlu0 %v2723, 80
    %v3894 = vpop.permute.xlu0 %3893
    %3895 = vrot.lane.b32.xlu0 %v2724, 80
    %v3896 = vpop.permute.xlu0 %3895
    %v3900 = vsel %vm472, %v3888, 0
    %v3903 = vsel %vm472, %v3889, 0
    %v3906 = vsel %vm472, %v3890, 0
    %v3909 = vsel %vm117, %v3896, 0
    %3911 = vmatpush.bf16.msra.mxu0 0
    %3912 = vmatpush.bf16.msra.mxu0 0
    %3913 = vmatpush.bf16.msra.mxu0 0
    %3914 = vmatpush.bf16.msra.mxu0 0
    %3915 = vmatpush.bf16.msra.mxu0 0
    %3916 = vmatpush.bf16.msra.mxu0 %v3909
    %3917 = vmatpush.bf16.msra.mxu0 %v3894
    %3918 = vmatpush.bf16.msra.mxu0 %v3892
    %3919 = vmatmul.bf16.gmra.mxu0 %v3900
    %v3920 = vpop.f32.mrf.mxu0
    %v3921 = vadd.f32 0.0, %v3920
    %v3922 = vpop.f32.mrf.mxu0
    %v3923 = vadd.f32 0.0, %v3922
    %3924 = vmatmul.bf16.gmra.mxu0 %v3903
    %v3925 = vpop.f32.mrf.mxu0
    %v3926 = vadd.f32 0.0, %v3925
    %v3927 = vpop.f32.mrf.mxu0
    %v3928 = vadd.f32 0.0, %v3927
    %3929 = vmatmul.bf16.gmra.mxu0 %v3906
    %v3930 = vpop.f32.mrf.mxu0
    %v3931 = vadd.f32 0.0, %v3930
    %v3932 = vpop.f32.mrf.mxu0
    %3933 = vdwg.mxu0
    %v3934 = vpack.c.bf16 %v3923, %v3921
    %v3935 = vpack.c.bf16 %v3928, %v3926
    %v3936 = vpack.c.bf16 %v3931, %v3931
    %v3938 = vsel %vm430, %v3934, 0
    %v3941 = vsel %vm430, %v3935, 0
    %v3944 = vsel %vm430, %v3936, 0
    %v3947 = vsel %vm751, %v2592, 0
    %3949 = vmatpush.bf16.msra.mxu0 0
    %3950 = vmatpush.bf16.msra.mxu0 0
    %3951 = vmatpush.bf16.msra.mxu0 0
    %3952 = vmatpush.bf16.msra.mxu0 0
    %3953 = vmatpush.bf16.msra.mxu0 0
    %3954 = vmatpush.bf16.msra.mxu0 0
    %3955 = vmatpush.bf16.msra.mxu0 0
    %3956 = vmatpush.bf16.msra.mxu0 %v3947
    %3957 = vmatmul.bf16.gmra.mxu0 %v3938
    %v3958 = vpop.f32.mrf.mxu0
    %v3959 = vadd.f32 0.0, %v3958
    %v3960 = vpop.f32.mrf.mxu0
    %v3961 = vadd.f32 0.0, %v3960
    %3962 = vmatmul.bf16.gmra.mxu0 %v3941
    %v3963 = vpop.f32.mrf.mxu0
    %v3964 = vadd.f32 0.0, %v3963
    %v3965 = vpop.f32.mrf.mxu0
    %v3966 = vadd.f32 0.0, %v3965
    %3967 = vmatmul.bf16.gmra.mxu0 %v3944
    %v3968 = vpop.f32.mrf.mxu0
    %v3969 = vadd.f32 0.0, %v3968
    %v3970 = vpop.f32.mrf.mxu0
    %3971 = vdwg.mxu0
    %v3972 = vadd.f32 %v3775, %v3959
    %v3973 = vadd.f32 %v3776, %v3961
    %v3974 = vadd.f32 %v3777, %v3964
    %v3975 = vadd.f32 %v3778, %v3966
    %v3976 = vadd.f32 %v3779, %v3969
    %3977 = vrot.lane.b32.xlu0 %v2604, 72
    %v3978 = vpop.permute.xlu0 %3977
    %3979 = vrot.lane.b32.xlu0 %v2605, 72
    %v3980 = vpop.permute.xlu0 %3979
    %3981 = vrot.lane.b32.xlu0 %v2606, 72
    %v3982 = vpop.permute.xlu0 %3981
    %3983 = vrot.lane.b32.xlu0 %v2604, 8
    %v3984 = vpop.permute.xlu0 %3983
    %3985 = vrot.lane.b32.xlu0 %v2605, 8
    %v3986 = vpop.permute.xlu0 %3985
    %3987 = vrot.lane.b32.xlu0 %v2606, 8
    %v3988 = vpop.permute.xlu0 %3987
    %v3990 = vsel %vm430, %v3978, 0
    %v3993 = vsel %vm430, %v3980, 0
    %v3996 = vsel %vm430, %v3982, 0
    %v3999 = vsel %vm430, %v3984, 0
    %v4002 = vsel %vm430, %v3986, 0
    %v4005 = vsel %vm430, %v3988, 0
    %4007 = vmatpush.bf16.xpose.msra.mxu0 0
    %4008 = vmatpush.bf16.xpose.msra.mxu0 0
    %4009 = vmatpush.bf16.xpose.msra.mxu0 0
    %4010 = vmatpush.bf16.xpose.msra.mxu0 0
    %4011 = vmatpush.bf16.xpose.msra.mxu0 0
    %4012 = vmatpush.bf16.xpose.msra.mxu0 %v4005
    %4013 = vmatpush.bf16.xpose.msra.mxu0 %v4002
    %4014 = vmatpush.bf16.xpose.msra.mxu0 %v3999
    %4015 = vmatmul.bf16.gmra.mxu0 %v3990
    %v4016 = vpop.f32.mrf.mxu0
    %v4017 = vadd.f32 %v406, %v4016
    %v4018 = vpop.f32.mrf.mxu0
    %v4019 = vadd.f32 %v407, %v4018
    %4020 = vmatmul.bf16.gmra.mxu0 %v3993
    %v4021 = vpop.f32.mrf.mxu0
    %v4022 = vadd.f32 %v408, %v4021
    %v4023 = vpop.f32.mrf.mxu0
    %v4024 = vadd.f32 %v409, %v4023
    %4025 = vmatmul.bf16.gmra.mxu0 %v3996
    %v4026 = vpop.f32.mrf.mxu0
    %v4027 = vadd.f32 %v410, %v4026
    %v4028 = vpop.f32.mrf.mxu0
    %4029 = vdwg.mxu0
    %v4030 = vsel %vm472, %v4017, -inf
    %4031 = vmax.xlane.f32.xlu0 %v4030
    %v4032 = vpop.xlane.xlu0 %4031
    %v4033 = vsel %vm472, %v4019, -inf
    %4034 = vmax.xlane.f32.xlu0 %v4033
    %v4035 = vpop.xlane.xlu0 %4034
    %v4036 = vsel %vm472, %v4022, -inf
    %4037 = vmax.xlane.f32.xlu0 %v4036
    %v4038 = vpop.xlane.xlu0 %4037
    %v4039 = vsel %vm472, %v4024, -inf
    %4040 = vmax.xlane.f32.xlu0 %v4039
    %v4041 = vpop.xlane.xlu0 %4040
    %v4042 = vsel %vm485, %v4027, -inf
    %4043 = vmax.xlane.f32.xlu0 %v4042
    %v4044 = vpop.xlane.xlu0 %4043
    %v4045 = vsub.f32 %v4017, %v4032
    %v4046 = vsub.f32 %v4019, %v4035
    %v4047 = vsub.f32 %v4022, %v4038
    %v4048 = vsub.f32 %v4024, %v4041
    %v4049 = vsub.f32 %v4027, %v4044
    %v4050 = vmul.f32 %v4045, 1.442695
    %v4051 = vpow.pop %v4050
    %v4052 = vmul.f32 %v4046, 1.442695
    %v4053 = vpow.pop %v4052
    %v4054 = vmul.f32 %v4047, 1.442695
    %v4055 = vpow.pop %v4054
    %v4056 = vmul.f32 %v4048, 1.442695
    %v4057 = vpow.pop %v4056
    %v4058 = vmul.f32 %v4049, 1.442695
    %v4059 = vpow.pop %v4058
    %v4060 = vsel %vm472, %v4051, 0.0
    %4061 = vadd.xlane.f32.xlu0 %v4060
    %v4062 = vpop.xlane.xlu0 %4061
    %v4063 = vsel %vm472, %v4053, 0.0
    %4064 = vadd.xlane.f32.xlu0 %v4063
    %v4065 = vpop.xlane.xlu0 %4064
    %v4066 = vsel %vm472, %v4055, 0.0
    %4067 = vadd.xlane.f32.xlu0 %v4066
    %v4068 = vpop.xlane.xlu0 %4067
    %v4069 = vsel %vm472, %v4057, 0.0
    %4070 = vadd.xlane.f32.xlu0 %v4069
    %v4071 = vpop.xlane.xlu0 %4070
    %v4072 = vsel %vm485, %v4059, 0.0
    %4073 = vadd.xlane.f32.xlu0 %v4072
    %v4074 = vpop.xlane.xlu0 %4073
    %v4075 = vrcp.pop %v4062
    %v4076 = vrcp.pop %v4065
    %v4077 = vrcp.pop %v4068
    %v4078 = vrcp.pop %v4071
    %v4079 = vrcp.pop %v4074
    %v4080 = vmul.f32 %v4051, %v4075
    %v4081 = vmul.f32 %v4053, %v4076
    %v4082 = vmul.f32 %v4055, %v4077
    %v4083 = vmul.f32 %v4057, %v4078
    %v4084 = vmul.f32 %v4059, %v4079
    %v4085 = vpack.c.bf16 %v4081, %v4080
    %v4086 = vpack.c.bf16 %v4083, %v4082
    %v4087 = vpack.c.bf16 %v4084, %v4084
    %4088 = vrot.lane.b32.xlu0 %v2722, 72
    %v4089 = vpop.permute.xlu0 %4088
    %4090 = vrot.lane.b32.xlu0 %v2723, 72
    %v4091 = vpop.permute.xlu0 %4090
    %4092 = vrot.lane.b32.xlu0 %v2724, 72
    %v4093 = vpop.permute.xlu0 %4092
    %v4097 = vsel %vm472, %v4085, 0
    %v4100 = vsel %vm472, %v4086, 0
    %v4103 = vsel %vm472, %v4087, 0
    %v4106 = vsel %vm117, %v4093, 0
    %4108 = vmatpush.bf16.msra.mxu0 0
    %4109 = vmatpush.bf16.msra.mxu0 0
    %4110 = vmatpush.bf16.msra.mxu0 0
    %4111 = vmatpush.bf16.msra.mxu0 0
    %4112 = vmatpush.bf16.msra.mxu0 0
    %4113 = vmatpush.bf16.msra.mxu0 %v4106
    %4114 = vmatpush.bf16.msra.mxu0 %v4091
    %4115 = vmatpush.bf16.msra.mxu0 %v4089
    %4116 = vmatmul.bf16.gmra.mxu0 %v4097
    %v4117 = vpop.f32.mrf.mxu0
    %v4118 = vadd.f32 0.0, %v4117
    %v4119 = vpop.f32.mrf.mxu0
    %v4120 = vadd.f32 0.0, %v4119
    %4121 = vmatmul.bf16.gmra.mxu0 %v4100
    %v4122 = vpop.f32.mrf.mxu0
    %v4123 = vadd.f32 0.0, %v4122
    %v4124 = vpop.f32.mrf.mxu0
    %v4125 = vadd.f32 0.0, %v4124
    %4126 = vmatmul.bf16.gmra.mxu0 %v4103
    %v4127 = vpop.f32.mrf.mxu0
    %v4128 = vadd.f32 0.0, %v4127
    %v4129 = vpop.f32.mrf.mxu0
    %4130 = vdwg.mxu0
    %v4131 = vpack.c.bf16 %v4120, %v4118
    %v4132 = vpack.c.bf16 %v4125, %v4123
    %v4133 = vpack.c.bf16 %v4128, %v4128
    %v4135 = vsel %vm430, %v4131, 0
    %v4138 = vsel %vm430, %v4132, 0
    %v4141 = vsel %vm430, %v4133, 0
    %v4144 = vsel %vm751, %v2593, 0
    %4146 = vmatpush.bf16.msra.mxu0 0
    %4147 = vmatpush.bf16.msra.mxu0 0
    %4148 = vmatpush.bf16.msra.mxu0 0
    %4149 = vmatpush.bf16.msra.mxu0 0
    %4150 = vmatpush.bf16.msra.mxu0 0
    %4151 = vmatpush.bf16.msra.mxu0 0
    %4152 = vmatpush.bf16.msra.mxu0 0
    %4153 = vmatpush.bf16.msra.mxu0 %v4144
    %4154 = vmatmul.bf16.gmra.mxu0 %v4135
    %v4155 = vpop.f32.mrf.mxu0
    %v4156 = vadd.f32 0.0, %v4155
    %v4157 = vpop.f32.mrf.mxu0
    %v4158 = vadd.f32 0.0, %v4157
    %4159 = vmatmul.bf16.gmra.mxu0 %v4138
    %v4160 = vpop.f32.mrf.mxu0
    %v4161 = vadd.f32 0.0, %v4160
    %v4162 = vpop.f32.mrf.mxu0
    %v4163 = vadd.f32 0.0, %v4162
    %4164 = vmatmul.bf16.gmra.mxu0 %v4141
    %v4165 = vpop.f32.mrf.mxu0
    %v4166 = vadd.f32 0.0, %v4165
    %v4167 = vpop.f32.mrf.mxu0
    %4168 = vdwg.mxu0
    %v4169 = vadd.f32 %v3972, %v4156
    %v4170 = vadd.f32 %v3973, %v4158
    %v4171 = vadd.f32 %v3974, %v4161
    %v4172 = vadd.f32 %v3975, %v4163
    %v4173 = vadd.f32 %v3976, %v4166
    %s4174 = scalar_lea.vmem %s11, 1
    %v4175 = vld [vmem:[%s4174] sm:$0x1]
    %v4177 = vperm.slane %v4175, 0
    %v4179 = vadd.f32 %v4169, %v4177
    %v4180 = vadd.f32 %v4170, %v4177
    %v4181 = vadd.f32 %v4171, %v4177
    %v4182 = vadd.f32 %v4172, %v4177
    %v4183 = vadd.f32 %v4173, %v4177
    %v4184 = vadd.f32 %v4179, %v2456
    %v4185 = vadd.f32 %v4180, %v2457
    %v4186 = vadd.f32 %v4181, %v2458
    %v4187 = vadd.f32 %v4182, %v2459
    %v4188 = vadd.f32 %v4183, %v2460
    %s4189 = scalar_lea.vmem %s6, 3
    %v4190 = vld [vmem:[%s4189] sm:$0x1]
    %s4191 = scalar_lea.vmem %s7, 3
    %v4192 = vld [vmem:[%s4191] sm:$0x1]
    %v4193 = vsel %vm141, %v4184, 0.0
    %4194 = vadd.xlane.f32.xlu0 %v4193
    %v4195 = vpop.xlane.xlu0 %4194
    %v4196 = vsel %vm141, %v4185, 0.0
    %4197 = vadd.xlane.f32.xlu0 %v4196
    %v4198 = vpop.xlane.xlu0 %4197
    %v4199 = vsel %vm141, %v4186, 0.0
    %4200 = vadd.xlane.f32.xlu0 %v4199
    %v4201 = vpop.xlane.xlu0 %4200
    %v4202 = vsel %vm141, %v4187, 0.0
    %4203 = vadd.xlane.f32.xlu0 %v4202
    %v4204 = vpop.xlane.xlu0 %4203
    %v4205 = vsel %vm154, %v4188, 0.0
    %4206 = vadd.xlane.f32.xlu0 %v4205
    %v4207 = vpop.xlane.xlu0 %4206
    %v4208 = vmul.f32 %v4195, %v164
    %v4209 = vmul.f32 %v4198, %v164
    %v4210 = vmul.f32 %v4201, %v164
    %v4211 = vmul.f32 %v4204, %v164
    %v4212 = vmul.f32 %v4207, %v164
    %v4213 = vsub.f32 %v4184, %v4208
    %v4214 = vsub.f32 %v4185, %v4209
    %v4215 = vsub.f32 %v4186, %v4210
    %v4216 = vsub.f32 %v4187, %v4211
    %v4217 = vsub.f32 %v4188, %v4212
    %v4218 = vmul.f32 %v4213, %v4213
    %v4219 = vmul.f32 %v4214, %v4214
    %v4220 = vmul.f32 %v4215, %v4215
    %v4221 = vmul.f32 %v4216, %v4216
    %v4222 = vmul.f32 %v4217, %v4217
    %v4223 = vsel %vm141, %v4218, 0.0
    %4224 = vadd.xlane.f32.xlu0 %v4223
    %v4225 = vpop.xlane.xlu0 %4224
    %v4226 = vsel %vm141, %v4219, 0.0
    %4227 = vadd.xlane.f32.xlu0 %v4226
    %v4228 = vpop.xlane.xlu0 %4227
    %v4229 = vsel %vm141, %v4220, 0.0
    %4230 = vadd.xlane.f32.xlu0 %v4229
    %v4231 = vpop.xlane.xlu0 %4230
    %v4232 = vsel %vm141, %v4221, 0.0
    %4233 = vadd.xlane.f32.xlu0 %v4232
    %v4234 = vpop.xlane.xlu0 %4233
    %v4235 = vsel %vm154, %v4222, 0.0
    %4236 = vadd.xlane.f32.xlu0 %v4235
    %v4237 = vpop.xlane.xlu0 %4236
    %v4238 = vmul.f32 %v4225, %v164
    %v4239 = vmul.f32 %v4228, %v164
    %v4240 = vmul.f32 %v4231, %v164
    %v4241 = vmul.f32 %v4234, %v164
    %v4242 = vmul.f32 %v4237, %v164
    %v4243 = vadd.f32 %v4238, 1e-05
    %v4244 = vadd.f32 %v4239, 1e-05
    %v4245 = vadd.f32 %v4240, 1e-05
    %v4246 = vadd.f32 %v4241, 1e-05
    %v4247 = vadd.f32 %v4242, 1e-05
    %v4248 = vrsqrt.pop %v4243
    %v4249 = vmul.f32 %v4248, %v4243
    %v4250 = vmul.f32 %v4249, %v4248
    %v4251 = vmul.f32 0.5, %v4250
    %v4252 = vsub.f32 1.5, %v4251
    %v4253 = vmul.f32 %v4248, %v4252
    %vm4254 = vweird.f32 %v4243
    %vm4255 = vweird.f32 %v4248
    %vm4256 = vmor %vm4254, %vm4255
    %v4257 = vsel %vm4256, %v4248, %v4253
    %v4258 = vrsqrt.pop %v4244
    %v4259 = vmul.f32 %v4258, %v4244
    %v4260 = vmul.f32 %v4259, %v4258
    %v4261 = vmul.f32 0.5, %v4260
    %v4262 = vsub.f32 1.5, %v4261
    %v4263 = vmul.f32 %v4258, %v4262
    %vm4264 = vweird.f32 %v4244
    %vm4265 = vweird.f32 %v4258
    %vm4266 = vmor %vm4264, %vm4265
    %v4267 = vsel %vm4266, %v4258, %v4263
    %v4268 = vrsqrt.pop %v4245
    %v4269 = vmul.f32 %v4268, %v4245
    %v4270 = vmul.f32 %v4269, %v4268
    %v4271 = vmul.f32 0.5, %v4270
    %v4272 = vsub.f32 1.5, %v4271
    %v4273 = vmul.f32 %v4268, %v4272
    %vm4274 = vweird.f32 %v4245
    %vm4275 = vweird.f32 %v4268
    %vm4276 = vmor %vm4274, %vm4275
    %v4277 = vsel %vm4276, %v4268, %v4273
    %v4278 = vrsqrt.pop %v4246
    %v4279 = vmul.f32 %v4278, %v4246
    %v4280 = vmul.f32 %v4279, %v4278
    %v4281 = vmul.f32 0.5, %v4280
    %v4282 = vsub.f32 1.5, %v4281
    %v4283 = vmul.f32 %v4278, %v4282
    %vm4284 = vweird.f32 %v4246
    %vm4285 = vweird.f32 %v4278
    %vm4286 = vmor %vm4284, %vm4285
    %v4287 = vsel %vm4286, %v4278, %v4283
    %v4288 = vrsqrt.pop %v4247
    %v4289 = vmul.f32 %v4288, %v4247
    %v4290 = vmul.f32 %v4289, %v4288
    %v4291 = vmul.f32 0.5, %v4290
    %v4292 = vsub.f32 1.5, %v4291
    %v4293 = vmul.f32 %v4288, %v4292
    %vm4294 = vweird.f32 %v4247
    %vm4295 = vweird.f32 %v4288
    %vm4296 = vmor %vm4294, %vm4295
    %v4297 = vsel %vm4296, %v4288, %v4293
    %v4298 = vmul.f32 %v4213, %v4257
    %v4299 = vmul.f32 %v4214, %v4267
    %v4300 = vmul.f32 %v4215, %v4277
    %v4301 = vmul.f32 %v4216, %v4287
    %v4302 = vmul.f32 %v4217, %v4297
    %v4304 = vperm.slane %v4190, 0
    %v4306 = vmul.f32 %v4298, %v4304
    %v4307 = vmul.f32 %v4299, %v4304
    %v4308 = vmul.f32 %v4300, %v4304
    %v4309 = vmul.f32 %v4301, %v4304
    %v4310 = vmul.f32 %v4302, %v4304
    %v4312 = vperm.slane %v4192, 0
    %v4314 = vadd.f32 %v4306, %v4312
    %v4315 = vadd.f32 %v4307, %v4312
    %v4316 = vadd.f32 %v4308, %v4312
    %v4317 = vadd.f32 %v4309, %v4312
    %v4318 = vadd.f32 %v4310, %v4312
    %v4319 = vpack.c.bf16 %v4315, %v4314
    %v4320 = vpack.c.bf16 %v4317, %v4316
    %v4321 = vpack.c.bf16 %v4318, %v4318
    %s4322 = scalar_lea.vmem %s12, 32
    %v4323 = vld [vmem:[%s4322] sm:$0xf]
    %v4324 = vld [vmem:[%s4322 + $0x4] sm:$0xf]
    %v4325 = vld [vmem:[%s4322 + $0x8] sm:$0xf]
    %v4326 = vld [vmem:[%s4322 + $0xc] sm:$0xf]
    %v4327 = vld [vmem:[%s4322 + $0x10] sm:$0xf]
    %v4328 = vld [vmem:[%s4322 + $0x14] sm:$0xf]
    %v4329 = vld [vmem:[%s4322 + $0x18] sm:$0xf]
    %v4330 = vld [vmem:[%s4322 + $0x1c] sm:$0xf]
    %s4331 = scalar_lea.vmem %s13, 1
    %v4332 = vld [vmem:[%s4331] sm:$0x1]
    %v4334 = vperm.slane %v4332, 0
    %v4344 = vunpack.c.l.b16 %v4323
    %v4345 = vunpack.c.l.b16 %v4324
    %v4346 = vunpack.c.l.b16 %v4325
    %v4347 = vunpack.c.l.b16 %v4326
    %v4348 = vunpack.c.l.b16 %v4327
    %v4349 = vunpack.c.l.b16 %v4328
    %v4350 = vunpack.c.l.b16 %v4329
    %v4351 = vunpack.c.l.b16 %v4330
    %v4352 = vpack.c.b16 %v4345, %v4344
    %v4353 = vpack.c.b16 %v4347, %v4346
    %v4354 = vpack.c.b16 %v4349, %v4348
    %v4355 = vpack.c.b16 %v4351, %v4350
    %v4361 = vsel %vm141, %v4319, 0
    %v4364 = vsel %vm141, %v4320, 0
    %v4367 = vsel %vm141, %v4321, 0
    %4369 = vmatpush.bf16.msra.mxu0 0
    %4370 = vmatpush.bf16.msra.mxu0 0
    %4371 = vmatpush.bf16.msra.mxu0 0
    %4372 = vmatpush.bf16.msra.mxu0 0
    %4373 = vmatpush.bf16.msra.mxu0 %v4355
    %4374 = vmatpush.bf16.msra.mxu0 %v4354
    %4375 = vmatpush.bf16.msra.mxu0 %v4353
    %4376 = vmatpush.bf16.msra.mxu0 %v4352
    %4377 = vmatmul.bf16.gmra.mxu0 %v4361
    %v4378 = vpop.f32.mrf.mxu0
    %v4379 = vadd.f32 %v4334, %v4378
    %v4380 = vpop.f32.mrf.mxu0
    %v4381 = vadd.f32 %v4334, %v4380
    %4382 = vmatmul.bf16.gmra.mxu0 %v4364
    %v4383 = vpop.f32.mrf.mxu0
    %v4384 = vadd.f32 %v4334, %v4383
    %v4385 = vpop.f32.mrf.mxu0
    %v4386 = vadd.f32 %v4334, %v4385
    %4387 = vmatmul.bf16.gmra.mxu0 %v4367
    %v4388 = vpop.f32.mrf.mxu0
    %v4389 = vadd.f32 %v4334, %v4388
    %v4390 = vpop.f32.mrf.mxu0
    %4391 = vdwg.mxu0
    %v4392 = vmul.f32 %v4379, 0.5
    %v4393 = vmul.f32 %v4381, 0.5
    %v4394 = vmul.f32 %v4384, 0.5
    %v4395 = vmul.f32 %v4386, 0.5
    %v4396 = vmul.f32 %v4389, 0.5
    %v4397 = vmul.f32 %v4379, 0.044715
    %v4398 = vmul.f32 %v4381, 0.044715
    %v4399 = vmul.f32 %v4384, 0.044715
    %v4400 = vmul.f32 %v4386, 0.044715
    %v4401 = vmul.f32 %v4389, 0.044715
    %v4402 = vmul.f32 %v4397, %v4379
    %v4403 = vmul.f32 %v4398, %v4381
    %v4404 = vmul.f32 %v4399, %v4384
    %v4405 = vmul.f32 %v4400, %v4386
    %v4406 = vmul.f32 %v4401, %v4389
    %v4407 = vmul.f32 %v4402, %v4379
    %v4408 = vmul.f32 %v4403, %v4381
    %v4409 = vmul.f32 %v4404, %v4384
    %v4410 = vmul.f32 %v4405, %v4386
    %v4411 = vmul.f32 %v4406, %v4389
    %v4412 = vadd.f32 %v4379, %v4407
    %v4413 = vadd.f32 %v4381, %v4408
    %v4414 = vadd.f32 %v4384, %v4409
    %v4415 = vadd.f32 %v4386, %v4410
    %v4416 = vadd.f32 %v4389, %v4411
    %v4417 = vmul.f32 %v4412, 0.7978846
    %v4418 = vmul.f32 %v4413, 0.7978846
    %v4419 = vmul.f32 %v4414, 0.7978846
    %v4420 = vmul.f32 %v4415, 0.7978846
    %v4421 = vmul.f32 %v4416, 0.7978846
    %v4422 = vtanh.pop %v4417
    %v4423 = vtanh.pop %v4418
    %v4424 = vtanh.pop %v4419
    %v4425 = vtanh.pop %v4420
    %v4426 = vtanh.pop %v4421
    %v4427 = vadd.f32 %v4422, 1.0
    %v4428 = vadd.f32 %v4423, 1.0
    %v4429 = vadd.f32 %v4424, 1.0
    %v4430 = vadd.f32 %v4425, 1.0
    %v4431 = vadd.f32 %v4426, 1.0
    %v4432 = vmul.f32 %v4392, %v4427
    %v4433 = vmul.f32 %v4393, %v4428
    %v4434 = vmul.f32 %v4394, %v4429
    %v4435 = vmul.f32 %v4395, %v4430
    %v4436 = vmul.f32 %v4396, %v4431
    %v4437 = vpack.c.bf16 %v4433, %v4432
    %v4438 = vpack.c.bf16 %v4435, %v4434
    %v4439 = vpack.c.bf16 %v4436, %v4436
    %s4440 = scalar_lea.vmem %s14, 32
    %v4441 = vld [vmem:[%s4440] sm:$0xf]
    %v4442 = vld [vmem:[%s4440 + $0x4] sm:$0xf]
    %v4443 = vld [vmem:[%s4440 + $0x8] sm:$0xf]
    %v4444 = vld [vmem:[%s4440 + $0xc] sm:$0xf]
    %v4445 = vld [vmem:[%s4440 + $0x10] sm:$0xf]
    %v4446 = vld [vmem:[%s4440 + $0x14] sm:$0xf]
    %v4447 = vld [vmem:[%s4440 + $0x18] sm:$0xf]
    %v4448 = vld [vmem:[%s4440 + $0x1c] sm:$0xf]
    %s4449 = scalar_lea.vmem %s15, 1
    %v4450 = vld [vmem:[%s4449] sm:$0x1]
    %v4452 = vperm.slane %v4450, 0
    %v4462 = vunpack.c.l.b16 %v4441
    %v4463 = vunpack.c.l.b16 %v4442
    %v4464 = vunpack.c.l.b16 %v4443
    %v4465 = vunpack.c.l.b16 %v4444
    %v4466 = vunpack.c.l.b16 %v4445
    %v4467 = vunpack.c.l.b16 %v4446
    %v4468 = vunpack.c.l.b16 %v4447
    %v4469 = vunpack.c.l.b16 %v4448
    %v4470 = vpack.c.b16 %v4463, %v4462
    %v4471 = vpack.c.b16 %v4465, %v4464
    %v4472 = vpack.c.b16 %v4467, %v4466
    %v4473 = vpack.c.b16 %v4469, %v4468
    %v4479 = vsel %vm141, %v4437, 0
    %v4482 = vsel %vm141, %v4438, 0
    %v4485 = vsel %vm141, %v4439, 0
    %4487 = vmatpush.bf16.msra.mxu0 0
    %4488 = vmatpush.bf16.msra.mxu0 0
    %4489 = vmatpush.bf16.msra.mxu0 0
    %4490 = vmatpush.bf16.msra.mxu0 0
    %4491 = vmatpush.bf16.msra.mxu0 %v4473
    %4492 = vmatpush.bf16.msra.mxu0 %v4472
    %4493 = vmatpush.bf16.msra.mxu0 %v4471
    %4494 = vmatpush.bf16.msra.mxu0 %v4470
    %4495 = vmatmul.bf16.gmra.mxu0 %v4479
    %v4496 = vpop.f32.mrf.mxu0
    %v4497 = vadd.f32 %v4452, %v4496
    %v4498 = vpop.f32.mrf.mxu0
    %4499 = vmatmul.bf16.gmra.mxu0 %v4482
    %v4500 = vpop.f32.mrf.mxu0
    %v4501 = vadd.f32 %v4452, %v4500
    %v4502 = vpop.f32.mrf.mxu0
    %4503 = vmatmul.bf16.gmra.mxu0 %v4485
    %v4504 = vpop.f32.mrf.mxu0
    %v4505 = vpop.f32.mrf.mxu0
    %4506 = vdwg.mxu0
    %v4507 = vadd.f32 %v4497, %v4314
    %v4508 = vadd.f32 %v4501, %v4316
    %v4509 = vsel %vm117, %v4507, %v4508
    %v4510 = vpack.c.bf16 %v4509, %v4509
    %v4511 = vld [vmem:[%s16] sm:$0xf]
    %v4512 = vld [vmem:[%s16 + $0x4] sm:$0xf]
    %v4513 = vld [vmem:[%s16 + $0x8] sm:$0xf]
    %v4514 = vld [vmem:[%s16 + $0xc] sm:$0xf]
    %v4515 = vld [vmem:[%s16 + $0x10] sm:$0xf]
    %v4516 = vld [vmem:[%s16 + $0x14] sm:$0xf]
    %v4517 = vld [vmem:[%s16 + $0x18] sm:$0xf]
    %v4518 = vld [vmem:[%s16 + $0x1c] sm:$0xf]
    %v4519 = vld [vmem:[%s17] sm:$0x1]
    %v4521 = vperm.slane %v4519, 0
    %v4531 = vunpack.c.l.b16 %v4511
    %v4532 = vunpack.c.l.b16 %v4512
    %v4533 = vunpack.c.l.b16 %v4513
    %v4534 = vunpack.c.l.b16 %v4514
    %v4535 = vunpack.c.l.b16 %v4515
    %v4536 = vunpack.c.l.b16 %v4516
    %v4537 = vunpack.c.l.b16 %v4517
    %v4538 = vunpack.c.l.b16 %v4518
    %v4539 = vpack.c.b16 %v4532, %v4531
    %v4540 = vpack.c.b16 %v4534, %v4533
    %v4541 = vpack.c.b16 %v4536, %v4535
    %v4542 = vpack.c.b16 %v4538, %v4537
    %v4548 = vsel %vm141, %v4510, 0
    %4550 = vmatpush.bf16.msra.mxu0 0
    %4551 = vmatpush.bf16.msra.mxu0 0
    %4552 = vmatpush.bf16.msra.mxu0 0
    %4553 = vmatpush.bf16.msra.mxu0 0
    %4554 = vmatpush.bf16.msra.mxu0 %v4542
    %4555 = vmatpush.bf16.msra.mxu0 %v4541
    %4556 = vmatpush.bf16.msra.mxu0 %v4540
    %4557 = vmatpush.bf16.msra.mxu0 %v4539
    %4558 = vmatmul.bf16.gmra.mxu0 %v4548
    %v4559 = vpop.f32.mrf.mxu0
    %v4560 = vadd.f32 %v4521, %v4559
    %v4561 = vpop.f32.mrf.mxu0
    %4562 = vdwg.mxu0
    %4563 = vst [vmem:[#allocation2] sm:$0x3] %v4560
    // Predicated region
    $region74: #{forward_pallas.1} parent=1 // pred_check
      _
    $region75: #{forward_pallas.1} parent=1 // pred_check_branch
      %4565 = sbr.rel (0) target = $region77
    $region76: #{forward_pallas.1} parent=1 // pred_region
      %4567 = vsyncadd [#allocation3], 0
      %s4569 = sshll.u32 [#allocation2], 4
      %s4570 = int_to_ptr.vmem [resolvable:$true] %s4569
      %s4571 = sshll.u32 %s18, 4
      %s4572 = int_to_ptr.hbm [resolvable:$true] %s4571
      %4574 = dma.vmem_to_hbm [thread:$0]  %s4570, 32, %s4572, [#allocation3]
    $region77: #{forward_pallas.1} parent=1 // pred_fallthru
      _
    // Predicated region
    $region78: #{forward_pallas.1} parent=1 // pred_check
      _
    $region79: #{forward_pallas.1} parent=1 // pred_check_branch
      %4576 = sbr.rel (0) target = $region81
    $region80: #{forward_pallas.1} parent=1 // pred_region
      %4578 = dma.done [#allocation3], 32
    $region81: #{forward_pallas.1} parent=1 // pred_fallthru
      _
    %4579 = vsyncpa [#allocation3], 1

</llo_original>
